<compile_context>
chip_gen: v7x
topology: tpu7x:2x2x1
jax: 0.10.0
libtpu: 0.0.40
codegen_flags: <defaults>
</compile_context>

<pallas_src>
import functools

import jax
import jax.numpy as jnp
from jax.experimental import pallas as pl
from jax.experimental.pallas import tpu as pltpu


# ----------------------------------------------------------------------------
# Kernels
# ----------------------------------------------------------------------------

def _layernorm(v, g, b, eps=1e-5):
    """Single-pass LayerNorm (one sum + one sum-of-squares cross-lane reduce)."""
    n = v.shape[-1]
    s = jnp.sum(v, axis=-1, keepdims=True)
    ss = jnp.sum(v * v, axis=-1, keepdims=True)
    mu = s * (1.0 / n)
    var = ss * (1.0 / n) - mu * mu
    return (v - mu) * jax.lax.rsqrt(var + eps) * g + b


def blocks_kernel(x_ref, wqkv_ref, wo_ref, w1_ref, w2_ref, vecs_ref,
                  lnfg_ref, lnfb_ref, out_ref, x_sc, *, n_head, T, bb):
    """Grid = (batch_block [parallel], layer [arbitrary]).

    Activations (Mb = bb*T rows) stay resident in VMEM scratch across the
    layer axis; per-layer weights are streamed (double-buffered) by BlockSpec.
    """
    l = pl.program_id(1)
    n_layers = pl.num_programs(1)

    @pl.when(l == 0)
    def _init():
        x_sc[...] = x_ref[...]

    x = x_sc[...]                                   # (Mb, C) f32
    Mb, C = x.shape
    hs = C // n_head

    # packed per-layer vectors: (8, H) f32
    vecs = vecs_ref[0]
    ln1_g = vecs[0:1, :C]
    ln1_b = vecs[1:2, :C]
    bo = vecs[2:3, :C]
    ln2_g = vecs[3:4, :C]
    ln2_b = vecs[4:5, :C]
    b1 = vecs[5:6, :]
    b2 = vecs[6:7, :C]

    # ---------------- attention branch ----------------
    xln = _layernorm(x, ln1_g, ln1_b).astype(jnp.bfloat16)
    # fused QKV projection (1/sqrt(hs) pre-folded into the Q columns)
    qkv = jnp.dot(xln, wqkv_ref[0],
                  preferred_element_type=jnp.float32)           # (Mb, 3C) f32
    qkv = qkv.astype(jnp.bfloat16)                              # cast once

    # causal additive bias built in-kernel (T, T), f32 (no (M,M) mask input)
    rows = jax.lax.broadcasted_iota(jnp.int32, (T, T), 0)
    cols = jax.lax.broadcasted_iota(jnp.int32, (T, T), 1)
    causal_bias = jnp.where(cols <= rows, 0.0, -1e30).astype(jnp.float32)

    head_outs = []                                  # bb * n_head entries of (T, hs) f32
    for b in range(bb):                             # static unroll over sequences
        r0 = b * T
        qkv_b = qkv[r0:r0 + T, :]                   # (T, 3C) bf16, static slice
        for h in range(n_head):                     # static unroll over heads
            qh = qkv_b[:, h * hs:(h + 1) * hs]
            kh = qkv_b[:, C + h * hs:C + (h + 1) * hs]
            vh = qkv_b[:, 2 * C + h * hs:2 * C + (h + 1) * hs]

            # q @ k^T without an explicit transpose; scores stay f32
            s = jax.lax.dot_general(qh, kh, (((1,), (1,)), ((), ())),
                                    preferred_element_type=jnp.float32)
            s = s + causal_bias
            m = jnp.max(s, axis=-1, keepdims=True)
            e = jnp.exp(s - m)
            p = e * pl.reciprocal(jnp.sum(e, axis=-1, keepdims=True), approx=True)

            head_outs.append(jnp.dot(p.astype(jnp.bfloat16), vh,
                                     preferred_element_type=jnp.float32))

    # concat heads (lanes) and sequences (sublanes) -> (Mb, C), then ONE
    # full-K output projection instead of n_head K=hs matmuls.
    attn = jnp.concatenate(
        [jnp.concatenate(head_outs[b * n_head:(b + 1) * n_head], axis=1)
         for b in range(bb)], axis=0).astype(jnp.bfloat16)
    attn_out = jnp.dot(attn, wo_ref[0], preferred_element_type=jnp.float32)

    x = x + attn_out + bo

    # ---------------- feed-forward branch ----------------
    xln2 = _layernorm(x, ln2_g, ln2_b).astype(jnp.bfloat16)
    hmid = jnp.dot(xln2, w1_ref[0], preferred_element_type=jnp.float32) + b1
    hmid = jnp.maximum(hmid, 0.0).astype(jnp.bfloat16)
    x = x + jnp.dot(hmid, w2_ref[0], preferred_element_type=jnp.float32) + b2

    x_sc[...] = x

    # ---------------- final LayerNorm (last layer only) ----------------
    @pl.when(l == n_layers - 1)
    def _finalize():
        xn = _layernorm(x, lnfg_ref[...], lnfb_ref[...])
        out_ref[...] = xn.astype(out_ref.dtype)


def lm_head_kernel(xn_ref, w_ref, b_ref, out_ref):
    """lm_head as its own (M, V)-tiled parallel matmul (weights never resident)."""
    out_ref[...] = (jnp.dot(xn_ref[...], w_ref[...],
                            preferred_element_type=jnp.float32) + b_ref[...])


# ----------------------------------------------------------------------------
# Wrapper
# ----------------------------------------------------------------------------

def gpt_forward_fused(kp, idx, *, n_head, batch_block=2):
    B, T = idx.shape
    C = kp['tok_emb'].shape[1]
    V = kp['lm_w'].shape[1]
    L, _, H = kp['w1'].shape
    M = B * T

    bb = batch_block
    assert B % bb == 0
    nb = B // bb
    Mb = bb * T
    assert Mb % 8 == 0 and C % 128 == 0 and H % 128 == 0

    # TODO(synk): token/position embedding gather stays in plain JAX before
    # the kernel (tiny, no clean Pallas gather win at these shapes).
    x = (kp['tok_emb'][idx] + kp['pos_emb'][:T][None, :, :]).reshape(M, C)
    x = x.astype(jnp.float32)

    def per_layer(*dims):
        nd = len(dims)
        return pl.BlockSpec((1,) + dims, lambda nbi, l, _nd=nd: (l,) + (0,) * _nd)

    # VMEM budget (toy): double-buffered per-layer bf16 weights ~0.8 MB,
    # x block + scratch ~0.2 MB, output block ~64 KB -> far under 32 MiB.
    # At real nanoGPT sizes re-derive against v7x's 64 MiB before scaling.
    cparams = pltpu.CompilerParams(
        dimension_semantics=("parallel", "arbitrary"),
        vmem_limit_bytes=32 * 1024 * 1024)

    xn = pl.pallas_call(
        functools.partial(blocks_kernel, n_head=n_head, T=T, bb=bb),
        out_shape=jax.ShapeDtypeStruct((M, C), jnp.bfloat16),
        grid=(nb, L),
        in_specs=[
            pl.BlockSpec((Mb, C), lambda nbi, l: (nbi, 0)),   # embeddings (read at l==0)
            per_layer(C, 3 * C),                              # fused wqkv (bf16)
            per_layer(C, C),                                  # wo (bf16)
            per_layer(C, H),                                  # w1 (bf16)
            per_layer(H, C),                                  # w2 (bf16)
            per_layer(8, H),                                  # packed per-layer vectors
            pl.BlockSpec((1, C), lambda nbi, l: (0, 0)),      # final ln gamma (resident)
            pl.BlockSpec((1, C), lambda nbi, l: (0, 0)),      # final ln beta (resident)
        ],
        out_specs=pl.BlockSpec((Mb, C), lambda nbi, l: (nbi, 0)),
        scratch_shapes=[pltpu.VMEM((Mb, C), jnp.float32)],    # resident activations
        compiler_params=cparams,
    )(x, kp['wqkv'], kp['wo'], kp['w1'], kp['w2'], kp['vecs'],
      kp['ln_f_g'], kp['ln_f_b'])

    # ---- lm_head: separate, tiled, fully parallel matmul ----
    tm, tn = 128, 128
    assert M % tm == 0 and V % tn == 0
    logits = pl.pallas_call(
        lm_head_kernel,
        out_shape=jax.ShapeDtypeStruct((M, V), jnp.float32),
        grid=(M // tm, V // tn),
        in_specs=[
            pl.BlockSpec((tm, C), lambda i, j: (i, 0)),
            pl.BlockSpec((C, tn), lambda i, j: (0, j)),
            pl.BlockSpec((1, tn), lambda i, j: (0, j)),
        ],
        out_specs=pl.BlockSpec((tm, tn), lambda i, j: (i, j)),
        compiler_params=pltpu.CompilerParams(
            dimension_semantics=("parallel", "parallel"),
            vmem_limit_bytes=32 * 1024 * 1024),
    )(xn, kp['lm_w'], kp['lm_b'])

    return logits.reshape(B, T, V)


# ----------------------------------------------------------------------------
# Parameters (deterministic, synthetic) + kernel-format packing
# ----------------------------------------------------------------------------

def init_raw_params(key, n_embd, n_head, block_size, vocab_size, n_layer):
    C, H, V = n_embd, 4 * n_embd, vocab_size
    keys = jax.random.split(key, 4 + 8 * n_layer)
    ki = iter(range(len(keys)))

    def nrm(shape, k):
        return (0.02 * jax.random.normal(keys[k], shape)).astype(jnp.float32)

    raw = {
        'tok_emb': nrm((V, C), next(ki)),
        'pos_emb': nrm((block_size, C), next(ki)),
        'ln_f_g': jnp.ones((1, C), jnp.float32),
        'ln_f_b': jnp.zeros((1, C), jnp.float32),
        'lm_w': nrm((C, V), next(ki)),
        'lm_b': jnp.zeros((1, V), jnp.float32),
        'blocks': [],
    }
    for _ in range(n_layer):
        raw['blocks'].append({
            'ln1_g': jnp.ones((1, C), jnp.float32),
            'ln1_b': jnp.zeros((1, C), jnp.float32),
            'wq': nrm((C, C), next(ki)),
            'wk': nrm((C, C), next(ki)),
            'wv': nrm((C, C), next(ki)),
            'wo': nrm((C, C), next(ki)),
            'bo': jnp.zeros((1, C), jnp.float32),
            'ln2_g': jnp.ones((1, C), jnp.float32),
            'ln2_b': jnp.zeros((1, C), jnp.float32),
            'w1': nrm((C, H), next(ki)),
            'b1': jnp.zeros((1, H), jnp.float32),
            'w2': nrm((H, C), next(ki)),
            'b2': jnp.zeros((1, C), jnp.float32),
        })
    return raw


def prepare_kernel_params(raw, *, n_head):
    """Stack per-layer weights, fuse QKV, fold 1/sqrt(hs), pack small vectors,
    cast matmul weights to bf16."""
    C = raw['tok_emb'].shape[1]
    H = raw['blocks'][0]['w1'].shape[1]
    L = len(raw['blocks'])
    hs = C // n_head
    scale = jnp.float32(hs ** -0.5)

    def stack(name):
        return jnp.stack([blk[name] for blk in raw['blocks']], axis=0)

    wq = stack('wq') * scale                        # fold attention scale into Wq
    wqkv = jnp.concatenate([wq, stack('wk'), stack('wv')], axis=-1)

    def pad_h(a):                                   # (L,1,C) -> (L,1,H)
        return jnp.pad(a, ((0, 0), (0, 0), (0, H - a.shape[-1])))

    # packed per-layer vectors: rows = [ln1_g, ln1_b, bo, ln2_g, ln2_b, b1, b2, pad]
    vecs = jnp.concatenate([
        pad_h(stack('ln1_g')), pad_h(stack('ln1_b')), pad_h(stack('bo')),
        pad_h(stack('ln2_g')), pad_h(stack('ln2_b')),
        stack('b1'), pad_h(stack('b2')),
        jnp.zeros((L, 1, H), jnp.float32),
    ], axis=1)                                      # (L, 8, H)

    return {
        'tok_emb': raw['tok_emb'],
        'pos_emb': raw['pos_emb'],
        'wqkv': wqkv.astype(jnp.bfloat16),
        'wo': stack('wo').astype(jnp.bfloat16),
        'w1': stack('w1').astype(jnp.bfloat16),
        'w2': stack('w2').astype(jnp.bfloat16),
        'vecs': vecs,
        'ln_f_g': raw['ln_f_g'], 'ln_f_b': raw['ln_f_b'],
        'lm_w': raw['lm_w'].astype(jnp.bfloat16), 'lm_b': raw['lm_b'],
    }


# ----------------------------------------------------------------------------
# Pure-JAX reference (f32) for a sanity check
# ----------------------------------------------------------------------------

def _ln_ref(x, g, b, eps=1e-5):
    mu = jnp.mean(x, axis=-1, keepdims=True)
    var = jnp.mean((x - mu) ** 2, axis=-1, keepdims=True)
    return (x - mu) * jax.lax.rsqrt(var + eps) * g + b


def reference_forward(raw, idx, n_head):
    B, T = idx.shape
    x = raw['tok_emb'][idx] + raw['pos_emb'][:T][None, :, :]
    C = x.shape[-1]
    hs = C // n_head
    mask = jnp.tril(jnp.ones((T, T), dtype=bool))
    for blk in raw['blocks']:
        xln = _ln_ref(x, blk['ln1_g'], blk['ln1_b'])
        q = (xln @ blk['wq']).reshape(B, T, n_head, hs).transpose(0, 2, 1, 3)
        k = (xln @ blk['wk']).reshape(B, T, n_head, hs).transpose(0, 2, 1, 3)
        v = (xln @ blk['wv']).reshape(B, T, n_head, hs).transpose(0, 2, 1, 3)
        s = jnp.einsum('bhqd,bhkd->bhqk', q, k) * (hs ** -0.5)
        s = jnp.where(mask[None, None], s, -jnp.inf)
        p = jax.nn.softmax(s, axis=-1)
        o = jnp.einsum('bhqk,bhkd->bhqd', p, v).transpose(0, 2, 1, 3).reshape(B, T, C)
        x = x + o @ blk['wo'] + blk['bo']
        xln2 = _ln_ref(x, blk['ln2_g'], blk['ln2_b'])
        hmid = jax.nn.relu(xln2 @ blk['w1'] + blk['b1'])
        x = x + hmid @ blk['w2'] + blk['b2']
    xn = _ln_ref(x, raw['ln_f_g'], raw['ln_f_b'])
    return xn @ raw['lm_w'] + raw['lm_b']


# ----------------------------------------------------------------------------
# Main
# ----------------------------------------------------------------------------

if __name__ == "__main__":
    # Small hyperparameters consistent with the module (n_layer >= 8, hs = 64).
    n_embd = 128
    n_head = 2            # head_size = 64
    block_size = 64
    vocab_size = 256
    n_layer = 8
    B, T = 4, 64          # T <= block_size; B*T = 256 so per-step M = 128

    key = jax.random.PRNGKey(0)
    pkey, ikey = jax.random.split(key)

    raw = init_raw_params(pkey, n_embd, n_head, block_size, vocab_size, n_layer)
    kp = prepare_kernel_params(raw, n_head=n_head)

    idx = jax.random.randint(ikey, (B, T), 0, vocab_size, dtype=jnp.int32)

    fwd = jax.jit(functools.partial(gpt_forward_fused, n_head=n_head, batch_block=2))
    logits = jax.block_until_ready(fwd(kp, idx))

    assert logits.shape == (B, T, vocab_size)
    assert logits.dtype == jnp.float32

    # loose check vs f32 reference (kernel uses bf16 matmul operands)
    ref = reference_forward(raw, idx, n_head)
    err = float(jnp.max(jnp.abs(logits - ref)))
    assert err < 5e-2, f"max abs error vs reference: {err}"

    print("KERNEL_OK")
</pallas_src>

<mosaic_0001>
module attributes {stable_mosaic.version = 11 : i64} {
  func.func @lm_head_kernel(%arg0: i32, %arg1: i32, %arg2: memref<128x128xbf16, #tpu.memory_space<vmem>>, %arg3: memref<128x128xbf16, #tpu.memory_space<vmem>>, %arg4: memref<1x128xf32, #tpu.memory_space<vmem>>, %arg5: memref<128x128xf32, #tpu.memory_space<vmem>>) attributes {dimension_semantics = [#tpu.dimension_semantics<parallel>, #tpu.dimension_semantics<parallel>], iteration_bounds = array<i64: 2, 2>, scalar_prefetch = 0 : i64, scratch_operands = 0 : i64, tpu.core_type = #tpu.core_type<tc>, window_params = [{transform_indices = @transform_0, window_bounds = array<i64: 128, 128>}, {transform_indices = @transform_1, window_bounds = array<i64: 128, 128>}, {transform_indices = @transform_2, window_bounds = array<i64: 1, 128>}, {transform_indices = @transform_3, window_bounds = array<i64: 128, 128>}]} {
    %c0 = arith.constant 0 : index
    %c0_0 = arith.constant 0 : index
    %0 = vector.load %arg2[%c0, %c0_0] : memref<128x128xbf16, #tpu.memory_space<vmem>>, vector<128x128xbf16>
    %c0_1 = arith.constant 0 : index
    %c0_2 = arith.constant 0 : index
    %1 = vector.load %arg3[%c0_1, %c0_2] : memref<128x128xbf16, #tpu.memory_space<vmem>>, vector<128x128xbf16>
    %cst = arith.constant dense<0.000000e+00> : vector<128x128xf32>
    %2 = tpu.matmul %0, %1, %cst {dimension_numbers = #tpu.dot_dimension_numbers<[1], [0], [0], [1], [0, 0, 1, 1], [], []>} : vector<128x128xbf16>, vector<128x128xbf16>, vector<128x128xf32> -> vector<128x128xf32>
    %c0_3 = arith.constant 0 : index
    %c0_4 = arith.constant 0 : index
    %3 = vector.load %arg4[%c0_3, %c0_4] : memref<1x128xf32, #tpu.memory_space<vmem>>, vector<1x128xf32>
    %4 = vector.broadcast %3 : vector<1x128xf32> to vector<128x128xf32>
    %5 = arith.addf %2, %4 : vector<128x128xf32>
    %c0_5 = arith.constant 0 : index
    %c0_6 = arith.constant 0 : index
    %6 = vector.load %arg5[%c0_5, %c0_6] : memref<128x128xf32, #tpu.memory_space<vmem>>, vector<128x128xf32>
    tpu.vector_store %arg5[%c0_5, %c0_6], %5 {strides = array<i32>} : memref<128x128xf32, #tpu.memory_space<vmem>>, vector<128x128xf32>,
    return
  }
  func.func @transform_0(%arg0: i32, %arg1: i32) -> (i32, i32) {
    %c0_i32 = arith.constant 0 : i32
    %c0_i32_0 = arith.constant 0 : i32
    return %arg0, %c0_i32 : i32, i32
  }
  func.func @transform_1(%arg0: i32, %arg1: i32) -> (i32, i32) {
    %c0_i32 = arith.constant 0 : i32
    %c0_i32_0 = arith.constant 0 : i32
    return %c0_i32, %arg1 : i32, i32
  }
  func.func @transform_2(%arg0: i32, %arg1: i32) -> (i32, i32) {
    %c0_i32 = arith.constant 0 : i32
    %c0_i32_0 = arith.constant 0 : i32
    return %c0_i32, %arg1 : i32, i32
  }
  func.func @transform_3(%arg0: i32, %arg1: i32) -> (i32, i32) {
    %c0_i32 = arith.constant 0 : i32
    return %arg0, %arg1 : i32, i32
  }
}

module attributes {stable_mosaic.version = 11 : i64} {
  func.func @blocks_kernel(%arg0: i32, %arg1: i32, %arg2: memref<128x128xf32, #tpu.memory_space<vmem>>, %arg3: memref<1x128x384xbf16, #tpu.memory_space<vmem>>, %arg4: memref<1x128x128xbf16, #tpu.memory_space<vmem>>, %arg5: memref<1x128x512xbf16, #tpu.memory_space<vmem>>, %arg6: memref<1x512x128xbf16, #tpu.memory_space<vmem>>, %arg7: memref<1x8x512xf32, #tpu.memory_space<vmem>>, %arg8: memref<1x128xf32, #tpu.memory_space<vmem>>, %arg9: memref<1x128xf32, #tpu.memory_space<vmem>>, %arg10: memref<128x128xbf16, #tpu.memory_space<vmem>>, %arg11: memref<128x128xf32, #tpu.memory_space<vmem>>) attributes {dimension_semantics = [#tpu.dimension_semantics<parallel>, #tpu.dimension_semantics<arbitrary>], iteration_bounds = array<i64: 2, 8>, scalar_prefetch = 0 : i64, scratch_operands = 1 : i64, tpu.core_type = #tpu.core_type<tc>, window_params = [{transform_indices = @transform_0, window_bounds = array<i64: 128, 128>}, {transform_indices = @transform_1, window_bounds = array<i64: 1, 128, 384>}, {transform_indices = @transform_2, window_bounds = array<i64: 1, 128, 128>}, {transform_indices = @transform_3, window_bounds = array<i64: 1, 128, 512>}, {transform_indices = @transform_4, window_bounds = array<i64: 1, 512, 128>}, {transform_indices = @transform_5, window_bounds = array<i64: 1, 8, 512>}, {pipeline_mode = #tpu.pipeline_mode<synchronous>, transform_indices = @transform_6, window_bounds = array<i64: 1, 128>}, {pipeline_mode = #tpu.pipeline_mode<synchronous>, transform_indices = @transform_7, window_bounds = array<i64: 1, 128>}, {transform_indices = @transform_8, window_bounds = array<i64: 128, 128>}]} {
    %c0_i32 = arith.constant 0 : i32
    %0 = arith.cmpi eq, %arg1, %c0_i32 : i32
    %1 = arith.extui %0 : i1 to i32
    %c0_i32_0 = arith.constant 0 : i32
    %2 = arith.cmpi ne, %1, %c0_i32_0 : i32
    scf.if %2 {
      %c0_52 = arith.constant 0 : index
      %c0_53 = arith.constant 0 : index
      %167 = vector.load %arg2[%c0_52, %c0_53] : memref<128x128xf32, #tpu.memory_space<vmem>>, vector<128x128xf32>
      %c0_54 = arith.constant 0 : index
      %c0_55 = arith.constant 0 : index
      %168 = vector.load %arg11[%c0_54, %c0_55] : memref<128x128xf32, #tpu.memory_space<vmem>>, vector<128x128xf32>
      tpu.vector_store %arg11[%c0_54, %c0_55], %167 {strides = array<i32>} : memref<128x128xf32, #tpu.memory_space<vmem>>, vector<128x128xf32>,
    } else {
    }
    %c0 = arith.constant 0 : index
    %c0_1 = arith.constant 0 : index
    %3 = vector.load %arg11[%c0, %c0_1] : memref<128x128xf32, #tpu.memory_space<vmem>>, vector<128x128xf32>
    %c0_2 = arith.constant 0 : index
    %c0_3 = arith.constant 0 : index
    %c0_4 = arith.constant 0 : index
    %4 = vector.load %arg7[%c0_2, %c0_3, %c0_4] : memref<1x8x512xf32, #tpu.memory_space<vmem>>, vector<1x8x512xf32>
    %5 = vector.shape_cast %4 : vector<1x8x512xf32> to vector<8x512xf32>
    %6 = vector.extract_strided_slice %5 {offsets = [0, 0], sizes = [1, 128], strides = [1, 1]} : vector<8x512xf32> to vector<1x128xf32>
    %7 = vector.extract_strided_slice %5 {offsets = [1, 0], sizes = [1, 128], strides = [1, 1]} : vector<8x512xf32> to vector<1x128xf32>
    %8 = vector.extract_strided_slice %5 {offsets = [2, 0], sizes = [1, 128], strides = [1, 1]} : vector<8x512xf32> to vector<1x128xf32>
    %9 = vector.extract_strided_slice %5 {offsets = [3, 0], sizes = [1, 128], strides = [1, 1]} : vector<8x512xf32> to vector<1x128xf32>
    %10 = vector.extract_strided_slice %5 {offsets = [4, 0], sizes = [1, 128], strides = [1, 1]} : vector<8x512xf32> to vector<1x128xf32>
    %11 = vector.extract_strided_slice %5 {offsets = [5, 0], sizes = [1, 512], strides = [1, 1]} : vector<8x512xf32> to vector<1x512xf32>
    %12 = vector.extract_strided_slice %5 {offsets = [6, 0], sizes = [1, 128], strides = [1, 1]} : vector<8x512xf32> to vector<1x128xf32>
    %cst = arith.constant dense<0.000000e+00> : vector<128xf32>
    %13 = vector.multi_reduction <add>, %3, %cst [1] : vector<128x128xf32> to vector<128xf32>
    %14 = vector.shape_cast %13 : vector<128xf32> to vector<128x1xf32>
    %15 = arith.mulf %3, %3 : vector<128x128xf32>
    %cst_5 = arith.constant dense<0.000000e+00> : vector<128xf32>
    %16 = vector.multi_reduction <add>, %15, %cst_5 [1] : vector<128x128xf32> to vector<128xf32>
    %17 = vector.shape_cast %16 : vector<128xf32> to vector<128x1xf32>
    %cst_6 = arith.constant 7.812500e-03 : f32
    %18 = vector.broadcast %cst_6 : f32 to vector<128x1xf32>
    %19 = arith.mulf %14, %18 : vector<128x1xf32>
    %cst_7 = arith.constant 7.812500e-03 : f32
    %20 = vector.broadcast %cst_7 : f32 to vector<128x1xf32>
    %21 = arith.mulf %17, %20 : vector<128x1xf32>
    %22 = arith.mulf %19, %19 : vector<128x1xf32>
    %23 = arith.subf %21, %22 : vector<128x1xf32>
    %24 = vector.broadcast %19 : vector<128x1xf32> to vector<128x128xf32>
    %25 = arith.subf %3, %24 : vector<128x128xf32>
    %cst_8 = arith.constant 9.99999974E-6 : f32
    %26 = vector.broadcast %cst_8 : f32 to vector<128x1xf32>
    %27 = arith.addf %23, %26 : vector<128x1xf32>
    %28 = math.rsqrt %27 : vector<128x1xf32>
    %29 = vector.broadcast %28 : vector<128x1xf32> to vector<128x128xf32>
    %30 = arith.mulf %25, %29 : vector<128x128xf32>
    %31 = vector.broadcast %6 : vector<1x128xf32> to vector<128x128xf32>
    %32 = arith.mulf %30, %31 : vector<128x128xf32>
    %33 = vector.broadcast %7 : vector<1x128xf32> to vector<128x128xf32>
    %34 = arith.addf %32, %33 : vector<128x128xf32>
    %35 = arith.truncf %34 : vector<128x128xf32> to vector<128x128xbf16>
    %c0_9 = arith.constant 0 : index
    %c0_10 = arith.constant 0 : index
    %c0_11 = arith.constant 0 : index
    %36 = vector.load %arg3[%c0_9, %c0_10, %c0_11] : memref<1x128x384xbf16, #tpu.memory_space<vmem>>, vector<1x128x384xbf16>
    %37 = vector.shape_cast %36 : vector<1x128x384xbf16> to vector<128x384xbf16>
    %cst_12 = arith.constant dense<0.000000e+00> : vector<128x384xf32>
    %38 = tpu.matmul %35, %37, %cst_12 {dimension_numbers = #tpu.dot_dimension_numbers<[1], [0], [0], [1], [0, 0, 1, 1], [], []>} : vector<128x128xbf16>, vector<128x384xbf16>, vector<128x384xf32> -> vector<128x384xf32>
    %39 = arith.truncf %38 : vector<128x384xf32> to vector<128x384xbf16>
    %40 = tpu.iota {dimensions = array<i32: 0>} : vector<64x64xi32>
    %41 = tpu.iota {dimensions = array<i32: 1>} : vector<64x64xi32>
    %42 = arith.cmpi sle, %41, %40 : vector<64x64xi32>
    %cst_13 = arith.constant 0.000000e+00 : f32
    %cst_14 = arith.constant -1.000000e+30 : f32
    %43 = vector.broadcast %cst_13 : f32 to vector<64x64xf32>
    %44 = vector.broadcast %cst_14 : f32 to vector<64x64xf32>
    %45 = arith.select %42, %43, %44 : vector<64x64xi1>, vector<64x64xf32>
    %46 = vector.extract_strided_slice %39 {offsets = [0, 0], sizes = [64, 384], strides = [1, 1]} : vector<128x384xbf16> to vector<64x384xbf16>
    %47 = vector.extract_strided_slice %46 {offsets = [0, 0], sizes = [64, 64], strides = [1, 1]} : vector<64x384xbf16> to vector<64x64xbf16>
    %48 = vector.extract_strided_slice %46 {offsets = [0, 128], sizes = [64, 64], strides = [1, 1]} : vector<64x384xbf16> to vector<64x64xbf16>
    %49 = vector.extract_strided_slice %46 {offsets = [0, 256], sizes = [64, 64], strides = [1, 1]} : vector<64x384xbf16> to vector<64x64xbf16>
    %cst_15 = arith.constant dense<0.000000e+00> : vector<64x64xf32>
    %50 = tpu.matmul %47, %48, %cst_15 {dimension_numbers = #tpu.dot_dimension_numbers<[1], [1], [0], [0], [0, 0, 1, 0], [], []>} : vector<64x64xbf16>, vector<64x64xbf16>, vector<64x64xf32> -> vector<64x64xf32>
    %51 = arith.addf %50, %45 : vector<64x64xf32>
    %cst_16 = arith.constant dense<0xFF800000> : vector<64xf32>
    %52 = vector.multi_reduction <maximumf>, %51, %cst_16 [1] : vector<64x64xf32> to vector<64xf32>
    %53 = vector.shape_cast %52 : vector<64xf32> to vector<64x1xf32>
    %54 = vector.broadcast %53 : vector<64x1xf32> to vector<64x64xf32>
    %55 = arith.subf %51, %54 : vector<64x64xf32>
    %56 = math.exp %55 : vector<64x64xf32>
    %cst_17 = arith.constant dense<0.000000e+00> : vector<64xf32>
    %57 = vector.multi_reduction <add>, %56, %cst_17 [1] : vector<64x64xf32> to vector<64xf32>
    %58 = vector.shape_cast %57 : vector<64xf32> to vector<64x1xf32>
    %59 = tpu.reciprocal %58 {approx = true} : vector<64x1xf32> -> vector<64x1xf32>
    %60 = vector.broadcast %59 : vector<64x1xf32> to vector<64x64xf32>
    %61 = arith.mulf %56, %60 : vector<64x64xf32>
    %62 = arith.truncf %61 : vector<64x64xf32> to vector<64x64xbf16>
    %cst_18 = arith.constant dense<0.000000e+00> : vector<64x64xf32>
    %63 = tpu.matmul %62, %49, %cst_18 {dimension_numbers = #tpu.dot_dimension_numbers<[1], [0], [0], [1], [0, 0, 1, 1], [], []>} : vector<64x64xbf16>, vector<64x64xbf16>, vector<64x64xf32> -> vector<64x64xf32>
    %64 = vector.extract_strided_slice %46 {offsets = [0, 64], sizes = [64, 64], strides = [1, 1]} : vector<64x384xbf16> to vector<64x64xbf16>
    %65 = vector.extract_strided_slice %46 {offsets = [0, 192], sizes = [64, 64], strides = [1, 1]} : vector<64x384xbf16> to vector<64x64xbf16>
    %66 = vector.extract_strided_slice %46 {offsets = [0, 320], sizes = [64, 64], strides = [1, 1]} : vector<64x384xbf16> to vector<64x64xbf16>
    %cst_19 = arith.constant dense<0.000000e+00> : vector<64x64xf32>
    %67 = tpu.matmul %64, %65, %cst_19 {dimension_numbers = #tpu.dot_dimension_numbers<[1], [1], [0], [0], [0, 0, 1, 0], [], []>} : vector<64x64xbf16>, vector<64x64xbf16>, vector<64x64xf32> -> vector<64x64xf32>
    %68 = arith.addf %67, %45 : vector<64x64xf32>
    %cst_20 = arith.constant dense<0xFF800000> : vector<64xf32>
    %69 = vector.multi_reduction <maximumf>, %68, %cst_20 [1] : vector<64x64xf32> to vector<64xf32>
    %70 = vector.shape_cast %69 : vector<64xf32> to vector<64x1xf32>
    %71 = vector.broadcast %70 : vector<64x1xf32> to vector<64x64xf32>
    %72 = arith.subf %68, %71 : vector<64x64xf32>
    %73 = math.exp %72 : vector<64x64xf32>
    %cst_21 = arith.constant dense<0.000000e+00> : vector<64xf32>
    %74 = vector.multi_reduction <add>, %73, %cst_21 [1] : vector<64x64xf32> to vector<64xf32>
    %75 = vector.shape_cast %74 : vector<64xf32> to vector<64x1xf32>
    %76 = tpu.reciprocal %75 {approx = true} : vector<64x1xf32> -> vector<64x1xf32>
    %77 = vector.broadcast %76 : vector<64x1xf32> to vector<64x64xf32>
    %78 = arith.mulf %73, %77 : vector<64x64xf32>
    %79 = arith.truncf %78 : vector<64x64xf32> to vector<64x64xbf16>
    %cst_22 = arith.constant dense<0.000000e+00> : vector<64x64xf32>
    %80 = tpu.matmul %79, %66, %cst_22 {dimension_numbers = #tpu.dot_dimension_numbers<[1], [0], [0], [1], [0, 0, 1, 1], [], []>} : vector<64x64xbf16>, vector<64x64xbf16>, vector<64x64xf32> -> vector<64x64xf32>
    %81 = vector.extract_strided_slice %39 {offsets = [64, 0], sizes = [64, 384], strides = [1, 1]} : vector<128x384xbf16> to vector<64x384xbf16>
    %82 = vector.extract_strided_slice %81 {offsets = [0, 0], sizes = [64, 64], strides = [1, 1]} : vector<64x384xbf16> to vector<64x64xbf16>
    %83 = vector.extract_strided_slice %81 {offsets = [0, 128], sizes = [64, 64], strides = [1, 1]} : vector<64x384xbf16> to vector<64x64xbf16>
    %84 = vector.extract_strided_slice %81 {offsets = [0, 256], sizes = [64, 64], strides = [1, 1]} : vector<64x384xbf16> to vector<64x64xbf16>
    %cst_23 = arith.constant dense<0.000000e+00> : vector<64x64xf32>
    %85 = tpu.matmul %82, %83, %cst_23 {dimension_numbers = #tpu.dot_dimension_numbers<[1], [1], [0], [0], [0, 0, 1, 0], [], []>} : vector<64x64xbf16>, vector<64x64xbf16>, vector<64x64xf32> -> vector<64x64xf32>
    %86 = arith.addf %85, %45 : vector<64x64xf32>
    %cst_24 = arith.constant dense<0xFF800000> : vector<64xf32>
    %87 = vector.multi_reduction <maximumf>, %86, %cst_24 [1] : vector<64x64xf32> to vector<64xf32>
    %88 = vector.shape_cast %87 : vector<64xf32> to vector<64x1xf32>
    %89 = vector.broadcast %88 : vector<64x1xf32> to vector<64x64xf32>
    %90 = arith.subf %86, %89 : vector<64x64xf32>
    %91 = math.exp %90 : vector<64x64xf32>
    %cst_25 = arith.constant dense<0.000000e+00> : vector<64xf32>
    %92 = vector.multi_reduction <add>, %91, %cst_25 [1] : vector<64x64xf32> to vector<64xf32>
    %93 = vector.shape_cast %92 : vector<64xf32> to vector<64x1xf32>
    %94 = tpu.reciprocal %93 {approx = true} : vector<64x1xf32> -> vector<64x1xf32>
    %95 = vector.broadcast %94 : vector<64x1xf32> to vector<64x64xf32>
    %96 = arith.mulf %91, %95 : vector<64x64xf32>
    %97 = arith.truncf %96 : vector<64x64xf32> to vector<64x64xbf16>
    %cst_26 = arith.constant dense<0.000000e+00> : vector<64x64xf32>
    %98 = tpu.matmul %97, %84, %cst_26 {dimension_numbers = #tpu.dot_dimension_numbers<[1], [0], [0], [1], [0, 0, 1, 1], [], []>} : vector<64x64xbf16>, vector<64x64xbf16>, vector<64x64xf32> -> vector<64x64xf32>
    %99 = vector.extract_strided_slice %81 {offsets = [0, 64], sizes = [64, 64], strides = [1, 1]} : vector<64x384xbf16> to vector<64x64xbf16>
    %100 = vector.extract_strided_slice %81 {offsets = [0, 192], sizes = [64, 64], strides = [1, 1]} : vector<64x384xbf16> to vector<64x64xbf16>
    %101 = vector.extract_strided_slice %81 {offsets = [0, 320], sizes = [64, 64], strides = [1, 1]} : vector<64x384xbf16> to vector<64x64xbf16>
    %cst_27 = arith.constant dense<0.000000e+00> : vector<64x64xf32>
    %102 = tpu.matmul %99, %100, %cst_27 {dimension_numbers = #tpu.dot_dimension_numbers<[1], [1], [0], [0], [0, 0, 1, 0], [], []>} : vector<64x64xbf16>, vector<64x64xbf16>, vector<64x64xf32> -> vector<64x64xf32>
    %103 = arith.addf %102, %45 : vector<64x64xf32>
    %cst_28 = arith.constant dense<0xFF800000> : vector<64xf32>
    %104 = vector.multi_reduction <maximumf>, %103, %cst_28 [1] : vector<64x64xf32> to vector<64xf32>
    %105 = vector.shape_cast %104 : vector<64xf32> to vector<64x1xf32>
    %106 = vector.broadcast %105 : vector<64x1xf32> to vector<64x64xf32>
    %107 = arith.subf %103, %106 : vector<64x64xf32>
    %108 = math.exp %107 : vector<64x64xf32>
    %cst_29 = arith.constant dense<0.000000e+00> : vector<64xf32>
    %109 = vector.multi_reduction <add>, %108, %cst_29 [1] : vector<64x64xf32> to vector<64xf32>
    %110 = vector.shape_cast %109 : vector<64xf32> to vector<64x1xf32>
    %111 = tpu.reciprocal %110 {approx = true} : vector<64x1xf32> -> vector<64x1xf32>
    %112 = vector.broadcast %111 : vector<64x1xf32> to vector<64x64xf32>
    %113 = arith.mulf %108, %112 : vector<64x64xf32>
    %114 = arith.truncf %113 : vector<64x64xf32> to vector<64x64xbf16>
    %cst_30 = arith.constant dense<0.000000e+00> : vector<64x64xf32>
    %115 = tpu.matmul %114, %101, %cst_30 {dimension_numbers = #tpu.dot_dimension_numbers<[1], [0], [0], [1], [0, 0, 1, 1], [], []>} : vector<64x64xbf16>, vector<64x64xbf16>, vector<64x64xf32> -> vector<64x64xf32>
    %116 = tpu.concatenate %63, %80 in 1 : vector<64x64xf32>, vector<64x64xf32> -> vector<64x128xf32>
    %117 = tpu.concatenate %98, %115 in 1 : vector<64x64xf32>, vector<64x64xf32> -> vector<64x128xf32>
    %118 = tpu.concatenate %116, %117 in 0 : vector<64x128xf32>, vector<64x128xf32> -> vector<128x128xf32>
    %119 = arith.truncf %118 : vector<128x128xf32> to vector<128x128xbf16>
    %c0_31 = arith.constant 0 : index
    %c0_32 = arith.constant 0 : index
    %c0_33 = arith.constant 0 : index
    %120 = vector.load %arg4[%c0_31, %c0_32, %c0_33] : memref<1x128x128xbf16, #tpu.memory_space<vmem>>, vector<1x128x128xbf16>
    %121 = vector.shape_cast %120 : vector<1x128x128xbf16> to vector<128x128xbf16>
    %cst_34 = arith.constant dense<0.000000e+00> : vector<128x128xf32>
    %122 = tpu.matmul %119, %121, %cst_34 {dimension_numbers = #tpu.dot_dimension_numbers<[1], [0], [0], [1], [0, 0, 1, 1], [], []>} : vector<128x128xbf16>, vector<128x128xbf16>, vector<128x128xf32> -> vector<128x128xf32>
    %123 = arith.addf %3, %122 : vector<128x128xf32>
    %124 = vector.broadcast %8 : vector<1x128xf32> to vector<128x128xf32>
    %125 = arith.addf %123, %124 : vector<128x128xf32>
    %cst_35 = arith.constant dense<0.000000e+00> : vector<128xf32>
    %126 = vector.multi_reduction <add>, %125, %cst_35 [1] : vector<128x128xf32> to vector<128xf32>
    %127 = vector.shape_cast %126 : vector<128xf32> to vector<128x1xf32>
    %128 = arith.mulf %125, %125 : vector<128x128xf32>
    %cst_36 = arith.constant dense<0.000000e+00> : vector<128xf32>
    %129 = vector.multi_reduction <add>, %128, %cst_36 [1] : vector<128x128xf32> to vector<128xf32>
    %130 = vector.shape_cast %129 : vector<128xf32> to vector<128x1xf32>
    %cst_37 = arith.constant 7.812500e-03 : f32
    %131 = vector.broadcast %cst_37 : f32 to vector<128x1xf32>
    %132 = arith.mulf %127, %131 : vector<128x1xf32>
    %cst_38 = arith.constant 7.812500e-03 : f32
    %133 = vector.broadcast %cst_38 : f32 to vector<128x1xf32>
    %134 = arith.mulf %130, %133 : vector<128x1xf32>
    %135 = arith.mulf %132, %132 : vector<128x1xf32>
    %136 = arith.subf %134, %135 : vector<128x1xf32>
    %137 = vector.broadcast %132 : vector<128x1xf32> to vector<128x128xf32>
    %138 = arith.subf %125, %137 : vector<128x128xf32>
    %cst_39 = arith.constant 9.99999974E-6 : f32
    %139 = vector.broadcast %cst_39 : f32 to vector<128x1xf32>
    %140 = arith.addf %136, %139 : vector<128x1xf32>
    %141 = math.rsqrt %140 : vector<128x1xf32>
    %142 = vector.broadcast %141 : vector<128x1xf32> to vector<128x128xf32>
    %143 = arith.mulf %138, %142 : vector<128x128xf32>
    %144 = vector.broadcast %9 : vector<1x128xf32> to vector<128x128xf32>
    %145 = arith.mulf %143, %144 : vector<128x128xf32>
    %146 = vector.broadcast %10 : vector<1x128xf32> to vector<128x128xf32>
    %147 = arith.addf %145, %146 : vector<128x128xf32>
    %148 = arith.truncf %147 : vector<128x128xf32> to vector<128x128xbf16>
    %c0_40 = arith.constant 0 : index
    %c0_41 = arith.constant 0 : index
    %c0_42 = arith.constant 0 : index
    %149 = vector.load %arg5[%c0_40, %c0_41, %c0_42] : memref<1x128x512xbf16, #tpu.memory_space<vmem>>, vector<1x128x512xbf16>
    %150 = vector.shape_cast %149 : vector<1x128x512xbf16> to vector<128x512xbf16>
    %cst_43 = arith.constant dense<0.000000e+00> : vector<128x512xf32>
    %151 = tpu.matmul %148, %150, %cst_43 {dimension_numbers = #tpu.dot_dimension_numbers<[1], [0], [0], [1], [0, 0, 1, 1], [], []>} : vector<128x128xbf16>, vector<128x512xbf16>, vector<128x512xf32> -> vector<128x512xf32>
    %152 = vector.broadcast %11 : vector<1x512xf32> to vector<128x512xf32>
    %153 = arith.addf %151, %152 : vector<128x512xf32>
    %cst_44 = arith.constant 0.000000e+00 : f32
    %154 = vector.broadcast %cst_44 : f32 to vector<128x512xf32>
    %155 = arith.maximumf %153, %154 : vector<128x512xf32>
    %156 = arith.truncf %155 : vector<128x512xf32> to vector<128x512xbf16>
    %c0_45 = arith.constant 0 : index
    %c0_46 = arith.constant 0 : index
    %c0_47 = arith.constant 0 : index
    %157 = vector.load %arg6[%c0_45, %c0_46, %c0_47] : memref<1x512x128xbf16, #tpu.memory_space<vmem>>, vector<1x512x128xbf16>
    %158 = vector.shape_cast %157 : vector<1x512x128xbf16> to vector<512x128xbf16>
    %cst_48 = arith.constant dense<0.000000e+00> : vector<128x128xf32>
    %159 = tpu.matmul %156, %158, %cst_48 {dimension_numbers = #tpu.dot_dimension_numbers<[1], [0], [0], [1], [0, 0, 1, 1], [], []>} : vector<128x512xbf16>, vector<512x128xbf16>, vector<128x128xf32> -> vector<128x128xf32>
    %160 = arith.addf %125, %159 : vector<128x128xf32>
    %161 = vector.broadcast %12 : vector<1x128xf32> to vector<128x128xf32>
    %162 = arith.addf %160, %161 : vector<128x128xf32>
    %c0_49 = arith.constant 0 : index
    %c0_50 = arith.constant 0 : index
    %163 = vector.load %arg11[%c0_49, %c0_50] : memref<128x128xf32, #tpu.memory_space<vmem>>, vector<128x128xf32>
    tpu.vector_store %arg11[%c0_49, %c0_50], %162 {strides = array<i32>} : memref<128x128xf32, #tpu.memory_space<vmem>>, vector<128x128xf32>,
    %c7_i32 = arith.constant 7 : i32
    %164 = arith.cmpi eq, %arg1, %c7_i32 : i32
    %165 = arith.extui %164 : i1 to i32
    %c0_i32_51 = arith.constant 0 : i32
    %166 = arith.cmpi ne, %165, %c0_i32_51 : i32
    scf.if %166 {
      %c0_52 = arith.constant 0 : index
      %c0_53 = arith.constant 0 : index
      %167 = vector.load %arg8[%c0_52, %c0_53] : memref<1x128xf32, #tpu.memory_space<vmem>>, vector<1x128xf32>
      %c0_54 = arith.constant 0 : index
      %c0_55 = arith.constant 0 : index
      %168 = vector.load %arg9[%c0_54, %c0_55] : memref<1x128xf32, #tpu.memory_space<vmem>>, vector<1x128xf32>
      %cst_56 = arith.constant dense<0.000000e+00> : vector<128xf32>
      %169 = vector.multi_reduction <add>, %162, %cst_56 [1] : vector<128x128xf32> to vector<128xf32>
      %170 = vector.shape_cast %169 : vector<128xf32> to vector<128x1xf32>
      %171 = arith.mulf %162, %162 : vector<128x128xf32>
      %cst_57 = arith.constant dense<0.000000e+00> : vector<128xf32>
      %172 = vector.multi_reduction <add>, %171, %cst_57 [1] : vector<128x128xf32> to vector<128xf32>
      %173 = vector.shape_cast %172 : vector<128xf32> to vector<128x1xf32>
      %cst_58 = arith.constant 7.812500e-03 : f32
      %174 = vector.broadcast %cst_58 : f32 to vector<128x1xf32>
      %175 = arith.mulf %170, %174 : vector<128x1xf32>
      %cst_59 = arith.constant 7.812500e-03 : f32
      %176 = vector.broadcast %cst_59 : f32 to vector<128x1xf32>
      %177 = arith.mulf %173, %176 : vector<128x1xf32>
      %178 = arith.mulf %175, %175 : vector<128x1xf32>
      %179 = arith.subf %177, %178 : vector<128x1xf32>
      %180 = vector.broadcast %175 : vector<128x1xf32> to vector<128x128xf32>
      %181 = arith.subf %162, %180 : vector<128x128xf32>
      %cst_60 = arith.constant 9.99999974E-6 : f32
      %182 = vector.broadcast %cst_60 : f32 to vector<128x1xf32>
      %183 = arith.addf %179, %182 : vector<128x1xf32>
      %184 = math.rsqrt %183 : vector<128x1xf32>
      %185 = vector.broadcast %184 : vector<128x1xf32> to vector<128x128xf32>
      %186 = arith.mulf %181, %185 : vector<128x128xf32>
      %187 = vector.broadcast %167 : vector<1x128xf32> to vector<128x128xf32>
      %188 = arith.mulf %186, %187 : vector<128x128xf32>
      %189 = vector.broadcast %168 : vector<1x128xf32> to vector<128x128xf32>
      %190 = arith.addf %188, %189 : vector<128x128xf32>
      %191 = arith.truncf %190 : vector<128x128xf32> to vector<128x128xbf16>
      %c0_61 = arith.constant 0 : index
      %c0_62 = arith.constant 0 : index
      %192 = vector.load %arg10[%c0_61, %c0_62] : memref<128x128xbf16, #tpu.memory_space<vmem>>, vector<128x128xbf16>
      tpu.vector_store %arg10[%c0_61, %c0_62], %191 {strides = array<i32>} : memref<128x128xbf16, #tpu.memory_space<vmem>>, vector<128x128xbf16>,
    } else {
    }
    return
  }
  func.func @transform_0(%arg0: i32, %arg1: i32) -> (i32, i32) {
    %c0_i32 = arith.constant 0 : i32
    %c0_i32_0 = arith.constant 0 : i32
    return %arg0, %c0_i32 : i32, i32
  }
  func.func @transform_1(%arg0: i32, %arg1: i32) -> (i32, i32, i32) {
    %c0_i32 = arith.constant 0 : i32
    %c0_i32_0 = arith.constant 0 : i32
    %c0_i32_1 = arith.constant 0 : i32
    return %arg1, %c0_i32, %c0_i32_0 : i32, i32, i32
  }
  func.func @transform_2(%arg0: i32, %arg1: i32) -> (i32, i32, i32) {
    %c0_i32 = arith.constant 0 : i32
    %c0_i32_0 = arith.constant 0 : i32
    %c0_i32_1 = arith.constant 0 : i32
    return %arg1, %c0_i32, %c0_i32_0 : i32, i32, i32
  }
  func.func @transform_3(%arg0: i32, %arg1: i32) -> (i32, i32, i32) {
    %c0_i32 = arith.constant 0 : i32
    %c0_i32_0 = arith.constant 0 : i32
    %c0_i32_1 = arith.constant 0 : i32
    return %arg1, %c0_i32, %c0_i32_0 : i32, i32, i32
  }
  func.func @transform_4(%arg0: i32, %arg1: i32) -> (i32, i32, i32) {
    %c0_i32 = arith.constant 0 : i32
    %c0_i32_0 = arith.constant 0 : i32
    %c0_i32_1 = arith.constant 0 : i32
    return %arg1, %c0_i32, %c0_i32_0 : i32, i32, i32
  }
  func.func @transform_5(%arg0: i32, %arg1: i32) -> (i32, i32, i32) {
    %c0_i32 = arith.constant 0 : i32
    %c0_i32_0 = arith.constant 0 : i32
    %c0_i32_1 = arith.constant 0 : i32
    return %arg1, %c0_i32, %c0_i32_0 : i32, i32, i32
  }
  func.func @transform_6(%arg0: i32, %arg1: i32) -> (i32, i32) {
    %c0_i32 = arith.constant 0 : i32
    %c0_i32_0 = arith.constant 0 : i32
    %c0_i32_1 = arith.constant 0 : i32
    return %c0_i32, %c0_i32_0 : i32, i32
  }
  func.func @transform_7(%arg0: i32, %arg1: i32) -> (i32, i32) {
    %c0_i32 = arith.constant 0 : i32
    %c0_i32_0 = arith.constant 0 : i32
    %c0_i32_1 = arith.constant 0 : i32
    return %c0_i32, %c0_i32_0 : i32, i32
  }
  func.func @transform_8(%arg0: i32, %arg1: i32) -> (i32, i32) {
    %c0_i32 = arith.constant 0 : i32
    %c0_i32_0 = arith.constant 0 : i32
    return %arg0, %c0_i32 : i32, i32
  }
}

</mosaic_0001>

<llo_original>
// kernel: gpt_forward_fused.3
$region0: #{gpt_forward_fused.3}
  #allocation0 [shape = 'u32[]', space=smem, size = 0x4, offset = 0x4, fixed_abs, tag = 'smem constant byte address 0x4 - core index']
  #allocation1 [shape = 'u32[144,128]{1,0:T(1,128)}', space=vmem, size = 0x12000, scoped, tag = 'internal scratch']
  %s0 = inlined_call_operand.vmem [shape: bf16[256,128], index: 0, kind: input, shape index: {}]
  %s1 = inlined_call_operand.vmem [shape: bf16[128,256], index: 1, kind: input, shape index: {}]
  %s2 = inlined_call_operand.vmem [shape: f32[1,256], index: 2, kind: input, shape index: {}]
  %s3 = inlined_call_operand.hbm [shape: f32[256,256], index: 3, kind: output, shape index: {}]
  %s4 = sld [smem:[#allocation0]]
  $region86: #{gpt_forward_fused.3} parent=0
    _
  %s6 = ssub.s32 1, %s4
  %s7 = scalar_select 0, %s6, %s4
  $region1: #{gpt_forward_fused.3} parent=0
    #allocation2 [shape = 'u8[65536]{0}', space=vmem, size = 0x10000, scoped, tag = 'input window, operand 1']
    #allocation3 [shape = 'u8[131072]{0}', space=vmem, size = 0x20000, scoped, tag = 'output window, operand 0']
    #allocation4 [shape = 's32[2]{0}', space=sflag, size = 0x8, scoped, tag = 'scoped memory for gpt_forward_fused.3']
    %8 = vsyncpa [#allocation4], 0
    %s9 = scalar_lea.sflag [#allocation4], 1
    %10 = vsyncpa %s9, 0
    loop: start=0, step=1, limit=6
    $region2: #{gpt_forward_fused.3} parent=1 // loop_pre_header
      _
    $region3: #{gpt_forward_fused.3} parent=1 // loop_header
      %s12 = sphi 0, %s16
      %p13 = scmp.ge.s32.totalorder %s12, 6
      %s19 = sphi 0, %s31
      %s20 = sphi 0, %s27
      %s21 = sphi 0, %s19
      %s22 = sphi 0, %s20
      %s23 = sphi 0, %s21
      %s24 = sphi 0, %s22
      %s34 = sphi 0, %s36
      %s37 = sphi 0, %s34
      %s38 = sphi 0, %s37
      %s54 = sphi 0, %s38
      %s60 = sphi 0, %s62
      %s63 = sphi 0, %s60
      %s64 = sphi 0, %s63
      %s80 = sphi 0, %s64
      %s86 = sphi 0, %s88
      %s89 = sphi 0, %s86
      %s90 = sphi 0, %s89
      %s106 = sphi 0, %s90
      %s114 = sphi 0, %s116
      %s117 = sphi 0, %s114
      %s118 = sphi 0, %s117
      %s134 = sphi 0, %s118
    $region4: #{gpt_forward_fused.3} parent=1 // loop_header_branch
      %15 = sbr.rel (%p13) target = $region8
    $region5: #{gpt_forward_fused.3} parent=1 // loop_body
      %s17 = ssub.s32 %s12, 1
      %s18 = ssub.s32 %s12, 2
      %s25 = sadd.s32 1, %s20
      %p26 = scmp.ge.s32.totalorder %s25, 2
      %s27 = scalar_select %p26, 0, %s25
      %s28 = sadd.s32 1, %s19
      %s29 = scalar_select %p26, %s28, %s19
      %p30 = scmp.ge.s32.totalorder %s29, 2
      %s31 = scalar_select %p30, 0, %s29
      %s32 = ssub.s32 %s19, %s31
      %p33 = scmp.eq.s32.totalorder %s32, 0
      %s35 = sadd.s32 %s34, 1
      %s36 = scalar_select %p33, %s34, %s35
      %p39 = pneg %p33
      %p40 = scmp.eq.s32.totalorder %s12, 3
      %p41 = por %p39, %p40
      %p42 = scmp.ne.s32.totalorder %s34, %s37
      %p43 = scmp.eq.s32.totalorder %s12, 0
      %p44 = por %p42, %p43
      %p45 = scmp.ne.s32.totalorder %s34, %s37
      %p46 = scmp.eq.s32.totalorder %s17, 3
      %p47 = por %p45, %p46
      %p48 = scmp.ne.s32.totalorder %s37, %s38
      %p49 = scmp.eq.s32.totalorder %s17, 0
      %p50 = por %p48, %p49
      %p51 = scmp.ne.s32.totalorder %s37, %s38
      %p52 = scmp.eq.s32.totalorder %s18, 3
      %p53 = por %p51, %p52
      %p55 = scmp.ne.s32.totalorder %s38, %s54
      %p56 = scmp.eq.s32.totalorder %s18, 0
      %p57 = por %p55, %p56
      %s58 = ssub.s32 %s20, %s27
      %p59 = scmp.eq.s32.totalorder %s58, 0
      %s61 = sadd.s32 %s60, 1
      %s62 = scalar_select %p59, %s60, %s61
      %p65 = pneg %p59
      %p66 = scmp.eq.s32.totalorder %s12, 3
      %p67 = por %p65, %p66
      %p68 = scmp.ne.s32.totalorder %s60, %s63
      %p69 = scmp.eq.s32.totalorder %s12, 0
      %p70 = por %p68, %p69
      %p71 = scmp.ne.s32.totalorder %s60, %s63
      %p72 = scmp.eq.s32.totalorder %s17, 3
      %p73 = por %p71, %p72
      %p74 = scmp.ne.s32.totalorder %s63, %s64
      %p75 = scmp.eq.s32.totalorder %s17, 0
      %p76 = por %p74, %p75
      %p77 = scmp.ne.s32.totalorder %s63, %s64
      %p78 = scmp.eq.s32.totalorder %s18, 3
      %p79 = por %p77, %p78
      %p81 = scmp.ne.s32.totalorder %s64, %s80
      %p82 = scmp.eq.s32.totalorder %s18, 0
      %p83 = por %p81, %p82
      %s84 = ssub.s32 %s20, %s27
      %p85 = scmp.eq.s32.totalorder %s84, 0
      %s87 = sadd.s32 %s86, 1
      %s88 = scalar_select %p85, %s86, %s87
      %p91 = pneg %p85
      %p92 = scmp.eq.s32.totalorder %s12, 3
      %p93 = por %p91, %p92
      %p94 = scmp.ne.s32.totalorder %s86, %s89
      %p95 = scmp.eq.s32.totalorder %s12, 0
      %p96 = por %p94, %p95
      %p97 = scmp.ne.s32.totalorder %s86, %s89
      %p98 = scmp.eq.s32.totalorder %s17, 3
      %p99 = por %p97, %p98
      %p100 = scmp.ne.s32.totalorder %s89, %s90
      %p101 = scmp.eq.s32.totalorder %s17, 0
      %p102 = por %p100, %p101
      %p103 = scmp.ne.s32.totalorder %s89, %s90
      %p104 = scmp.eq.s32.totalorder %s18, 3
      %p105 = por %p103, %p104
      %p107 = scmp.ne.s32.totalorder %s90, %s106
      %p108 = scmp.eq.s32.totalorder %s18, 0
      %p109 = por %p107, %p108
      %s110 = ssub.s32 %s19, %s31
      %s111 = ssub.s32 %s20, %s27
      %s112 = sor.u32 %s110, %s111
      %p113 = scmp.eq.s32.totalorder %s112, 0
      %s115 = sadd.s32 %s114, 1
      %s116 = scalar_select %p113, %s114, %s115
      %p119 = pneg %p113
      %p120 = scmp.eq.s32.totalorder %s12, 3
      %p121 = por %p119, %p120
      %p122 = scmp.ne.s32.totalorder %s114, %s117
      %p123 = scmp.eq.s32.totalorder %s12, 0
      %p124 = por %p122, %p123
      %p125 = scmp.ne.s32.totalorder %s114, %s117
      %p126 = scmp.eq.s32.totalorder %s17, 3
      %p127 = por %p125, %p126
      %p128 = scmp.ne.s32.totalorder %s117, %s118
      %p129 = scmp.eq.s32.totalorder %s17, 0
      %p130 = por %p128, %p129
      %p131 = scmp.ne.s32.totalorder %s117, %s118
      %p132 = scmp.eq.s32.totalorder %s18, 3
      %p133 = por %p131, %p132
      %p135 = scmp.ne.s32.totalorder %s118, %s134
      %p136 = scmp.eq.s32.totalorder %s18, 0
      %p137 = por %p135, %p136
      %p138 = scmp.le.s32.totalorder 1, %s12
      %p139 = scmp.lt.s32.totalorder %s12, 5
      %p140 = pnand %p138, %p139
      %p141 = pneg %p140
      // Predicated region
      $region9: #{gpt_forward_fused.3} parent=5 // pred_check
        _
      $region10: #{gpt_forward_fused.3} parent=5 // pred_check_branch
        %143 = sbr.rel (%p140) target = $region12
      $region11: #{gpt_forward_fused.3} parent=5 // pred_region
        %s144 = ssub.s32 %s12, 1
      $region12: #{gpt_forward_fused.3} parent=5 // pred_fallthru
        _
      %p145 = scmp.lt.s32.totalorder %s12, 4
      // Predicated region
      $region13: #{gpt_forward_fused.3} parent=5 // pred_check
        %p146 = pneg %p145
      $region14: #{gpt_forward_fused.3} parent=5 // pred_check_branch
        %148 = sbr.rel (%p146) target = $region16
      $region15: #{gpt_forward_fused.3} parent=5 // pred_region
        // Predicated region
        $region17: #{gpt_forward_fused.3} parent=15 // pred_check
          %p149 = pneg %p44
        $region18: #{gpt_forward_fused.3} parent=15 // pred_check_branch
          %151 = sbr.rel (%p149) target = $region20
        $region19: #{gpt_forward_fused.3} parent=15 // pred_region
          %s152 = smul.u32 16, %s19
          %p153 = scmp.lt.s32.totalorder %s152, 31
          %s154 = scalar_select %p153, %s152, 31
          %s155 = smul.addr %s154, 4
          %s156 = scalar_lea.vmem %s0, %s155
          %s157 = smul.u32 16, %s19
        $region20: #{gpt_forward_fused.3} parent=15 // pred_fallthru
          _
        // Predicated region
        $region21: #{gpt_forward_fused.3} parent=15 // pred_check
          %p158 = pneg %p70
        $region22: #{gpt_forward_fused.3} parent=15 // pred_check_branch
          %160 = sbr.rel (%p158) target = $region24
        $region23: #{gpt_forward_fused.3} parent=15 // pred_region
          %s161 = sand.u32 %s60, 1
          %s162 = sand.u32 %s60, 1
          %s163 = smul.addr %s162, 64
          %s164 = scalar_lea.vmem [#allocation2], %s163
          %s165 = smul.addr %s20, 4
          %s166 = scalar_lea.vmem %s1, %s165
          // Predicated region
          $region25: #{gpt_forward_fused.3} parent=23 // pred_check
            _
          $region26: #{gpt_forward_fused.3} parent=23 // pred_check_branch
            %168 = sbr.rel (0) target = $region28
          $region27: #{gpt_forward_fused.3} parent=23 // pred_region
            // Predicated region
            $region29: #{gpt_forward_fused.3} parent=27 // pred_check
              _
            $region30: #{gpt_forward_fused.3} parent=27 // pred_check_branch
              %170 = sbr.rel target = $region32
            $region31: #{gpt_forward_fused.3} parent=27 // pred_region
              // Predicated region
              $region44: #{gpt_forward_fused.3} parent=31 // pred_check
                _
              $region45: #{gpt_forward_fused.3} parent=31 // pred_check_branch
                %215 = sbr.rel (0) target = $region47
              $region46: #{gpt_forward_fused.3} parent=31 // pred_region
                loop: start=0, step=1, limit=1
                $region48: #{gpt_forward_fused.3} parent=46 // loop_pre_header
                  _
                $region49: #{gpt_forward_fused.3} parent=46 // loop_header
                  %s217 = sphi 0, %s221
                  %p218 = scmp.ge.s32.totalorder %s217, 1
                  %s222 = sphi %s166, %s166
                  %s223 = sphi %s164, %s164
                $region50: #{gpt_forward_fused.3} parent=46 // loop_header_branch
                  %220 = sbr.rel (%p218) target = $region54
                $region51: #{gpt_forward_fused.3} parent=46 // loop_body
                  _
                $region52: #{gpt_forward_fused.3} parent=46 // loop_footer
                  %s221 = sadd.s32 1, %s217
                $region53: #{gpt_forward_fused.3} parent=46 // loop_footer_branch
                  %216 = sbr.rel target = $region49
                $region54: #{gpt_forward_fused.3} parent=46 // loop_exit
                  _
                loop: start=0, step=1, limit=1
                $region55: #{gpt_forward_fused.3} parent=46 // loop_pre_header
                  _
                $region56: #{gpt_forward_fused.3} parent=46 // loop_header
                  %s226 = sphi 0, %s230
                  %p227 = scmp.ge.s32.totalorder %s226, 1
                  %s231 = sphi %s166, %s166
                  %s232 = sphi %s164, %s164
                $region57: #{gpt_forward_fused.3} parent=46 // loop_header_branch
                  %229 = sbr.rel (%p227) target = $region61
                $region58: #{gpt_forward_fused.3} parent=46 // loop_body
                  %v233 = vld [vmem:[%s231] sm:$0xf]
                  %234 = vst [vmem:[%s232] sm:$0xf] %v233
                  %v235 = vld [vmem:[%s231 + $0x8] sm:$0xf]
                  %236 = vst [vmem:[%s232 + $0x4] sm:$0xf] %v235
                  %v237 = vld [vmem:[%s231 + $0x10] sm:$0xf]
                  %238 = vst [vmem:[%s232 + $0x8] sm:$0xf] %v237
                  %v239 = vld [vmem:[%s231 + $0x18] sm:$0xf]
                  %240 = vst [vmem:[%s232 + $0xc] sm:$0xf] %v239
                  %v241 = vld [vmem:[%s231 + $0x20] sm:$0xf]
                  %242 = vst [vmem:[%s232 + $0x10] sm:$0xf] %v241
                  %v243 = vld [vmem:[%s231 + $0x28] sm:$0xf]
                  %244 = vst [vmem:[%s232 + $0x14] sm:$0xf] %v243
                  %v245 = vld [vmem:[%s231 + $0x30] sm:$0xf]
                  %246 = vst [vmem:[%s232 + $0x18] sm:$0xf] %v245
                  %v247 = vld [vmem:[%s231 + $0x38] sm:$0xf]
                  %248 = vst [vmem:[%s232 + $0x1c] sm:$0xf] %v247
                  %v249 = vld [vmem:[%s231 + $0x40] sm:$0xf]
                  %250 = vst [vmem:[%s232 + $0x20] sm:$0xf] %v249
                  %v251 = vld [vmem:[%s231 + $0x48] sm:$0xf]
                  %252 = vst [vmem:[%s232 + $0x24] sm:$0xf] %v251
                  %v253 = vld [vmem:[%s231 + $0x50] sm:$0xf]
                  %254 = vst [vmem:[%s232 + $0x28] sm:$0xf] %v253
                  %v255 = vld [vmem:[%s231 + $0x58] sm:$0xf]
                  %256 = vst [vmem:[%s232 + $0x2c] sm:$0xf] %v255
                  %v257 = vld [vmem:[%s231 + $0x60] sm:$0xf]
                  %258 = vst [vmem:[%s232 + $0x30] sm:$0xf] %v257
                  %v259 = vld [vmem:[%s231 + $0x68] sm:$0xf]
                  %260 = vst [vmem:[%s232 + $0x34] sm:$0xf] %v259
                  %v261 = vld [vmem:[%s231 + $0x70] sm:$0xf]
                  %262 = vst [vmem:[%s232 + $0x38] sm:$0xf] %v261
                  %v263 = vld [vmem:[%s231 + $0x78] sm:$0xf]
                  %264 = vst [vmem:[%s232 + $0x3c] sm:$0xf] %v263
                $region59: #{gpt_forward_fused.3} parent=46 // loop_footer
                  %s230 = sadd.s32 1, %s226
                $region60: #{gpt_forward_fused.3} parent=46 // loop_footer_branch
                  %225 = sbr.rel target = $region56
                $region61: #{gpt_forward_fused.3} parent=46 // loop_exit
                  _
              $region47: #{gpt_forward_fused.3} parent=31 // pred_fallthru
                _
            $region32: #{gpt_forward_fused.3} parent=27 // pred_fallthru
              _
            // Predicated region
            $region33: #{gpt_forward_fused.3} parent=27 // pred_check
              _
            $region34: #{gpt_forward_fused.3} parent=27 // pred_check_branch
              %172 = sbr.rel (0) target = $region36
            $region35: #{gpt_forward_fused.3} parent=27 // pred_region
              loop: start=0, step=1, limit=1
              $region37: #{gpt_forward_fused.3} parent=35 // loop_pre_header
                _
              $region38: #{gpt_forward_fused.3} parent=35 // loop_header
                %s175 = sphi 0, %s179
                %p176 = scmp.ge.s32.totalorder %s175, 1
                %s180 = sphi %s166, %s166
                %s181 = sphi %s164, %s164
              $region39: #{gpt_forward_fused.3} parent=35 // loop_header_branch
                %178 = sbr.rel (%p176) target = $region43
              $region40: #{gpt_forward_fused.3} parent=35 // loop_body
                %v182 = vld [vmem:[%s180] sm:$0xf]
                %183 = vst [vmem:[%s181] sm:$0xf] %v182
                %v184 = vld [vmem:[%s180 + $0x8] sm:$0xf]
                %185 = vst [vmem:[%s181 + $0x4] sm:$0xf] %v184
                %v186 = vld [vmem:[%s180 + $0x10] sm:$0xf]
                %187 = vst [vmem:[%s181 + $0x8] sm:$0xf] %v186
                %v188 = vld [vmem:[%s180 + $0x18] sm:$0xf]
                %189 = vst [vmem:[%s181 + $0xc] sm:$0xf] %v188
                %v190 = vld [vmem:[%s180 + $0x20] sm:$0xf]
                %191 = vst [vmem:[%s181 + $0x10] sm:$0xf] %v190
                %v192 = vld [vmem:[%s180 + $0x28] sm:$0xf]
                %193 = vst [vmem:[%s181 + $0x14] sm:$0xf] %v192
                %v194 = vld [vmem:[%s180 + $0x30] sm:$0xf]
                %195 = vst [vmem:[%s181 + $0x18] sm:$0xf] %v194
                %v196 = vld [vmem:[%s180 + $0x38] sm:$0xf]
                %197 = vst [vmem:[%s181 + $0x1c] sm:$0xf] %v196
                %v198 = vld [vmem:[%s180 + $0x40] sm:$0xf]
                %199 = vst [vmem:[%s181 + $0x20] sm:$0xf] %v198
                %v200 = vld [vmem:[%s180 + $0x48] sm:$0xf]
                %201 = vst [vmem:[%s181 + $0x24] sm:$0xf] %v200
                %v202 = vld [vmem:[%s180 + $0x50] sm:$0xf]
                %203 = vst [vmem:[%s181 + $0x28] sm:$0xf] %v202
                %v204 = vld [vmem:[%s180 + $0x58] sm:$0xf]
                %205 = vst [vmem:[%s181 + $0x2c] sm:$0xf] %v204
                %v206 = vld [vmem:[%s180 + $0x60] sm:$0xf]
                %207 = vst [vmem:[%s181 + $0x30] sm:$0xf] %v206
                %v208 = vld [vmem:[%s180 + $0x68] sm:$0xf]
                %209 = vst [vmem:[%s181 + $0x34] sm:$0xf] %v208
                %v210 = vld [vmem:[%s180 + $0x70] sm:$0xf]
                %211 = vst [vmem:[%s181 + $0x38] sm:$0xf] %v210
                %v212 = vld [vmem:[%s180 + $0x78] sm:$0xf]
                %213 = vst [vmem:[%s181 + $0x3c] sm:$0xf] %v212
              $region41: #{gpt_forward_fused.3} parent=35 // loop_footer
                %s179 = sadd.s32 1, %s175
              $region42: #{gpt_forward_fused.3} parent=35 // loop_footer_branch
                %174 = sbr.rel target = $region38
              $region43: #{gpt_forward_fused.3} parent=35 // loop_exit
                _
            $region36: #{gpt_forward_fused.3} parent=27 // pred_fallthru
              _
          $region28: #{gpt_forward_fused.3} parent=23 // pred_fallthru
            _
          %265 = vnop
        $region24: #{gpt_forward_fused.3} parent=15 // pred_fallthru
          _
        // Predicated region
        $region62: #{gpt_forward_fused.3} parent=15 // pred_check
          %p266 = pneg %p96
        $region63: #{gpt_forward_fused.3} parent=15 // pred_check_branch
          %268 = sbr.rel (%p266) target = $region65
        $region64: #{gpt_forward_fused.3} parent=15 // pred_region
          %p269 = scmp.lt.s32.totalorder %s20, 1
          %s270 = scalar_select %p269, %s20, 1
          %s271 = scalar_lea.vmem %s2, %s270
        $region65: #{gpt_forward_fused.3} parent=15 // pred_fallthru
          _
      $region16: #{gpt_forward_fused.3} parent=5 // pred_fallthru
        _
      %p272 = scmp.le.s32.totalorder 1, %s12
      %p273 = scmp.lt.s32.totalorder %s12, 5
      %p274 = pnand %p272, %p273
      %p275 = pneg %p274
      // Predicated region
      $region66: #{gpt_forward_fused.3} parent=5 // pred_check
        _
      $region67: #{gpt_forward_fused.3} parent=5 // pred_check_branch
        %277 = sbr.rel (%p274) target = $region69
      $region68: #{gpt_forward_fused.3} parent=5 // pred_region
        %s278 = ssub.s32 %s12, 1
        %s279 = sand.u32 %s63, 1
        %s280 = sand.u32 %s63, 1
        %s281 = smul.addr %s280, 64
        %s282 = scalar_lea.vmem [#allocation2], %s281
        // Predicated region
        $region70: #{gpt_forward_fused.3} parent=68 // pred_check
          %p283 = pneg %p76
        $region71: #{gpt_forward_fused.3} parent=68 // pred_check_branch
          %285 = sbr.rel (%p283) target = $region73
        $region72: #{gpt_forward_fused.3} parent=68 // pred_region
          _
        $region73: #{gpt_forward_fused.3} parent=68 // pred_fallthru
          _
        %s286 = smul.u32 16, %s21
        %p287 = scmp.lt.s32.totalorder %s286, 31
        %s288 = scalar_select %p287, %s286, 31
        %s289 = smul.addr %s288, 4
        %s290 = scalar_lea.vmem %s0, %s289
        %p291 = pneg %p50
        %p292 = pneg %p47
        %s293 = sand.u32 %s63, 1
        %s294 = sand.u32 %s63, 1
        %s295 = smul.addr %s294, 64
        %s296 = scalar_lea.vmem [#allocation2], %s295
        %p297 = pneg %p76
        %p298 = pneg %p73
        %p299 = scmp.lt.s32.totalorder %s22, 1
        %s300 = scalar_select %p299, %s22, 1
        %s301 = scalar_lea.vmem %s2, %s300
        %p302 = pneg %p102
        %p303 = pneg %p99
        %p304 = pneg %p130
        %p305 = pneg %p127
        %s306 = sand.u32 %s117, 1
        %s307 = scalar_lea.sflag [#allocation4], %s306
        %s308 = sand.u32 %s117, 1
        %s309 = smul.addr %s308, 128
        %s310 = scalar_lea.vmem [#allocation3], %s309
        %s311 = smul.u32 16, %s21
        %p312 = scmp.lt.s32.totalorder %s311, 31
        %s313 = scalar_select %p312, %s311, 31
        %s314 = smul.addr %s313, 4
        %s315 = scalar_lea.vmem %s0, %s314
        %s316 = smul.u32 16, %s21
        %p317 = scmp.lt.s32.totalorder %s22, 1
        %s318 = scalar_select %p317, %s22, 1
        %s319 = scalar_lea.vmem %s2, %s318
        %s320 = smul.u32 16, %s21
        %v322 = vld [vmem:[%s315] sm:$0xf]
        %v323 = vld [vmem:[%s315 + $0x4] sm:$0xf]
        %v324 = vld [vmem:[%s315 + $0x8] sm:$0xf]
        %v325 = vld [vmem:[%s315 + $0xc] sm:$0xf]
        %v326 = vld [vmem:[%s315 + $0x10] sm:$0xf]
        %v327 = vld [vmem:[%s315 + $0x14] sm:$0xf]
        %v328 = vld [vmem:[%s315 + $0x18] sm:$0xf]
        %v329 = vld [vmem:[%s315 + $0x1c] sm:$0xf]
        %v330 = vld [vmem:[%s315 + $0x20] sm:$0xf]
        %v331 = vld [vmem:[%s315 + $0x24] sm:$0xf]
        %v332 = vld [vmem:[%s315 + $0x28] sm:$0xf]
        %v333 = vld [vmem:[%s315 + $0x2c] sm:$0xf]
        %v334 = vld [vmem:[%s315 + $0x30] sm:$0xf]
        %v335 = vld [vmem:[%s315 + $0x34] sm:$0xf]
        %v336 = vld [vmem:[%s315 + $0x38] sm:$0xf]
        %v337 = vld [vmem:[%s315 + $0x3c] sm:$0xf]
        %v338 = vld [vmem:[%s282] sm:$0xf]
        %v339 = vld [vmem:[%s282 + $0x4] sm:$0xf]
        %v340 = vld [vmem:[%s282 + $0x8] sm:$0xf]
        %v341 = vld [vmem:[%s282 + $0xc] sm:$0xf]
        %v342 = vld [vmem:[%s282 + $0x10] sm:$0xf]
        %v343 = vld [vmem:[%s282 + $0x14] sm:$0xf]
        %v344 = vld [vmem:[%s282 + $0x18] sm:$0xf]
        %v345 = vld [vmem:[%s282 + $0x1c] sm:$0xf]
        %v346 = vld [vmem:[%s282 + $0x20] sm:$0xf]
        %v347 = vld [vmem:[%s282 + $0x24] sm:$0xf]
        %v348 = vld [vmem:[%s282 + $0x28] sm:$0xf]
        %v349 = vld [vmem:[%s282 + $0x2c] sm:$0xf]
        %v350 = vld [vmem:[%s282 + $0x30] sm:$0xf]
        %v351 = vld [vmem:[%s282 + $0x34] sm:$0xf]
        %v352 = vld [vmem:[%s282 + $0x38] sm:$0xf]
        %v353 = vld [vmem:[%s282 + $0x3c] sm:$0xf]
        %v354 = vld [vmem:[%s319] sm:$0x1]
        %v356 = vlaneseq
        %v357 = vshrl.u32 %v356, 7
        %v358 = vsub.s32 0, %v357
        %v359 = vrot.slane %v354, %v358
        %v377 = vunpack.c.l.b16 %v322
        %v378 = vunpack.c.l.b16 %v323
        %v379 = vunpack.c.l.b16 %v324
        %v380 = vunpack.c.l.b16 %v325
        %v381 = vunpack.c.l.b16 %v326
        %v382 = vunpack.c.l.b16 %v327
        %v383 = vunpack.c.l.b16 %v328
        %v384 = vunpack.c.l.b16 %v329
        %v385 = vunpack.c.l.b16 %v330
        %v386 = vunpack.c.l.b16 %v331
        %v387 = vunpack.c.l.b16 %v332
        %v388 = vunpack.c.l.b16 %v333
        %v389 = vunpack.c.l.b16 %v334
        %v390 = vunpack.c.l.b16 %v335
        %v391 = vunpack.c.l.b16 %v336
        %v392 = vunpack.c.l.b16 %v337
        %v393 = vpack.c.b16 %v378, %v377
        %v394 = vpack.c.b16 %v380, %v379
        %v395 = vpack.c.b16 %v382, %v381
        %v396 = vpack.c.b16 %v384, %v383
        %v397 = vpack.c.b16 %v386, %v385
        %v398 = vpack.c.b16 %v388, %v387
        %v399 = vpack.c.b16 %v390, %v389
        %v400 = vpack.c.b16 %v392, %v391
        %v425 = vunpack.c.l.b16 %v338
        %v426 = vunpack.c.l.b16 %v339
        %v427 = vunpack.c.l.b16 %v340
        %v428 = vunpack.c.l.b16 %v341
        %v429 = vunpack.c.l.b16 %v342
        %v430 = vunpack.c.l.b16 %v343
        %v431 = vunpack.c.l.b16 %v344
        %v432 = vunpack.c.l.b16 %v345
        %v433 = vunpack.c.l.b16 %v346
        %v434 = vunpack.c.l.b16 %v347
        %v435 = vunpack.c.l.b16 %v348
        %v436 = vunpack.c.l.b16 %v349
        %v437 = vunpack.c.l.b16 %v350
        %v438 = vunpack.c.l.b16 %v351
        %v439 = vunpack.c.l.b16 %v352
        %v440 = vunpack.c.l.b16 %v353
        %v441 = vpack.c.b16 %v426, %v425
        %v442 = vpack.c.b16 %v428, %v427
        %v443 = vpack.c.b16 %v430, %v429
        %v444 = vpack.c.b16 %v432, %v431
        %v445 = vpack.c.b16 %v434, %v433
        %v446 = vpack.c.b16 %v436, %v435
        %v447 = vpack.c.b16 %v438, %v437
        %v448 = vpack.c.b16 %v440, %v439
        %457 = vmatprep.subr.bf16.mxu0 0
        %458 = vmatpush1.bf16.msra.mxu0 %v441
        %459 = vmatprep.subr.bf16.mxu0 0
        %460 = vmatpush1.bf16.msra.mxu0 %v442
        %461 = vmatprep.subr.bf16.mxu0 0
        %462 = vmatpush1.bf16.msra.mxu0 %v443
        %463 = vmatprep.subr.bf16.mxu0 0
        %464 = vmatpush1.bf16.msra.mxu0 %v444
        %465 = vmatprep.subr.bf16.mxu0 0
        %466 = vmatpush1.bf16.msra.mxu0 %v445
        %467 = vmatprep.subr.bf16.mxu0 0
        %468 = vmatpush1.bf16.msra.mxu0 %v446
        %469 = vmatprep.subr.bf16.mxu0 0
        %470 = vmatpush1.bf16.msra.mxu0 %v447
        %471 = vmatprep.subr.bf16.mxu0 0
        %472 = vmatpush1.bf16.msra.mxu0 %v448
        %473 = vmatprep.subr.bf16.mxu0 0
        %474 = vmatpush1.bf16.msra.mxu0 0
        %475 = vmatprep.subr.bf16.mxu0 0
        %476 = vmatpush1.bf16.msra.mxu0 0
        %477 = vmatprep.subr.bf16.mxu0 0
        %478 = vmatpush1.bf16.msra.mxu0 0
        %479 = vmatprep.subr.bf16.mxu0 0
        %480 = vmatpush1.bf16.msra.mxu0 0
        %481 = vmatprep.subr.bf16.mxu0 0
        %482 = vmatpush1.bf16.msra.mxu0 0
        %483 = vmatprep.subr.bf16.mxu0 0
        %484 = vmatpush1.bf16.msra.mxu0 0
        %485 = vmatprep.subr.bf16.mxu0 0
        %486 = vmatpush1.bf16.msra.mxu0 0
        %487 = vmatprep.subr.bf16.mxu0 0
        %488 = vmatpush1.bf16.msra.mxu0 0
        %489 = vmatprep.mubr.bf16.mxu0 0
        %490 = vmatmul.mubr.bf16.gmra.mrb[0].mxu0 %v393
        %v491 = vpop.f32.mrb[0].mxu0
        %v492 = vadd.f32 %v359, %v491
        %v493 = vpop.f32.mrb[0].mxu0
        %v494 = vpop.f32.mrb[0].mxu0
        %v495 = vadd.f32 %v359, %v494
        %v496 = vpop.f32.mrb[0].mxu0
        %497 = vmatprep.mubr.bf16.mxu0 0
        %498 = vmatmul.mubr.bf16.gmra.mrb[0].mxu0 %v394
        %v499 = vpop.f32.mrb[0].mxu0
        %v500 = vadd.f32 %v359, %v499
        %v501 = vpop.f32.mrb[0].mxu0
        %v502 = vpop.f32.mrb[0].mxu0
        %v503 = vadd.f32 %v359, %v502
        %v504 = vpop.f32.mrb[0].mxu0
        %505 = vmatprep.mubr.bf16.mxu0 0
        %506 = vmatmul.mubr.bf16.gmra.mrb[0].mxu0 %v395
        %v507 = vpop.f32.mrb[0].mxu0
        %v508 = vadd.f32 %v359, %v507
        %v509 = vpop.f32.mrb[0].mxu0
        %v510 = vpop.f32.mrb[0].mxu0
        %v511 = vadd.f32 %v359, %v510
        %v512 = vpop.f32.mrb[0].mxu0
        %513 = vmatprep.mubr.bf16.mxu0 0
        %514 = vmatmul.mubr.bf16.gmra.mrb[0].mxu0 %v396
        %v515 = vpop.f32.mrb[0].mxu0
        %v516 = vadd.f32 %v359, %v515
        %v517 = vpop.f32.mrb[0].mxu0
        %v518 = vpop.f32.mrb[0].mxu0
        %v519 = vadd.f32 %v359, %v518
        %v520 = vpop.f32.mrb[0].mxu0
        %521 = vmatprep.mubr.bf16.mxu0 0
        %522 = vmatmul.mubr.bf16.gmra.mrb[0].mxu0 %v397
        %v523 = vpop.f32.mrb[0].mxu0
        %v524 = vadd.f32 %v359, %v523
        %v525 = vpop.f32.mrb[0].mxu0
        %v526 = vpop.f32.mrb[0].mxu0
        %v527 = vadd.f32 %v359, %v526
        %v528 = vpop.f32.mrb[0].mxu0
        %529 = vmatprep.mubr.bf16.mxu0 0
        %530 = vmatmul.mubr.bf16.gmra.mrb[0].mxu0 %v398
        %v531 = vpop.f32.mrb[0].mxu0
        %v532 = vadd.f32 %v359, %v531
        %v533 = vpop.f32.mrb[0].mxu0
        %v534 = vpop.f32.mrb[0].mxu0
        %v535 = vadd.f32 %v359, %v534
        %v536 = vpop.f32.mrb[0].mxu0
        %537 = vmatprep.mubr.bf16.mxu0 0
        %538 = vmatmul.mubr.bf16.gmra.mrb[0].mxu0 %v399
        %v539 = vpop.f32.mrb[0].mxu0
        %v540 = vadd.f32 %v359, %v539
        %v541 = vpop.f32.mrb[0].mxu0
        %v542 = vpop.f32.mrb[0].mxu0
        %v543 = vadd.f32 %v359, %v542
        %v544 = vpop.f32.mrb[0].mxu0
        %545 = vmatprep.mubr.bf16.mxu0 0
        %546 = vmatmul.mubr.bf16.gmra.mrb[0].mxu0 %v400
        %v547 = vpop.f32.mrb[0].mxu0
        %v548 = vadd.f32 %v359, %v547
        %v549 = vpop.f32.mrb[0].mxu0
        %v550 = vpop.f32.mrb[0].mxu0
        %v551 = vadd.f32 %v359, %v550
        %v552 = vpop.f32.mrb[0].mxu0
        %553 = vdwg.mxu0
        %554 = vst [vmem:[%s310] sm:$0xff] %v492
        %555 = vst [vmem:[%s310 + $0x8] sm:$0xff] %v495
        %556 = vst [vmem:[%s310 + $0x10] sm:$0xff] %v500
        %557 = vst [vmem:[%s310 + $0x18] sm:$0xff] %v503
        %558 = vst [vmem:[%s310 + $0x20] sm:$0xff] %v508
        %559 = vst [vmem:[%s310 + $0x28] sm:$0xff] %v511
        %560 = vst [vmem:[%s310 + $0x30] sm:$0xff] %v516
        %561 = vst [vmem:[%s310 + $0x38] sm:$0xff] %v519
        %562 = vst [vmem:[%s310 + $0x40] sm:$0xff] %v524
        %563 = vst [vmem:[%s310 + $0x48] sm:$0xff] %v527
        %564 = vst [vmem:[%s310 + $0x50] sm:$0xff] %v532
        %565 = vst [vmem:[%s310 + $0x58] sm:$0xff] %v535
        %566 = vst [vmem:[%s310 + $0x60] sm:$0xff] %v540
        %567 = vst [vmem:[%s310 + $0x68] sm:$0xff] %v543
        %568 = vst [vmem:[%s310 + $0x70] sm:$0xff] %v548
        %569 = vst [vmem:[%s310 + $0x78] sm:$0xff] %v551
        %s570 = sand.u32 %s117, 1
        %s571 = scalar_lea.sflag [#allocation4], %s570
        %s572 = sand.u32 %s117, 1
        %s573 = smul.addr %s572, 128
        %s574 = scalar_lea.vmem [#allocation3], %s573
        // Predicated region
        $region74: #{gpt_forward_fused.3} parent=68 // pred_check
          %p575 = pneg %p127
        $region75: #{gpt_forward_fused.3} parent=68 // pred_check_branch
          %577 = sbr.rel (%p575) target = $region77
        $region76: #{gpt_forward_fused.3} parent=68 // pred_region
          %s578 = smul.u32 16, %s21
          %s580 = ssub.s32 2048, 2048
          %581 = vsyncadd %s571, %s580
          %s582 = smul.addr %s578, 2
          %s583 = sadd.s32 %s22, %s582
          %s584 = smul.addr %s583, 128
          %s585 = scalar_lea.hbm %s3, %s584
          %s586 = sshll.u32 %s574, 4
          %s587 = int_to_ptr.vmem [resolvable:$true] %s586
          %592 = dma.vmem_to_hbm [thread:$0]  %s587, 2048, %s585, %s571, 128, 256, 8
        $region77: #{gpt_forward_fused.3} parent=68 // pred_fallthru
          _
      $region69: #{gpt_forward_fused.3} parent=5 // pred_fallthru
        _
      %p593 = scmp.le.s32.totalorder 2, %s12
      // Predicated region
      $region78: #{gpt_forward_fused.3} parent=5 // pred_check
        %p594 = pneg %p593
      $region79: #{gpt_forward_fused.3} parent=5 // pred_check_branch
        %596 = sbr.rel (%p594) target = $region81
      $region80: #{gpt_forward_fused.3} parent=5 // pred_region
        %s597 = ssub.s32 %s12, 2
        // Predicated region
        $region82: #{gpt_forward_fused.3} parent=80 // pred_check
          %p598 = pneg %p133
        $region83: #{gpt_forward_fused.3} parent=80 // pred_check_branch
          %600 = sbr.rel (%p598) target = $region85
        $region84: #{gpt_forward_fused.3} parent=80 // pred_region
          %s601 = sand.u32 %s118, 1
          %s602 = scalar_lea.sflag [#allocation4], %s601
          %s603 = sand.u32 %s118, 1
          %s604 = smul.addr %s603, 128
          %s605 = scalar_lea.vmem [#allocation3], %s604
          %606 = dma.done %s602, 2048
        $region85: #{gpt_forward_fused.3} parent=80 // pred_fallthru
          _
      $region81: #{gpt_forward_fused.3} parent=5 // pred_fallthru
        _
    $region6: #{gpt_forward_fused.3} parent=1 // loop_footer
      %s16 = sadd.s32 1, %s12
    $region7: #{gpt_forward_fused.3} parent=1 // loop_footer_branch
      %11 = sbr.rel target = $region3
    $region8: #{gpt_forward_fused.3} parent=1 // loop_exit
      _
    %607 = vsyncpa [#allocation4], 1
    %s608 = scalar_lea.sflag [#allocation4], 1
    %609 = vsyncpa %s608, 1

// kernel: gpt_forward_fused.2
$region0: #{gpt_forward_fused.2}
  #allocation0 [shape = 'u32[]', space=smem, size = 0x4, offset = 0x4, fixed_abs, tag = 'smem constant byte address 0x4 - core index']
  #allocation1 [shape = 'u32[144,128]{1,0:T(1,128)}', space=vmem, size = 0x12000, scoped, tag = 'internal scratch']
  #allocation2 [shape = 'f32[128,128]{1,0:T(8,128)}', space=vmem, size = 0x10000, scoped, tag = 'scratch operand']
  %s0 = inlined_call_operand.vmem [shape: f32[256,128], index: 0, kind: input, shape index: {}]
  %s1 = inlined_call_operand.hbm [shape: bf16[8,128,384], index: 1, kind: input, shape index: {}]
  %s2 = inlined_call_operand.vmem [shape: bf16[8,128,128], index: 2, kind: input, shape index: {}]
  %s3 = inlined_call_operand.vmem [shape: bf16[8,128,512], index: 3, kind: input, shape index: {}]
  %s4 = inlined_call_operand.hbm [shape: bf16[8,512,128], index: 4, kind: input, shape index: {}]
  %s5 = inlined_call_operand.vmem [shape: f32[8,8,512], index: 5, kind: input, shape index: {}]
  %s6 = inlined_call_operand.vmem [shape: f32[1,128], index: 6, kind: input, shape index: {}]
  %s7 = inlined_call_operand.vmem [shape: f32[1,128], index: 7, kind: input, shape index: {}]
  %s8 = inlined_call_operand.vmem [shape: bf16[256,128], index: 8, kind: output, shape index: {}]
  %s9 = sld [smem:[#allocation0]]
  $region81: #{gpt_forward_fused.2} parent=0
    _
  %s11 = ssub.s32 1, %s9
  %s12 = scalar_select 0, %s11, %s9
  $region1: #{gpt_forward_fused.2} parent=0
    #allocation3 [shape = 'u8[196608]{0}', space=vmem, size = 0x30000, scoped, tag = 'input window, operand 1']
    #allocation4 [shape = 's32[2]{0}', space=sflag, size = 0x8, scoped, tag = 'scoped memory for gpt_forward_fused.2']
    #allocation5 [shape = 'u8[262144]{0}', space=vmem, size = 0x40000, scoped, tag = 'input window, operand 4']
    #allocation6 [shape = 's32[2]{0}', space=sflag, size = 0x8, scoped, tag = 'scoped memory for gpt_forward_fused.2']
    %13 = vsyncpa [#allocation4], 0
    %s14 = scalar_lea.sflag [#allocation4], 1
    %15 = vsyncpa %s14, 0
    %16 = vsyncpa [#allocation6], 0
    %s17 = scalar_lea.sflag [#allocation6], 1
    %18 = vsyncpa %s17, 0
    loop: start=0, step=1, limit=18
    $region2: #{gpt_forward_fused.2} parent=1 // loop_pre_header
      _
    $region3: #{gpt_forward_fused.2} parent=1 // loop_header
      %s20 = sphi 0, %s24
      %p21 = scmp.ge.s32.totalorder %s20, 18
      %s27 = sphi 0, %s39
      %s28 = sphi 0, %s35
      %s29 = sphi 0, %s27
      %s30 = sphi 0, %s28
      %s31 = sphi 0, %s29
      %s32 = sphi 0, %s30
      %s42 = sphi 0, %s44
      %s45 = sphi 0, %s42
      %s46 = sphi 0, %s45
      %s62 = sphi 0, %s46
      %s68 = sphi 0, %s70
      %s71 = sphi 0, %s68
      %s72 = sphi 0, %s71
      %s88 = sphi 0, %s72
      %s94 = sphi 0, %s96
      %s97 = sphi 0, %s94
      %s98 = sphi 0, %s97
      %s114 = sphi 0, %s98
      %s120 = sphi 0, %s122
      %s123 = sphi 0, %s120
      %s124 = sphi 0, %s123
      %s140 = sphi 0, %s124
      %s146 = sphi 0, %s148
      %s149 = sphi 0, %s146
      %s150 = sphi 0, %s149
      %s166 = sphi 0, %s150
      %s172 = sphi 0, %s174
      %s175 = sphi 0, %s172
      %s176 = sphi 0, %s175
      %s192 = sphi 0, %s176
      %s196 = sphi 0, %s196
      %s198 = sphi 0, %s196
      %s199 = sphi 0, %s198
      %s213 = sphi 0, %s199
      %s217 = sphi 0, %s217
      %s219 = sphi 0, %s217
      %s220 = sphi 0, %s219
      %s234 = sphi 0, %s220
      %s240 = sphi 0, %s242
      %s243 = sphi 0, %s240
      %s244 = sphi 0, %s243
      %s260 = sphi 0, %s244
    $region4: #{gpt_forward_fused.2} parent=1 // loop_header_branch
      %23 = sbr.rel (%p21) target = $region8
    $region5: #{gpt_forward_fused.2} parent=1 // loop_body
      %s25 = ssub.s32 %s20, 1
      %s26 = ssub.s32 %s20, 2
      %s33 = sadd.s32 1, %s28
      %p34 = scmp.ge.s32.totalorder %s33, 8
      %s35 = scalar_select %p34, 0, %s33
      %s36 = sadd.s32 1, %s27
      %s37 = scalar_select %p34, %s36, %s27
      %p38 = scmp.ge.s32.totalorder %s37, 2
      %s39 = scalar_select %p38, 0, %s37
      %s40 = ssub.s32 %s27, %s39
      %p41 = scmp.eq.s32.totalorder %s40, 0
      %s43 = sadd.s32 %s42, 1
      %s44 = scalar_select %p41, %s42, %s43
      %p47 = pneg %p41
      %p48 = scmp.eq.s32.totalorder %s20, 15
      %p49 = por %p47, %p48
      %p50 = scmp.ne.s32.totalorder %s42, %s45
      %p51 = scmp.eq.s32.totalorder %s20, 0
      %p52 = por %p50, %p51
      %p53 = scmp.ne.s32.totalorder %s42, %s45
      %p54 = scmp.eq.s32.totalorder %s25, 15
      %p55 = por %p53, %p54
      %p56 = scmp.ne.s32.totalorder %s45, %s46
      %p57 = scmp.eq.s32.totalorder %s25, 0
      %p58 = por %p56, %p57
      %p59 = scmp.ne.s32.totalorder %s45, %s46
      %p60 = scmp.eq.s32.totalorder %s26, 15
      %p61 = por %p59, %p60
      %p63 = scmp.ne.s32.totalorder %s46, %s62
      %p64 = scmp.eq.s32.totalorder %s26, 0
      %p65 = por %p63, %p64
      %s66 = ssub.s32 %s28, %s35
      %p67 = scmp.eq.s32.totalorder %s66, 0
      %s69 = sadd.s32 %s68, 1
      %s70 = scalar_select %p67, %s68, %s69
      %p73 = pneg %p67
      %p74 = scmp.eq.s32.totalorder %s20, 15
      %p75 = por %p73, %p74
      %p76 = scmp.ne.s32.totalorder %s68, %s71
      %p77 = scmp.eq.s32.totalorder %s20, 0
      %p78 = por %p76, %p77
      %p79 = scmp.ne.s32.totalorder %s68, %s71
      %p80 = scmp.eq.s32.totalorder %s25, 15
      %p81 = por %p79, %p80
      %p82 = scmp.ne.s32.totalorder %s71, %s72
      %p83 = scmp.eq.s32.totalorder %s25, 0
      %p84 = por %p82, %p83
      %p85 = scmp.ne.s32.totalorder %s71, %s72
      %p86 = scmp.eq.s32.totalorder %s26, 15
      %p87 = por %p85, %p86
      %p89 = scmp.ne.s32.totalorder %s72, %s88
      %p90 = scmp.eq.s32.totalorder %s26, 0
      %p91 = por %p89, %p90
      %s92 = ssub.s32 %s28, %s35
      %p93 = scmp.eq.s32.totalorder %s92, 0
      %s95 = sadd.s32 %s94, 1
      %s96 = scalar_select %p93, %s94, %s95
      %p99 = pneg %p93
      %p100 = scmp.eq.s32.totalorder %s20, 15
      %p101 = por %p99, %p100
      %p102 = scmp.ne.s32.totalorder %s94, %s97
      %p103 = scmp.eq.s32.totalorder %s20, 0
      %p104 = por %p102, %p103
      %p105 = scmp.ne.s32.totalorder %s94, %s97
      %p106 = scmp.eq.s32.totalorder %s25, 15
      %p107 = por %p105, %p106
      %p108 = scmp.ne.s32.totalorder %s97, %s98
      %p109 = scmp.eq.s32.totalorder %s25, 0
      %p110 = por %p108, %p109
      %p111 = scmp.ne.s32.totalorder %s97, %s98
      %p112 = scmp.eq.s32.totalorder %s26, 15
      %p113 = por %p111, %p112
      %p115 = scmp.ne.s32.totalorder %s98, %s114
      %p116 = scmp.eq.s32.totalorder %s26, 0
      %p117 = por %p115, %p116
      %s118 = ssub.s32 %s28, %s35
      %p119 = scmp.eq.s32.totalorder %s118, 0
      %s121 = sadd.s32 %s120, 1
      %s122 = scalar_select %p119, %s120, %s121
      %p125 = pneg %p119
      %p126 = scmp.eq.s32.totalorder %s20, 15
      %p127 = por %p125, %p126
      %p128 = scmp.ne.s32.totalorder %s120, %s123
      %p129 = scmp.eq.s32.totalorder %s20, 0
      %p130 = por %p128, %p129
      %p131 = scmp.ne.s32.totalorder %s120, %s123
      %p132 = scmp.eq.s32.totalorder %s25, 15
      %p133 = por %p131, %p132
      %p134 = scmp.ne.s32.totalorder %s123, %s124
      %p135 = scmp.eq.s32.totalorder %s25, 0
      %p136 = por %p134, %p135
      %p137 = scmp.ne.s32.totalorder %s123, %s124
      %p138 = scmp.eq.s32.totalorder %s26, 15
      %p139 = por %p137, %p138
      %p141 = scmp.ne.s32.totalorder %s124, %s140
      %p142 = scmp.eq.s32.totalorder %s26, 0
      %p143 = por %p141, %p142
      %s144 = ssub.s32 %s28, %s35
      %p145 = scmp.eq.s32.totalorder %s144, 0
      %s147 = sadd.s32 %s146, 1
      %s148 = scalar_select %p145, %s146, %s147
      %p151 = pneg %p145
      %p152 = scmp.eq.s32.totalorder %s20, 15
      %p153 = por %p151, %p152
      %p154 = scmp.ne.s32.totalorder %s146, %s149
      %p155 = scmp.eq.s32.totalorder %s20, 0
      %p156 = por %p154, %p155
      %p157 = scmp.ne.s32.totalorder %s146, %s149
      %p158 = scmp.eq.s32.totalorder %s25, 15
      %p159 = por %p157, %p158
      %p160 = scmp.ne.s32.totalorder %s149, %s150
      %p161 = scmp.eq.s32.totalorder %s25, 0
      %p162 = por %p160, %p161
      %p163 = scmp.ne.s32.totalorder %s149, %s150
      %p164 = scmp.eq.s32.totalorder %s26, 15
      %p165 = por %p163, %p164
      %p167 = scmp.ne.s32.totalorder %s150, %s166
      %p168 = scmp.eq.s32.totalorder %s26, 0
      %p169 = por %p167, %p168
      %s170 = ssub.s32 %s28, %s35
      %p171 = scmp.eq.s32.totalorder %s170, 0
      %s173 = sadd.s32 %s172, 1
      %s174 = scalar_select %p171, %s172, %s173
      %p177 = pneg %p171
      %p178 = scmp.eq.s32.totalorder %s20, 15
      %p179 = por %p177, %p178
      %p180 = scmp.ne.s32.totalorder %s172, %s175
      %p181 = scmp.eq.s32.totalorder %s20, 0
      %p182 = por %p180, %p181
      %p183 = scmp.ne.s32.totalorder %s172, %s175
      %p184 = scmp.eq.s32.totalorder %s25, 15
      %p185 = por %p183, %p184
      %p186 = scmp.ne.s32.totalorder %s175, %s176
      %p187 = scmp.eq.s32.totalorder %s25, 0
      %p188 = por %p186, %p187
      %p189 = scmp.ne.s32.totalorder %s175, %s176
      %p190 = scmp.eq.s32.totalorder %s26, 15
      %p191 = por %p189, %p190
      %p193 = scmp.ne.s32.totalorder %s176, %s192
      %p194 = scmp.eq.s32.totalorder %s26, 0
      %p195 = por %p193, %p194
      %s197 = sadd.s32 %s196, 1
      %p200 = scmp.eq.s32.totalorder %s20, 15
      %p201 = scmp.ne.s32.totalorder %s196, %s198
      %p202 = scmp.eq.s32.totalorder %s20, 0
      %p203 = por %p201, %p202
      %p204 = scmp.ne.s32.totalorder %s196, %s198
      %p205 = scmp.eq.s32.totalorder %s25, 15
      %p206 = por %p204, %p205
      %p207 = scmp.ne.s32.totalorder %s198, %s199
      %p208 = scmp.eq.s32.totalorder %s25, 0
      %p209 = por %p207, %p208
      %p210 = scmp.ne.s32.totalorder %s198, %s199
      %p211 = scmp.eq.s32.totalorder %s26, 15
      %p212 = por %p210, %p211
      %p214 = scmp.ne.s32.totalorder %s199, %s213
      %p215 = scmp.eq.s32.totalorder %s26, 0
      %p216 = por %p214, %p215
      %s218 = sadd.s32 %s217, 1
      %p221 = scmp.eq.s32.totalorder %s20, 15
      %p222 = scmp.ne.s32.totalorder %s217, %s219
      %p223 = scmp.eq.s32.totalorder %s20, 0
      %p224 = por %p222, %p223
      %p225 = scmp.ne.s32.totalorder %s217, %s219
      %p226 = scmp.eq.s32.totalorder %s25, 15
      %p227 = por %p225, %p226
      %p228 = scmp.ne.s32.totalorder %s219, %s220
      %p229 = scmp.eq.s32.totalorder %s25, 0
      %p230 = por %p228, %p229
      %p231 = scmp.ne.s32.totalorder %s219, %s220
      %p232 = scmp.eq.s32.totalorder %s26, 15
      %p233 = por %p231, %p232
      %p235 = scmp.ne.s32.totalorder %s220, %s234
      %p236 = scmp.eq.s32.totalorder %s26, 0
      %p237 = por %p235, %p236
      %s238 = ssub.s32 %s27, %s39
      %p239 = scmp.eq.s32.totalorder %s238, 0
      %s241 = sadd.s32 %s240, 1
      %s242 = scalar_select %p239, %s240, %s241
      %p245 = pneg %p239
      %p246 = scmp.eq.s32.totalorder %s20, 15
      %p247 = por %p245, %p246
      %p248 = scmp.ne.s32.totalorder %s240, %s243
      %p249 = scmp.eq.s32.totalorder %s20, 0
      %p250 = por %p248, %p249
      %p251 = scmp.ne.s32.totalorder %s240, %s243
      %p252 = scmp.eq.s32.totalorder %s25, 15
      %p253 = por %p251, %p252
      %p254 = scmp.ne.s32.totalorder %s243, %s244
      %p255 = scmp.eq.s32.totalorder %s25, 0
      %p256 = por %p254, %p255
      %p257 = scmp.ne.s32.totalorder %s243, %s244
      %p258 = scmp.eq.s32.totalorder %s26, 15
      %p259 = por %p257, %p258
      %p261 = scmp.ne.s32.totalorder %s244, %s260
      %p262 = scmp.eq.s32.totalorder %s26, 0
      %p263 = por %p261, %p262
      %p264 = scmp.le.s32.totalorder 1, %s20
      %p265 = scmp.lt.s32.totalorder %s20, 17
      %p266 = pnand %p264, %p265
      %p267 = pneg %p266
      // Predicated region
      $region9: #{gpt_forward_fused.2} parent=5 // pred_check
        _
      $region10: #{gpt_forward_fused.2} parent=5 // pred_check_branch
        %269 = sbr.rel (%p266) target = $region12
      $region11: #{gpt_forward_fused.2} parent=5 // pred_region
        %s270 = ssub.s32 %s20, 1
        // Predicated region
        $region13: #{gpt_forward_fused.2} parent=11 // pred_check
          %p271 = pneg %p209
        $region14: #{gpt_forward_fused.2} parent=11 // pred_check_branch
          %273 = sbr.rel (%p271) target = $region16
        $region15: #{gpt_forward_fused.2} parent=11 // pred_region
          _
        $region16: #{gpt_forward_fused.2} parent=11 // pred_fallthru
          _
        // Predicated region
        $region17: #{gpt_forward_fused.2} parent=11 // pred_check
          %p274 = pneg %p230
        $region18: #{gpt_forward_fused.2} parent=11 // pred_check_branch
          %276 = sbr.rel (%p274) target = $region20
        $region19: #{gpt_forward_fused.2} parent=11 // pred_region
          _
        $region20: #{gpt_forward_fused.2} parent=11 // pred_fallthru
          _
      $region12: #{gpt_forward_fused.2} parent=5 // pred_fallthru
        _
      %p277 = scmp.lt.s32.totalorder %s20, 16
      // Predicated region
      $region21: #{gpt_forward_fused.2} parent=5 // pred_check
        %p278 = pneg %p277
      $region22: #{gpt_forward_fused.2} parent=5 // pred_check_branch
        %280 = sbr.rel (%p278) target = $region24
      $region23: #{gpt_forward_fused.2} parent=5 // pred_region
        // Predicated region
        $region25: #{gpt_forward_fused.2} parent=23 // pred_check
          %p281 = pneg %p52
        $region26: #{gpt_forward_fused.2} parent=23 // pred_check_branch
          %283 = sbr.rel (%p281) target = $region28
        $region27: #{gpt_forward_fused.2} parent=23 // pred_region
          %s284 = smul.u32 16, %s27
          %p285 = scmp.lt.s32.totalorder %s284, 31
          %s286 = scalar_select %p285, %s284, 31
          %s287 = smul.addr %s286, 8
          %s288 = scalar_lea.vmem %s0, %s287
          %s289 = smul.u32 16, %s27
        $region28: #{gpt_forward_fused.2} parent=23 // pred_fallthru
          _
        // Predicated region
        $region29: #{gpt_forward_fused.2} parent=23 // pred_check
          %p290 = pneg %p78
        $region30: #{gpt_forward_fused.2} parent=23 // pred_check_branch
          %292 = sbr.rel (%p290) target = $region32
        $region31: #{gpt_forward_fused.2} parent=23 // pred_region
          %s293 = sand.u32 %s68, 1
          %s294 = scalar_lea.sflag [#allocation4], %s293
          %s295 = sand.u32 %s68, 1
          %s296 = smul.addr %s295, 192
          %s297 = scalar_lea.vmem [#allocation3], %s296
          %s299 = ssub.s32 3072, 3072
          %300 = vsyncadd %s294, %s299
          %s301 = smul.addr %s28, 48
          %s302 = smul.addr %s301, 64
          %s303 = scalar_lea.hbm %s1, %s302
          %s304 = sshll.u32 %s297, 4
          %s305 = int_to_ptr.vmem [resolvable:$true] %s304
          %310 = dma.hbm_to_vmem [thread:$0]  %s303, 3072, %s305, %s294, 192, 192, 12
        $region32: #{gpt_forward_fused.2} parent=23 // pred_fallthru
          _
        // Predicated region
        $region33: #{gpt_forward_fused.2} parent=23 // pred_check
          %p311 = pneg %p104
        $region34: #{gpt_forward_fused.2} parent=23 // pred_check_branch
          %313 = sbr.rel (%p311) target = $region36
        $region35: #{gpt_forward_fused.2} parent=23 // pred_region
          %p314 = scmp.lt.s32.totalorder %s28, 7
          %s315 = scalar_select %p314, %s28, 7
          %s316 = smul.addr %s315, 16
          %s317 = smul.addr %s316, 4
          %s318 = scalar_lea.vmem %s2, %s317
        $region36: #{gpt_forward_fused.2} parent=23 // pred_fallthru
          _
        // Predicated region
        $region37: #{gpt_forward_fused.2} parent=23 // pred_check
          %p319 = pneg %p130
        $region38: #{gpt_forward_fused.2} parent=23 // pred_check_branch
          %321 = sbr.rel (%p319) target = $region40
        $region39: #{gpt_forward_fused.2} parent=23 // pred_region
          %p322 = scmp.lt.s32.totalorder %s28, 7
          %s323 = scalar_select %p322, %s28, 7
          %s324 = smul.addr %s323, 64
          %s325 = smul.addr %s324, 4
          %s326 = scalar_lea.vmem %s3, %s325
        $region40: #{gpt_forward_fused.2} parent=23 // pred_fallthru
          _
        // Predicated region
        $region41: #{gpt_forward_fused.2} parent=23 // pred_check
          %p327 = pneg %p156
        $region42: #{gpt_forward_fused.2} parent=23 // pred_check_branch
          %329 = sbr.rel (%p327) target = $region44
        $region43: #{gpt_forward_fused.2} parent=23 // pred_region
          %s330 = sand.u32 %s146, 1
          %s331 = scalar_lea.sflag [#allocation6], %s330
          %s332 = sand.u32 %s146, 1
          %s333 = smul.addr %s332, 256
          %s334 = scalar_lea.vmem [#allocation5], %s333
          %s336 = ssub.s32 4096, 4096
          %337 = vsyncadd %s331, %s336
          %s338 = smul.addr %s28, 64
          %s339 = smul.addr %s338, 64
          %s340 = scalar_lea.hbm %s4, %s339
          %s341 = sshll.u32 %s334, 4
          %s342 = int_to_ptr.vmem [resolvable:$true] %s341
          %347 = dma.hbm_to_vmem [thread:$0]  %s340, 4096, %s342, %s331, 64, 64, 4
        $region44: #{gpt_forward_fused.2} parent=23 // pred_fallthru
          _
        // Predicated region
        $region45: #{gpt_forward_fused.2} parent=23 // pred_check
          %p348 = pneg %p182
        $region46: #{gpt_forward_fused.2} parent=23 // pred_check_branch
          %350 = sbr.rel (%p348) target = $region48
        $region47: #{gpt_forward_fused.2} parent=23 // pred_region
          %p351 = scmp.lt.s32.totalorder %s28, 7
          %s352 = scalar_select %p351, %s28, 7
          %s353 = smul.addr %s352, 4
          %s354 = smul.addr %s353, 8
          %s355 = scalar_lea.vmem %s5, %s354
        $region48: #{gpt_forward_fused.2} parent=23 // pred_fallthru
          _
      $region24: #{gpt_forward_fused.2} parent=5 // pred_fallthru
        _
      %p356 = scmp.le.s32.totalorder 1, %s20
      %p357 = scmp.lt.s32.totalorder %s20, 17
      %p358 = pnand %p356, %p357
      %p359 = pneg %p358
      // Predicated region
      $region49: #{gpt_forward_fused.2} parent=5 // pred_check
        _
      $region50: #{gpt_forward_fused.2} parent=5 // pred_check_branch
        %361 = sbr.rel (%p358) target = $region52
      $region51: #{gpt_forward_fused.2} parent=5 // pred_region
        %s362 = ssub.s32 %s20, 1
        %s363 = sand.u32 %s71, 1
        %s364 = scalar_lea.sflag [#allocation4], %s363
        %s365 = sand.u32 %s71, 1
        %s366 = smul.addr %s365, 192
        %s367 = scalar_lea.vmem [#allocation3], %s366
        // Predicated region
        $region53: #{gpt_forward_fused.2} parent=51 // pred_check
          %p368 = pneg %p84
        $region54: #{gpt_forward_fused.2} parent=51 // pred_check_branch
          %370 = sbr.rel (%p368) target = $region56
        $region55: #{gpt_forward_fused.2} parent=51 // pred_region
          %371 = dma.done %s364, 3072
        $region56: #{gpt_forward_fused.2} parent=51 // pred_fallthru
          _
        %s372 = sand.u32 %s149, 1
        %s373 = scalar_lea.sflag [#allocation6], %s372
        %s374 = sand.u32 %s149, 1
        %s375 = smul.addr %s374, 256
        %s376 = scalar_lea.vmem [#allocation5], %s375
        // Predicated region
        $region57: #{gpt_forward_fused.2} parent=51 // pred_check
          %p377 = pneg %p162
        $region58: #{gpt_forward_fused.2} parent=51 // pred_check_branch
          %379 = sbr.rel (%p377) target = $region60
        $region59: #{gpt_forward_fused.2} parent=51 // pred_region
          %380 = dma.done %s373, 4096
        $region60: #{gpt_forward_fused.2} parent=51 // pred_fallthru
          _
        %s381 = smul.u32 16, %s29
        %p382 = scmp.lt.s32.totalorder %s381, 31
        %s383 = scalar_select %p382, %s381, 31
        %s384 = smul.addr %s383, 8
        %s385 = scalar_lea.vmem %s0, %s384
        %p386 = pneg %p58
        %p387 = pneg %p55
        %s388 = sand.u32 %s71, 1
        %s389 = scalar_lea.sflag [#allocation4], %s388
        %s390 = sand.u32 %s71, 1
        %s391 = smul.addr %s390, 192
        %s392 = scalar_lea.vmem [#allocation3], %s391
        %p393 = pneg %p84
        %p394 = pneg %p81
        %p395 = scmp.lt.s32.totalorder %s30, 7
        %s396 = scalar_select %p395, %s30, 7
        %s397 = smul.addr %s396, 16
        %s398 = smul.addr %s397, 4
        %s399 = scalar_lea.vmem %s2, %s398
        %p400 = pneg %p110
        %p401 = pneg %p107
        %p402 = scmp.lt.s32.totalorder %s30, 7
        %s403 = scalar_select %p402, %s30, 7
        %s404 = smul.addr %s403, 64
        %s405 = smul.addr %s404, 4
        %s406 = scalar_lea.vmem %s3, %s405
        %p407 = pneg %p136
        %p408 = pneg %p133
        %s409 = sand.u32 %s149, 1
        %s410 = scalar_lea.sflag [#allocation6], %s409
        %s411 = sand.u32 %s149, 1
        %s412 = smul.addr %s411, 256
        %s413 = scalar_lea.vmem [#allocation5], %s412
        %p414 = pneg %p162
        %p415 = pneg %p159
        %p416 = scmp.lt.s32.totalorder %s30, 7
        %s417 = scalar_select %p416, %s30, 7
        %s418 = smul.addr %s417, 4
        %s419 = smul.addr %s418, 8
        %s420 = scalar_lea.vmem %s5, %s419
        %p421 = pneg %p188
        %p422 = pneg %p185
        %p423 = pneg %p209
        %p424 = pneg %p206
        %p425 = pneg %p230
        %p426 = pneg %p227
        %p427 = pneg %p256
        %p428 = pneg %p253
        %s429 = smul.u32 16, %s29
        %p430 = scmp.lt.s32.totalorder %s429, 31
        %s431 = scalar_select %p430, %s429, 31
        %s432 = smul.addr %s431, 4
        %s433 = scalar_lea.vmem %s8, %s432
        %s434 = smul.u32 16, %s29
        %p435 = scmp.lt.s32.totalorder %s434, 31
        %s436 = scalar_select %p435, %s434, 31
        %s437 = smul.addr %s436, 8
        %s438 = scalar_lea.vmem %s0, %s437
        %s439 = smul.u32 16, %s29
        %p440 = scmp.lt.s32.totalorder %s30, 7
        %s441 = scalar_select %p440, %s30, 7
        %s442 = smul.addr %s441, 16
        %s443 = smul.addr %s442, 4
        %s444 = scalar_lea.vmem %s2, %s443
        %p445 = scmp.lt.s32.totalorder %s30, 7
        %s446 = scalar_select %p445, %s30, 7
        %s447 = smul.addr %s446, 64
        %s448 = smul.addr %s447, 4
        %s449 = scalar_lea.vmem %s3, %s448
        %p450 = scmp.lt.s32.totalorder %s30, 7
        %s451 = scalar_select %p450, %s30, 7
        %s452 = smul.addr %s451, 4
        %s453 = smul.addr %s452, 8
        %s454 = scalar_lea.vmem %s5, %s453
        %s455 = smul.u32 16, %s29
        %p456 = scmp.lt.s32.totalorder %s455, 31
        %s457 = scalar_select %p456, %s455, 31
        %s458 = smul.addr %s457, 4
        %s459 = scalar_lea.vmem %s8, %s458
        %s460 = smul.u32 16, %s29
        %p462 = scmp.eq.s32.totalorder %s30, 0
        // Predicated region
        $region61: #{gpt_forward_fused.2} parent=51 // pred_check
          %p463 = pneg %p462
        $region62: #{gpt_forward_fused.2} parent=51 // pred_check_branch
          %465 = sbr.rel (%p463) target = $region64
        $region63: #{gpt_forward_fused.2} parent=51 // pred_region
          %v466 = vld [vmem:[%s438] sm:$0xff]
          %v467 = vld [vmem:[%s438 + $0x8] sm:$0xff]
          %v468 = vld [vmem:[%s438 + $0x10] sm:$0xff]
          %v469 = vld [vmem:[%s438 + $0x18] sm:$0xff]
          %v470 = vld [vmem:[%s438 + $0x20] sm:$0xff]
          %v471 = vld [vmem:[%s438 + $0x28] sm:$0xff]
          %v472 = vld [vmem:[%s438 + $0x30] sm:$0xff]
          %v473 = vld [vmem:[%s438 + $0x38] sm:$0xff]
          %v474 = vld [vmem:[%s438 + $0x40] sm:$0xff]
          %v475 = vld [vmem:[%s438 + $0x48] sm:$0xff]
          %v476 = vld [vmem:[%s438 + $0x50] sm:$0xff]
          %v477 = vld [vmem:[%s438 + $0x58] sm:$0xff]
          %v478 = vld [vmem:[%s438 + $0x60] sm:$0xff]
          %v479 = vld [vmem:[%s438 + $0x68] sm:$0xff]
          %v480 = vld [vmem:[%s438 + $0x70] sm:$0xff]
          %v481 = vld [vmem:[%s438 + $0x78] sm:$0xff]
          %482 = vst [vmem:[#allocation2] sm:$0xff] %v466
          %483 = vst [vmem:[#allocation2 + $0x8] sm:$0xff] %v467
          %484 = vst [vmem:[#allocation2 + $0x10] sm:$0xff] %v468
          %485 = vst [vmem:[#allocation2 + $0x18] sm:$0xff] %v469
          %486 = vst [vmem:[#allocation2 + $0x20] sm:$0xff] %v470
          %487 = vst [vmem:[#allocation2 + $0x28] sm:$0xff] %v471
          %488 = vst [vmem:[#allocation2 + $0x30] sm:$0xff] %v472
          %489 = vst [vmem:[#allocation2 + $0x38] sm:$0xff] %v473
          %490 = vst [vmem:[#allocation2 + $0x40] sm:$0xff] %v474
          %491 = vst [vmem:[#allocation2 + $0x48] sm:$0xff] %v475
          %492 = vst [vmem:[#allocation2 + $0x50] sm:$0xff] %v476
          %493 = vst [vmem:[#allocation2 + $0x58] sm:$0xff] %v477
          %494 = vst [vmem:[#allocation2 + $0x60] sm:$0xff] %v478
          %495 = vst [vmem:[#allocation2 + $0x68] sm:$0xff] %v479
          %496 = vst [vmem:[#allocation2 + $0x70] sm:$0xff] %v480
          %497 = vst [vmem:[#allocation2 + $0x78] sm:$0xff] %v481
        $region64: #{gpt_forward_fused.2} parent=51 // pred_fallthru
          _
        %v498 = vld [vmem:[#allocation2] sm:$0xff]
        %v499 = vld [vmem:[#allocation2 + $0x8] sm:$0xff]
        %v500 = vld [vmem:[#allocation2 + $0x10] sm:$0xff]
        %v501 = vld [vmem:[#allocation2 + $0x18] sm:$0xff]
        %v502 = vld [vmem:[#allocation2 + $0x20] sm:$0xff]
        %v503 = vld [vmem:[#allocation2 + $0x28] sm:$0xff]
        %v504 = vld [vmem:[#allocation2 + $0x30] sm:$0xff]
        %v505 = vld [vmem:[#allocation2 + $0x38] sm:$0xff]
        %v506 = vld [vmem:[#allocation2 + $0x40] sm:$0xff]
        %v507 = vld [vmem:[#allocation2 + $0x48] sm:$0xff]
        %v508 = vld [vmem:[#allocation2 + $0x50] sm:$0xff]
        %v509 = vld [vmem:[#allocation2 + $0x58] sm:$0xff]
        %v510 = vld [vmem:[#allocation2 + $0x60] sm:$0xff]
        %v511 = vld [vmem:[#allocation2 + $0x68] sm:$0xff]
        %v512 = vld [vmem:[#allocation2 + $0x70] sm:$0xff]
        %v513 = vld [vmem:[#allocation2 + $0x78] sm:$0xff]
        %v514 = vld [vmem:[%s454] sm:$0xff]
        %v515 = vld [vmem:[%s454 + $0x8] sm:$0xff]
        %v516 = vld [vmem:[%s454 + $0x10] sm:$0xff]
        %v517 = vld [vmem:[%s454 + $0x18] sm:$0xff]
        %518 = vadd.xlane.f32.xlu0 %v498
        %v519 = vpop.xlane.xlu0 %518
        %520 = vadd.xlane.f32.xlu0 %v499
        %v521 = vpop.xlane.xlu0 %520
        %522 = vadd.xlane.f32.xlu0 %v500
        %v523 = vpop.xlane.xlu0 %522
        %524 = vadd.xlane.f32.xlu0 %v501
        %v525 = vpop.xlane.xlu0 %524
        %526 = vadd.xlane.f32.xlu0 %v502
        %v527 = vpop.xlane.xlu0 %526
        %528 = vadd.xlane.f32.xlu0 %v503
        %v529 = vpop.xlane.xlu0 %528
        %530 = vadd.xlane.f32.xlu0 %v504
        %v531 = vpop.xlane.xlu0 %530
        %532 = vadd.xlane.f32.xlu0 %v505
        %v533 = vpop.xlane.xlu0 %532
        %534 = vadd.xlane.f32.xlu0 %v506
        %v535 = vpop.xlane.xlu0 %534
        %536 = vadd.xlane.f32.xlu0 %v507
        %v537 = vpop.xlane.xlu0 %536
        %538 = vadd.xlane.f32.xlu0 %v508
        %v539 = vpop.xlane.xlu0 %538
        %540 = vadd.xlane.f32.xlu0 %v509
        %v541 = vpop.xlane.xlu0 %540
        %542 = vadd.xlane.f32.xlu0 %v510
        %v543 = vpop.xlane.xlu0 %542
        %544 = vadd.xlane.f32.xlu0 %v511
        %v545 = vpop.xlane.xlu0 %544
        %546 = vadd.xlane.f32.xlu0 %v512
        %v547 = vpop.xlane.xlu0 %546
        %548 = vadd.xlane.f32.xlu0 %v513
        %v549 = vpop.xlane.xlu0 %548
        %v550 = vmul.f32 %v498, %v498
        %v551 = vmul.f32 %v499, %v499
        %v552 = vmul.f32 %v500, %v500
        %v553 = vmul.f32 %v501, %v501
        %v554 = vmul.f32 %v502, %v502
        %v555 = vmul.f32 %v503, %v503
        %v556 = vmul.f32 %v504, %v504
        %v557 = vmul.f32 %v505, %v505
        %v558 = vmul.f32 %v506, %v506
        %v559 = vmul.f32 %v507, %v507
        %v560 = vmul.f32 %v508, %v508
        %v561 = vmul.f32 %v509, %v509
        %v562 = vmul.f32 %v510, %v510
        %v563 = vmul.f32 %v511, %v511
        %v564 = vmul.f32 %v512, %v512
        %v565 = vmul.f32 %v513, %v513
        %566 = vadd.xlane.f32.xlu0 %v550
        %v567 = vpop.xlane.xlu0 %566
        %568 = vadd.xlane.f32.xlu0 %v551
        %v569 = vpop.xlane.xlu0 %568
        %570 = vadd.xlane.f32.xlu0 %v552
        %v571 = vpop.xlane.xlu0 %570
        %572 = vadd.xlane.f32.xlu0 %v553
        %v573 = vpop.xlane.xlu0 %572
        %574 = vadd.xlane.f32.xlu0 %v554
        %v575 = vpop.xlane.xlu0 %574
        %576 = vadd.xlane.f32.xlu0 %v555
        %v577 = vpop.xlane.xlu0 %576
        %578 = vadd.xlane.f32.xlu0 %v556
        %v579 = vpop.xlane.xlu0 %578
        %580 = vadd.xlane.f32.xlu0 %v557
        %v581 = vpop.xlane.xlu0 %580
        %582 = vadd.xlane.f32.xlu0 %v558
        %v583 = vpop.xlane.xlu0 %582
        %584 = vadd.xlane.f32.xlu0 %v559
        %v585 = vpop.xlane.xlu0 %584
        %586 = vadd.xlane.f32.xlu0 %v560
        %v587 = vpop.xlane.xlu0 %586
        %588 = vadd.xlane.f32.xlu0 %v561
        %v589 = vpop.xlane.xlu0 %588
        %590 = vadd.xlane.f32.xlu0 %v562
        %v591 = vpop.xlane.xlu0 %590
        %592 = vadd.xlane.f32.xlu0 %v563
        %v593 = vpop.xlane.xlu0 %592
        %594 = vadd.xlane.f32.xlu0 %v564
        %v595 = vpop.xlane.xlu0 %594
        %596 = vadd.xlane.f32.xlu0 %v565
        %v597 = vpop.xlane.xlu0 %596
        %v598 = vmul.f32 %v519, 0.0078125
        %v599 = vmul.f32 %v521, 0.0078125
        %v600 = vmul.f32 %v523, 0.0078125
        %v601 = vmul.f32 %v525, 0.0078125
        %v602 = vmul.f32 %v527, 0.0078125
        %v603 = vmul.f32 %v529, 0.0078125
        %v604 = vmul.f32 %v531, 0.0078125
        %v605 = vmul.f32 %v533, 0.0078125
        %v606 = vmul.f32 %v535, 0.0078125
        %v607 = vmul.f32 %v537, 0.0078125
        %v608 = vmul.f32 %v539, 0.0078125
        %v609 = vmul.f32 %v541, 0.0078125
        %v610 = vmul.f32 %v543, 0.0078125
        %v611 = vmul.f32 %v545, 0.0078125
        %v612 = vmul.f32 %v547, 0.0078125
        %v613 = vmul.f32 %v549, 0.0078125
        %v614 = vmul.f32 %v567, 0.0078125
        %v615 = vmul.f32 %v569, 0.0078125
        %v616 = vmul.f32 %v571, 0.0078125
        %v617 = vmul.f32 %v573, 0.0078125
        %v618 = vmul.f32 %v575, 0.0078125
        %v619 = vmul.f32 %v577, 0.0078125
        %v620 = vmul.f32 %v579, 0.0078125
        %v621 = vmul.f32 %v581, 0.0078125
        %v622 = vmul.f32 %v583, 0.0078125
        %v623 = vmul.f32 %v585, 0.0078125
        %v624 = vmul.f32 %v587, 0.0078125
        %v625 = vmul.f32 %v589, 0.0078125
        %v626 = vmul.f32 %v591, 0.0078125
        %v627 = vmul.f32 %v593, 0.0078125
        %v628 = vmul.f32 %v595, 0.0078125
        %v629 = vmul.f32 %v597, 0.0078125
        %v630 = vmul.f32 %v598, %v598
        %v631 = vmul.f32 %v599, %v599
        %v632 = vmul.f32 %v600, %v600
        %v633 = vmul.f32 %v601, %v601
        %v634 = vmul.f32 %v602, %v602
        %v635 = vmul.f32 %v603, %v603
        %v636 = vmul.f32 %v604, %v604
        %v637 = vmul.f32 %v605, %v605
        %v638 = vmul.f32 %v606, %v606
        %v639 = vmul.f32 %v607, %v607
        %v640 = vmul.f32 %v608, %v608
        %v641 = vmul.f32 %v609, %v609
        %v642 = vmul.f32 %v610, %v610
        %v643 = vmul.f32 %v611, %v611
        %v644 = vmul.f32 %v612, %v612
        %v645 = vmul.f32 %v613, %v613
        %v646 = vsub.f32 %v614, %v630
        %v647 = vsub.f32 %v615, %v631
        %v648 = vsub.f32 %v616, %v632
        %v649 = vsub.f32 %v617, %v633
        %v650 = vsub.f32 %v618, %v634
        %v651 = vsub.f32 %v619, %v635
        %v652 = vsub.f32 %v620, %v636
        %v653 = vsub.f32 %v621, %v637
        %v654 = vsub.f32 %v622, %v638
        %v655 = vsub.f32 %v623, %v639
        %v656 = vsub.f32 %v624, %v640
        %v657 = vsub.f32 %v625, %v641
        %v658 = vsub.f32 %v626, %v642
        %v659 = vsub.f32 %v627, %v643
        %v660 = vsub.f32 %v628, %v644
        %v661 = vsub.f32 %v629, %v645
        %v662 = vsub.f32 %v498, %v598
        %v663 = vsub.f32 %v499, %v599
        %v664 = vsub.f32 %v500, %v600
        %v665 = vsub.f32 %v501, %v601
        %v666 = vsub.f32 %v502, %v602
        %v667 = vsub.f32 %v503, %v603
        %v668 = vsub.f32 %v504, %v604
        %v669 = vsub.f32 %v505, %v605
        %v670 = vsub.f32 %v506, %v606
        %v671 = vsub.f32 %v507, %v607
        %v672 = vsub.f32 %v508, %v608
        %v673 = vsub.f32 %v509, %v609
        %v674 = vsub.f32 %v510, %v610
        %v675 = vsub.f32 %v511, %v611
        %v676 = vsub.f32 %v512, %v612
        %v677 = vsub.f32 %v513, %v613
        %v678 = vadd.f32 %v646, 1e-05
        %v679 = vadd.f32 %v647, 1e-05
        %v680 = vadd.f32 %v648, 1e-05
        %v681 = vadd.f32 %v649, 1e-05
        %v682 = vadd.f32 %v650, 1e-05
        %v683 = vadd.f32 %v651, 1e-05
        %v684 = vadd.f32 %v652, 1e-05
        %v685 = vadd.f32 %v653, 1e-05
        %v686 = vadd.f32 %v654, 1e-05
        %v687 = vadd.f32 %v655, 1e-05
        %v688 = vadd.f32 %v656, 1e-05
        %v689 = vadd.f32 %v657, 1e-05
        %v690 = vadd.f32 %v658, 1e-05
        %v691 = vadd.f32 %v659, 1e-05
        %v692 = vadd.f32 %v660, 1e-05
        %v693 = vadd.f32 %v661, 1e-05
        %v694 = vrsqrt.pop %v678
        %v695 = vrsqrt.pop %v679
        %v696 = vrsqrt.pop %v680
        %v697 = vrsqrt.pop %v681
        %v698 = vrsqrt.pop %v682
        %v699 = vrsqrt.pop %v683
        %v700 = vrsqrt.pop %v684
        %v701 = vrsqrt.pop %v685
        %v702 = vrsqrt.pop %v686
        %v703 = vrsqrt.pop %v687
        %v704 = vrsqrt.pop %v688
        %v705 = vrsqrt.pop %v689
        %v706 = vrsqrt.pop %v690
        %v707 = vrsqrt.pop %v691
        %v708 = vrsqrt.pop %v692
        %v709 = vrsqrt.pop %v693
        %v710 = vmul.f32 %v662, %v694
        %v711 = vmul.f32 %v663, %v695
        %v712 = vmul.f32 %v664, %v696
        %v713 = vmul.f32 %v665, %v697
        %v714 = vmul.f32 %v666, %v698
        %v715 = vmul.f32 %v667, %v699
        %v716 = vmul.f32 %v668, %v700
        %v717 = vmul.f32 %v669, %v701
        %v718 = vmul.f32 %v670, %v702
        %v719 = vmul.f32 %v671, %v703
        %v720 = vmul.f32 %v672, %v704
        %v721 = vmul.f32 %v673, %v705
        %v722 = vmul.f32 %v674, %v706
        %v723 = vmul.f32 %v675, %v707
        %v724 = vmul.f32 %v676, %v708
        %v725 = vmul.f32 %v677, %v709
        %v726 = vlaneseq
        %v727 = vshrl.u32 %v726, 7
        %v728 = vsub.s32 0, %v727
        %v729 = vrot.slane %v514, %v728
        %v730 = vmul.f32 %v710, %v729
        %v731 = vmul.f32 %v711, %v729
        %v732 = vmul.f32 %v712, %v729
        %v733 = vmul.f32 %v713, %v729
        %v734 = vmul.f32 %v714, %v729
        %v735 = vmul.f32 %v715, %v729
        %v736 = vmul.f32 %v716, %v729
        %v737 = vmul.f32 %v717, %v729
        %v738 = vmul.f32 %v718, %v729
        %v739 = vmul.f32 %v719, %v729
        %v740 = vmul.f32 %v720, %v729
        %v741 = vmul.f32 %v721, %v729
        %v742 = vmul.f32 %v722, %v729
        %v743 = vmul.f32 %v723, %v729
        %v744 = vmul.f32 %v724, %v729
        %v745 = vmul.f32 %v725, %v729
        %v746 = vlaneseq
        %v747 = vshrl.u32 %v746, 7
        %v748 = vsub.s32 1, %v747
        %v749 = vrot.slane %v514, %v748
        %v750 = vadd.f32 %v730, %v749
        %v751 = vadd.f32 %v731, %v749
        %v752 = vadd.f32 %v732, %v749
        %v753 = vadd.f32 %v733, %v749
        %v754 = vadd.f32 %v734, %v749
        %v755 = vadd.f32 %v735, %v749
        %v756 = vadd.f32 %v736, %v749
        %v757 = vadd.f32 %v737, %v749
        %v758 = vadd.f32 %v738, %v749
        %v759 = vadd.f32 %v739, %v749
        %v760 = vadd.f32 %v740, %v749
        %v761 = vadd.f32 %v741, %v749
        %v762 = vadd.f32 %v742, %v749
        %v763 = vadd.f32 %v743, %v749
        %v764 = vadd.f32 %v744, %v749
        %v765 = vadd.f32 %v745, %v749
        %v766 = vpack.c.bf16 %v751, %v750
        %v767 = vpack.c.bf16 %v753, %v752
        %v768 = vpack.c.bf16 %v755, %v754
        %v769 = vpack.c.bf16 %v757, %v756
        %v770 = vpack.c.bf16 %v759, %v758
        %v771 = vpack.c.bf16 %v761, %v760
        %v772 = vpack.c.bf16 %v763, %v762
        %v773 = vpack.c.bf16 %v765, %v764
        %v774 = vld [vmem:[%s367] sm:$0xff]
        %v775 = vld [vmem:[%s367 + $0x8] sm:$0xf]
        %v776 = vld [vmem:[%s367 + $0xc] sm:$0xff]
        %v777 = vld [vmem:[%s367 + $0x14] sm:$0xf]
        %v778 = vld [vmem:[%s367 + $0x18] sm:$0xff]
        %v779 = vld [vmem:[%s367 + $0x20] sm:$0xf]
        %v780 = vld [vmem:[%s367 + $0x24] sm:$0xff]
        %v781 = vld [vmem:[%s367 + $0x2c] sm:$0xf]
        %v782 = vld [vmem:[%s367 + $0x30] sm:$0xff]
        %v783 = vld [vmem:[%s367 + $0x38] sm:$0xf]
        %v784 = vld [vmem:[%s367 + $0x3c] sm:$0xff]
        %v785 = vld [vmem:[%s367 + $0x44] sm:$0xf]
        %v786 = vld [vmem:[%s367 + $0x48] sm:$0xff]
        %v787 = vld [vmem:[%s367 + $0x50] sm:$0xf]
        %v788 = vld [vmem:[%s367 + $0x54] sm:$0xff]
        %v789 = vld [vmem:[%s367 + $0x5c] sm:$0xf]
        %v790 = vld [vmem:[%s367 + $0x60] sm:$0xff]
        %v791 = vld [vmem:[%s367 + $0x68] sm:$0xf]
        %v792 = vld [vmem:[%s367 + $0x6c] sm:$0xff]
        %v793 = vld [vmem:[%s367 + $0x74] sm:$0xf]
        %v794 = vld [vmem:[%s367 + $0x78] sm:$0xff]
        %v795 = vld [vmem:[%s367 + $0x80] sm:$0xf]
        %v796 = vld [vmem:[%s367 + $0x84] sm:$0xff]
        %v797 = vld [vmem:[%s367 + $0x8c] sm:$0xf]
        %v798 = vld [vmem:[%s367 + $0x90] sm:$0xff]
        %v799 = vld [vmem:[%s367 + $0x98] sm:$0xf]
        %v800 = vld [vmem:[%s367 + $0x9c] sm:$0xff]
        %v801 = vld [vmem:[%s367 + $0xa4] sm:$0xf]
        %v802 = vld [vmem:[%s367 + $0xa8] sm:$0xff]
        %v803 = vld [vmem:[%s367 + $0xb0] sm:$0xf]
        %v804 = vld [vmem:[%s367 + $0xb4] sm:$0xff]
        %v805 = vld [vmem:[%s367 + $0xbc] sm:$0xf]
        %v838 = vunpack.c.l.b16 %v774
        %v839 = vunpack.c.h.b16 %v774
        %v840 = vunpack.c.l.b16 %v775
        %v841 = vunpack.c.l.b16 %v776
        %v842 = vunpack.c.h.b16 %v776
        %v843 = vunpack.c.l.b16 %v777
        %v844 = vunpack.c.l.b16 %v778
        %v845 = vunpack.c.h.b16 %v778
        %v846 = vunpack.c.l.b16 %v779
        %v847 = vunpack.c.l.b16 %v780
        %v848 = vunpack.c.h.b16 %v780
        %v849 = vunpack.c.l.b16 %v781
        %v850 = vunpack.c.l.b16 %v782
        %v851 = vunpack.c.h.b16 %v782
        %v852 = vunpack.c.l.b16 %v783
        %v853 = vunpack.c.l.b16 %v784
        %v854 = vunpack.c.h.b16 %v784
        %v855 = vunpack.c.l.b16 %v785
        %v856 = vunpack.c.l.b16 %v786
        %v857 = vunpack.c.h.b16 %v786
        %v858 = vunpack.c.l.b16 %v787
        %v859 = vunpack.c.l.b16 %v788
        %v860 = vunpack.c.h.b16 %v788
        %v861 = vunpack.c.l.b16 %v789
        %v862 = vunpack.c.l.b16 %v790
        %v863 = vunpack.c.h.b16 %v790
        %v864 = vunpack.c.l.b16 %v791
        %v865 = vunpack.c.l.b16 %v792
        %v866 = vunpack.c.h.b16 %v792
        %v867 = vunpack.c.l.b16 %v793
        %v868 = vunpack.c.l.b16 %v794
        %v869 = vunpack.c.h.b16 %v794
        %v870 = vunpack.c.l.b16 %v795
        %v871 = vunpack.c.l.b16 %v796
        %v872 = vunpack.c.h.b16 %v796
        %v873 = vunpack.c.l.b16 %v797
        %v874 = vunpack.c.l.b16 %v798
        %v875 = vunpack.c.h.b16 %v798
        %v876 = vunpack.c.l.b16 %v799
        %v877 = vunpack.c.l.b16 %v800
        %v878 = vunpack.c.h.b16 %v800
        %v879 = vunpack.c.l.b16 %v801
        %v880 = vunpack.c.l.b16 %v802
        %v881 = vunpack.c.h.b16 %v802
        %v882 = vunpack.c.l.b16 %v803
        %v883 = vunpack.c.l.b16 %v804
        %v884 = vunpack.c.h.b16 %v804
        %v885 = vunpack.c.l.b16 %v805
        %v886 = vpack.c.b16 %v841, %v838
        %v887 = vpack.c.b16 %v842, %v839
        %v888 = vpack.c.b16 %v843, %v840
        %v889 = vpack.c.b16 %v847, %v844
        %v890 = vpack.c.b16 %v848, %v845
        %v891 = vpack.c.b16 %v849, %v846
        %v892 = vpack.c.b16 %v853, %v850
        %v893 = vpack.c.b16 %v854, %v851
        %v894 = vpack.c.b16 %v855, %v852
        %v895 = vpack.c.b16 %v859, %v856
        %v896 = vpack.c.b16 %v860, %v857
        %v897 = vpack.c.b16 %v861, %v858
        %v898 = vpack.c.b16 %v865, %v862
        %v899 = vpack.c.b16 %v866, %v863
        %v900 = vpack.c.b16 %v867, %v864
        %v901 = vpack.c.b16 %v871, %v868
        %v902 = vpack.c.b16 %v872, %v869
        %v903 = vpack.c.b16 %v873, %v870
        %v904 = vpack.c.b16 %v877, %v874
        %v905 = vpack.c.b16 %v878, %v875
        %v906 = vpack.c.b16 %v879, %v876
        %v907 = vpack.c.b16 %v883, %v880
        %v908 = vpack.c.b16 %v884, %v881
        %v909 = vpack.c.b16 %v885, %v882
        %934 = vmatprep.subr.bf16.mxu0 %v887
        %935 = vmatpush1.bf16.msra.mxu0 %v886
        %936 = vmatprep.subr.bf16.mxu0 %v890
        %937 = vmatpush1.bf16.msra.mxu0 %v889
        %938 = vmatprep.subr.bf16.mxu0 %v893
        %939 = vmatpush1.bf16.msra.mxu0 %v892
        %940 = vmatprep.subr.bf16.mxu0 %v896
        %941 = vmatpush1.bf16.msra.mxu0 %v895
        %942 = vmatprep.subr.bf16.mxu0 %v899
        %943 = vmatpush1.bf16.msra.mxu0 %v898
        %944 = vmatprep.subr.bf16.mxu0 %v902
        %945 = vmatpush1.bf16.msra.mxu0 %v901
        %946 = vmatprep.subr.bf16.mxu0 %v905
        %947 = vmatpush1.bf16.msra.mxu0 %v904
        %948 = vmatprep.subr.bf16.mxu0 %v908
        %949 = vmatpush1.bf16.msra.mxu0 %v907
        %950 = vmatprep.subr.bf16.mxu0 0
        %951 = vmatpush1.bf16.msra.mxu0 0
        %952 = vmatprep.subr.bf16.mxu0 0
        %953 = vmatpush1.bf16.msra.mxu0 0
        %954 = vmatprep.subr.bf16.mxu0 0
        %955 = vmatpush1.bf16.msra.mxu0 0
        %956 = vmatprep.subr.bf16.mxu0 0
        %957 = vmatpush1.bf16.msra.mxu0 0
        %958 = vmatprep.subr.bf16.mxu0 0
        %959 = vmatpush1.bf16.msra.mxu0 0
        %960 = vmatprep.subr.bf16.mxu0 0
        %961 = vmatpush1.bf16.msra.mxu0 0
        %962 = vmatprep.subr.bf16.mxu0 0
        %963 = vmatpush1.bf16.msra.mxu0 0
        %964 = vmatprep.subr.bf16.mxu0 0
        %965 = vmatpush1.bf16.msra.mxu0 0
        %966 = vmatprep.mubr.bf16.mxu0 0
        %967 = vmatmul.mubr.bf16.gmra.mrb[0].mxu0 %v766
        %v968 = vpop.f32.mrb[0].mxu0
        %v969 = vadd.f32 0.0, %v968
        %v970 = vpop.f32.mrb[0].mxu0
        %v971 = vadd.f32 0.0, %v970
        %v972 = vpop.f32.mrb[0].mxu0
        %v973 = vadd.f32 0.0, %v972
        %v974 = vpop.f32.mrb[0].mxu0
        %v975 = vadd.f32 0.0, %v974
        %976 = vmatprep.mubr.bf16.mxu0 0
        %977 = vmatmul.mubr.bf16.gmra.mrb[0].mxu0 %v767
        %v978 = vpop.f32.mrb[0].mxu0
        %v979 = vadd.f32 0.0, %v978
        %v980 = vpop.f32.mrb[0].mxu0
        %v981 = vadd.f32 0.0, %v980
        %v982 = vpop.f32.mrb[0].mxu0
        %v983 = vadd.f32 0.0, %v982
        %v984 = vpop.f32.mrb[0].mxu0
        %v985 = vadd.f32 0.0, %v984
        %986 = vmatprep.mubr.bf16.mxu0 0
        %987 = vmatmul.mubr.bf16.gmra.mrb[0].mxu0 %v768
        %v988 = vpop.f32.mrb[0].mxu0
        %v989 = vadd.f32 0.0, %v988
        %v990 = vpop.f32.mrb[0].mxu0
        %v991 = vadd.f32 0.0, %v990
        %v992 = vpop.f32.mrb[0].mxu0
        %v993 = vadd.f32 0.0, %v992
        %v994 = vpop.f32.mrb[0].mxu0
        %v995 = vadd.f32 0.0, %v994
        %996 = vmatprep.mubr.bf16.mxu0 0
        %997 = vmatmul.mubr.bf16.gmra.mrb[0].mxu0 %v769
        %v998 = vpop.f32.mrb[0].mxu0
        %v999 = vadd.f32 0.0, %v998
        %v1000 = vpop.f32.mrb[0].mxu0
        %v1001 = vadd.f32 0.0, %v1000
        %v1002 = vpop.f32.mrb[0].mxu0
        %v1003 = vadd.f32 0.0, %v1002
        %v1004 = vpop.f32.mrb[0].mxu0
        %v1005 = vadd.f32 0.0, %v1004
        %1006 = vmatprep.mubr.bf16.mxu0 0
        %1007 = vmatmul.mubr.bf16.gmra.mrb[0].mxu0 %v770
        %v1008 = vpop.f32.mrb[0].mxu0
        %v1009 = vadd.f32 0.0, %v1008
        %v1010 = vpop.f32.mrb[0].mxu0
        %v1011 = vadd.f32 0.0, %v1010
        %v1012 = vpop.f32.mrb[0].mxu0
        %v1013 = vadd.f32 0.0, %v1012
        %v1014 = vpop.f32.mrb[0].mxu0
        %v1015 = vadd.f32 0.0, %v1014
        %1016 = vmatprep.mubr.bf16.mxu0 0
        %1017 = vmatmul.mubr.bf16.gmra.mrb[0].mxu0 %v771
        %v1018 = vpop.f32.mrb[0].mxu0
        %v1019 = vadd.f32 0.0, %v1018
        %v1020 = vpop.f32.mrb[0].mxu0
        %v1021 = vadd.f32 0.0, %v1020
        %v1022 = vpop.f32.mrb[0].mxu0
        %v1023 = vadd.f32 0.0, %v1022
        %v1024 = vpop.f32.mrb[0].mxu0
        %v1025 = vadd.f32 0.0, %v1024
        %1026 = vmatprep.mubr.bf16.mxu0 0
        %1027 = vmatmul.mubr.bf16.gmra.mrb[0].mxu0 %v772
        %v1028 = vpop.f32.mrb[0].mxu0
        %v1029 = vadd.f32 0.0, %v1028
        %v1030 = vpop.f32.mrb[0].mxu0
        %v1031 = vadd.f32 0.0, %v1030
        %v1032 = vpop.f32.mrb[0].mxu0
        %v1033 = vadd.f32 0.0, %v1032
        %v1034 = vpop.f32.mrb[0].mxu0
        %v1035 = vadd.f32 0.0, %v1034
        %1036 = vmatprep.mubr.bf16.mxu0 0
        %1037 = vmatmul.mubr.bf16.gmra.mrb[0].mxu0 %v773
        %v1038 = vpop.f32.mrb[0].mxu0
        %v1039 = vadd.f32 0.0, %v1038
        %v1040 = vpop.f32.mrb[0].mxu0
        %v1041 = vadd.f32 0.0, %v1040
        %v1042 = vpop.f32.mrb[0].mxu0
        %v1043 = vadd.f32 0.0, %v1042
        %v1044 = vpop.f32.mrb[0].mxu0
        %v1045 = vadd.f32 0.0, %v1044
        %1046 = vdwg.mxu0
        %1047 = vmatprep.subr.bf16.mxu0 0
        %1048 = vmatpush1.bf16.msra.mxu0 %v888
        %1049 = vmatprep.subr.bf16.mxu0 0
        %1050 = vmatpush1.bf16.msra.mxu0 %v891
        %1051 = vmatprep.subr.bf16.mxu0 0
        %1052 = vmatpush1.bf16.msra.mxu0 %v894
        %1053 = vmatprep.subr.bf16.mxu0 0
        %1054 = vmatpush1.bf16.msra.mxu0 %v897
        %1055 = vmatprep.subr.bf16.mxu0 0
        %1056 = vmatpush1.bf16.msra.mxu0 %v900
        %1057 = vmatprep.subr.bf16.mxu0 0
        %1058 = vmatpush1.bf16.msra.mxu0 %v903
        %1059 = vmatprep.subr.bf16.mxu0 0
        %1060 = vmatpush1.bf16.msra.mxu0 %v906
        %1061 = vmatprep.subr.bf16.mxu0 0
        %1062 = vmatpush1.bf16.msra.mxu0 %v909
        %1063 = vmatprep.subr.bf16.mxu0 0
        %1064 = vmatpush1.bf16.msra.mxu0 0
        %1065 = vmatprep.subr.bf16.mxu0 0
        %1066 = vmatpush1.bf16.msra.mxu0 0
        %1067 = vmatprep.subr.bf16.mxu0 0
        %1068 = vmatpush1.bf16.msra.mxu0 0
        %1069 = vmatprep.subr.bf16.mxu0 0
        %1070 = vmatpush1.bf16.msra.mxu0 0
        %1071 = vmatprep.subr.bf16.mxu0 0
        %1072 = vmatpush1.bf16.msra.mxu0 0
        %1073 = vmatprep.subr.bf16.mxu0 0
        %1074 = vmatpush1.bf16.msra.mxu0 0
        %1075 = vmatprep.subr.bf16.mxu0 0
        %1076 = vmatpush1.bf16.msra.mxu0 0
        %1077 = vmatprep.subr.bf16.mxu0 0
        %1078 = vmatpush1.bf16.msra.mxu0 0
        %1079 = vmatprep.mubr.bf16.mxu0 0
        %1080 = vmatmul.mubr.bf16.gmra.mrb[0].mxu0 %v766
        %v1081 = vpop.f32.mrb[0].mxu0
        %v1082 = vadd.f32 0.0, %v1081
        %v1083 = vpop.f32.mrb[0].mxu0
        %v1084 = vpop.f32.mrb[0].mxu0
        %v1085 = vadd.f32 0.0, %v1084
        %v1086 = vpop.f32.mrb[0].mxu0
        %1087 = vmatprep.mubr.bf16.mxu0 0
        %1088 = vmatmul.mubr.bf16.gmra.mrb[0].mxu0 %v767
        %v1089 = vpop.f32.mrb[0].mxu0
        %v1090 = vadd.f32 0.0, %v1089
        %v1091 = vpop.f32.mrb[0].mxu0
        %v1092 = vpop.f32.mrb[0].mxu0
        %v1093 = vadd.f32 0.0, %v1092
        %v1094 = vpop.f32.mrb[0].mxu0
        %1095 = vmatprep.mubr.bf16.mxu0 0
        %1096 = vmatmul.mubr.bf16.gmra.mrb[0].mxu0 %v768
        %v1097 = vpop.f32.mrb[0].mxu0
        %v1098 = vadd.f32 0.0, %v1097
        %v1099 = vpop.f32.mrb[0].mxu0
        %v1100 = vpop.f32.mrb[0].mxu0
        %v1101 = vadd.f32 0.0, %v1100
        %v1102 = vpop.f32.mrb[0].mxu0
        %1103 = vmatprep.mubr.bf16.mxu0 0
        %1104 = vmatmul.mubr.bf16.gmra.mrb[0].mxu0 %v769
        %v1105 = vpop.f32.mrb[0].mxu0
        %v1106 = vadd.f32 0.0, %v1105
        %v1107 = vpop.f32.mrb[0].mxu0
        %v1108 = vpop.f32.mrb[0].mxu0
        %v1109 = vadd.f32 0.0, %v1108
        %v1110 = vpop.f32.mrb[0].mxu0
        %1111 = vmatprep.mubr.bf16.mxu0 0
        %1112 = vmatmul.mubr.bf16.gmra.mrb[0].mxu0 %v770
        %v1113 = vpop.f32.mrb[0].mxu0
        %v1114 = vadd.f32 0.0, %v1113
        %v1115 = vpop.f32.mrb[0].mxu0
        %v1116 = vpop.f32.mrb[0].mxu0
        %v1117 = vadd.f32 0.0, %v1116
        %v1118 = vpop.f32.mrb[0].mxu0
        %1119 = vmatprep.mubr.bf16.mxu0 0
        %1120 = vmatmul.mubr.bf16.gmra.mrb[0].mxu0 %v771
        %v1121 = vpop.f32.mrb[0].mxu0
        %v1122 = vadd.f32 0.0, %v1121
        %v1123 = vpop.f32.mrb[0].mxu0
        %v1124 = vpop.f32.mrb[0].mxu0
        %v1125 = vadd.f32 0.0, %v1124
        %v1126 = vpop.f32.mrb[0].mxu0
        %1127 = vmatprep.mubr.bf16.mxu0 0
        %1128 = vmatmul.mubr.bf16.gmra.mrb[0].mxu0 %v772
        %v1129 = vpop.f32.mrb[0].mxu0
        %v1130 = vadd.f32 0.0, %v1129
        %v1131 = vpop.f32.mrb[0].mxu0
        %v1132 = vpop.f32.mrb[0].mxu0
        %v1133 = vadd.f32 0.0, %v1132
        %v1134 = vpop.f32.mrb[0].mxu0
        %1135 = vmatprep.mubr.bf16.mxu0 0
        %1136 = vmatmul.mubr.bf16.gmra.mrb[0].mxu0 %v773
        %v1137 = vpop.f32.mrb[0].mxu0
        %v1138 = vadd.f32 0.0, %v1137
        %v1139 = vpop.f32.mrb[0].mxu0
        %v1140 = vpop.f32.mrb[0].mxu0
        %v1141 = vadd.f32 0.0, %v1140
        %v1142 = vpop.f32.mrb[0].mxu0
        %1143 = vdwg.mxu0
        %v1144 = vpack.c.bf16 %v973, %v969
        %v1145 = vpack.c.bf16 %v975, %v971
        %v1146 = vpack.c.bf16 %v1085, %v1082
        %v1147 = vpack.c.bf16 %v983, %v979
        %v1148 = vpack.c.bf16 %v985, %v981
        %v1149 = vpack.c.bf16 %v1093, %v1090
        %v1150 = vpack.c.bf16 %v993, %v989
        %v1151 = vpack.c.bf16 %v995, %v991
        %v1152 = vpack.c.bf16 %v1101, %v1098
        %v1153 = vpack.c.bf16 %v1003, %v999
        %v1154 = vpack.c.bf16 %v1005, %v1001
        %v1155 = vpack.c.bf16 %v1109, %v1106
        %v1156 = vpack.c.bf16 %v1013, %v1009
        %v1157 = vpack.c.bf16 %v1015, %v1011
        %v1158 = vpack.c.bf16 %v1117, %v1114
        %v1159 = vpack.c.bf16 %v1023, %v1019
        %v1160 = vpack.c.bf16 %v1025, %v1021
        %v1161 = vpack.c.bf16 %v1125, %v1122
        %v1162 = vpack.c.bf16 %v1033, %v1029
        %v1163 = vpack.c.bf16 %v1035, %v1031
        %v1164 = vpack.c.bf16 %v1133, %v1130
        %v1165 = vpack.c.bf16 %v1043, %v1039
        %v1166 = vpack.c.bf16 %v1045, %v1041
        %v1167 = vpack.c.bf16 %v1141, %v1138
        %v1168 = vlaneseq
        %v1169 = vshrl.u32 %v1168, 7
        %v1170 = vadd.s32 %v1169, 8
        %v1171 = vadd.s32 %v1169, 16
        %v1172 = vadd.s32 %v1169, 24
        %v1173 = vadd.s32 %v1169, 32
        %v1174 = vadd.s32 %v1169, 40
        %v1175 = vadd.s32 %v1169, 48
        %v1176 = vadd.s32 %v1169, 56
        %v1177 = vlaneseq
        %v1178 = vand.u32 %v1177, 127
        %vm1179 = vcmp.le.s32.totalorder %v1178, %v1169
        %vm1180 = vcmp.le.s32.totalorder %v1178, %v1170
        %vm1181 = vcmp.le.s32.totalorder %v1178, %v1171
        %vm1182 = vcmp.le.s32.totalorder %v1178, %v1172
        %vm1183 = vcmp.le.s32.totalorder %v1178, %v1173
        %vm1184 = vcmp.le.s32.totalorder %v1178, %v1174
        %vm1185 = vcmp.le.s32.totalorder %v1178, %v1175
        %vm1186 = vcmp.le.s32.totalorder %v1178, %v1176
        %v1187 = vsel %vm1179, 0.0, -1e+30
        %v1188 = vsel %vm1180, 0.0, -1e+30
        %v1189 = vsel %vm1181, 0.0, -1e+30
        %v1190 = vsel %vm1182, 0.0, -1e+30
        %v1191 = vsel %vm1183, 0.0, -1e+30
        %v1192 = vsel %vm1184, 0.0, -1e+30
        %v1193 = vsel %vm1185, 0.0, -1e+30
        %v1194 = vsel %vm1186, 0.0, -1e+30
        %vm1195 = vcmask 523264
        %v1197 = vsel %vm1195, %v1144, 0
        %v1200 = vsel %vm1195, %v1147, 0
        %v1203 = vsel %vm1195, %v1150, 0
        %v1206 = vsel %vm1195, %v1153, 0
        %v1209 = vsel %vm1195, %v1145, 0
        %v1212 = vsel %vm1195, %v1148, 0
        %v1215 = vsel %vm1195, %v1151, 0
        %v1218 = vsel %vm1195, %v1154, 0
        %1220 = vmatprep.subr.bf16.mxu0 0
        %1221 = vmatpush1.bf16.xpose.msra.mxu0 %v1209
        %1222 = vmatprep.subr.bf16.mxu0 0
        %1223 = vmatpush1.bf16.xpose.msra.mxu0 %v1212
        %1224 = vmatprep.subr.bf16.mxu0 0
        %1225 = vmatpush1.bf16.xpose.msra.mxu0 %v1215
        %1226 = vmatprep.subr.bf16.mxu0 0
        %1227 = vmatpush1.bf16.xpose.msra.mxu0 %v1218
        %1228 = vmatprep.subr.bf16.mxu0 0
        %1229 = vmatpush1.bf16.xpose.msra.mxu0 0
        %1230 = vmatprep.subr.bf16.mxu0 0
        %1231 = vmatpush1.bf16.xpose.msra.mxu0 0
        %1232 = vmatprep.subr.bf16.mxu0 0
        %1233 = vmatpush1.bf16.xpose.msra.mxu0 0
        %1234 = vmatprep.subr.bf16.mxu0 0
        %1235 = vmatpush1.bf16.xpose.msra.mxu0 0
        %1236 = vmatprep.subr.bf16.mxu0 0
        %1237 = vmatpush1.bf16.xpose.msra.mxu0 0
        %1238 = vmatprep.subr.bf16.mxu0 0
        %1239 = vmatpush1.bf16.xpose.msra.mxu0 0
        %1240 = vmatprep.subr.bf16.mxu0 0
        %1241 = vmatpush1.bf16.xpose.msra.mxu0 0
        %1242 = vmatprep.subr.bf16.mxu0 0
        %1243 = vmatpush1.bf16.xpose.msra.mxu0 0
        %1244 = vmatprep.subr.bf16.mxu0 0
        %1245 = vmatpush1.bf16.xpose.msra.mxu0 0
        %1246 = vmatprep.subr.bf16.mxu0 0
        %1247 = vmatpush1.bf16.xpose.msra.mxu0 0
        %1248 = vmatprep.subr.bf16.mxu0 0
        %1249 = vmatpush1.bf16.xpose.msra.mxu0 0
        %1250 = vmatprep.subr.bf16.mxu0 0
        %1251 = vmatpush1.bf16.xpose.msra.mxu0 0
        %1252 = vmatprep.mubr.bf16.mxu0 0
        %1253 = vmatmul.mubr.bf16.gmra.mrb[0].mxu0 %v1197
        %v1254 = vpop.f32.mrb[0].mxu0
        %v1255 = vadd.f32 %v1187, %v1254
        %v1256 = vpop.f32.mrb[0].mxu0
        %v1257 = vpop.f32.mrb[0].mxu0
        %v1258 = vadd.f32 %v1188, %v1257
        %v1259 = vpop.f32.mrb[0].mxu0
        %1260 = vmatprep.mubr.bf16.mxu0 0
        %1261 = vmatmul.mubr.bf16.gmra.mrb[0].mxu0 %v1200
        %v1262 = vpop.f32.mrb[0].mxu0
        %v1263 = vadd.f32 %v1189, %v1262
        %v1264 = vpop.f32.mrb[0].mxu0
        %v1265 = vpop.f32.mrb[0].mxu0
        %v1266 = vadd.f32 %v1190, %v1265
        %v1267 = vpop.f32.mrb[0].mxu0
        %1268 = vmatprep.mubr.bf16.mxu0 0
        %1269 = vmatmul.mubr.bf16.gmra.mrb[0].mxu0 %v1203
        %v1270 = vpop.f32.mrb[0].mxu0
        %v1271 = vadd.f32 %v1191, %v1270
        %v1272 = vpop.f32.mrb[0].mxu0
        %v1273 = vpop.f32.mrb[0].mxu0
        %v1274 = vadd.f32 %v1192, %v1273
        %v1275 = vpop.f32.mrb[0].mxu0
        %1276 = vmatprep.mubr.bf16.mxu0 0
        %1277 = vmatmul.mubr.bf16.gmra.mrb[0].mxu0 %v1206
        %v1278 = vpop.f32.mrb[0].mxu0
        %v1279 = vadd.f32 %v1193, %v1278
        %v1280 = vpop.f32.mrb[0].mxu0
        %v1281 = vpop.f32.mrb[0].mxu0
        %v1282 = vadd.f32 %v1194, %v1281
        %v1283 = vpop.f32.mrb[0].mxu0
        %1284 = vdwg.mxu0
        %v1285 = vsel %vm1195, %v1255, -inf
        %1286 = vmax.xlane.f32.xlu0 %v1285
        %v1287 = vpop.xlane.xlu0 %1286
        %v1288 = vsel %vm1195, %v1258, -inf
        %1289 = vmax.xlane.f32.xlu0 %v1288
        %v1290 = vpop.xlane.xlu0 %1289
        %v1291 = vsel %vm1195, %v1263, -inf
        %1292 = vmax.xlane.f32.xlu0 %v1291
        %v1293 = vpop.xlane.xlu0 %1292
        %v1294 = vsel %vm1195, %v1266, -inf
        %1295 = vmax.xlane.f32.xlu0 %v1294
        %v1296 = vpop.xlane.xlu0 %1295
        %v1297 = vsel %vm1195, %v1271, -inf
        %1298 = vmax.xlane.f32.xlu0 %v1297
        %v1299 = vpop.xlane.xlu0 %1298
        %v1300 = vsel %vm1195, %v1274, -inf
        %1301 = vmax.xlane.f32.xlu0 %v1300
        %v1302 = vpop.xlane.xlu0 %1301
        %v1303 = vsel %vm1195, %v1279, -inf
        %1304 = vmax.xlane.f32.xlu0 %v1303
        %v1305 = vpop.xlane.xlu0 %1304
        %v1306 = vsel %vm1195, %v1282, -inf
        %1307 = vmax.xlane.f32.xlu0 %v1306
        %v1308 = vpop.xlane.xlu0 %1307
        %v1309 = vsub.f32 %v1255, %v1287
        %v1310 = vsub.f32 %v1258, %v1290
        %v1311 = vsub.f32 %v1263, %v1293
        %v1312 = vsub.f32 %v1266, %v1296
        %v1313 = vsub.f32 %v1271, %v1299
        %v1314 = vsub.f32 %v1274, %v1302
        %v1315 = vsub.f32 %v1279, %v1305
        %v1316 = vsub.f32 %v1282, %v1308
        %v1317 = vmul.f32 %v1309, 1.442695
        %v1318 = vpow.pop %v1317
        %v1319 = vmul.f32 %v1310, 1.442695
        %v1320 = vpow.pop %v1319
        %v1321 = vmul.f32 %v1311, 1.442695
        %v1322 = vpow.pop %v1321
        %v1323 = vmul.f32 %v1312, 1.442695
        %v1324 = vpow.pop %v1323
        %v1325 = vmul.f32 %v1313, 1.442695
        %v1326 = vpow.pop %v1325
        %v1327 = vmul.f32 %v1314, 1.442695
        %v1328 = vpow.pop %v1327
        %v1329 = vmul.f32 %v1315, 1.442695
        %v1330 = vpow.pop %v1329
        %v1331 = vmul.f32 %v1316, 1.442695
        %v1332 = vpow.pop %v1331
        %v1333 = vsel %vm1195, %v1318, 0.0
        %1334 = vadd.xlane.f32.xlu0 %v1333
        %v1335 = vpop.xlane.xlu0 %1334
        %v1336 = vsel %vm1195, %v1320, 0.0
        %1337 = vadd.xlane.f32.xlu0 %v1336
        %v1338 = vpop.xlane.xlu0 %1337
        %v1339 = vsel %vm1195, %v1322, 0.0
        %1340 = vadd.xlane.f32.xlu0 %v1339
        %v1341 = vpop.xlane.xlu0 %1340
        %v1342 = vsel %vm1195, %v1324, 0.0
        %1343 = vadd.xlane.f32.xlu0 %v1342
        %v1344 = vpop.xlane.xlu0 %1343
        %v1345 = vsel %vm1195, %v1326, 0.0
        %1346 = vadd.xlane.f32.xlu0 %v1345
        %v1347 = vpop.xlane.xlu0 %1346
        %v1348 = vsel %vm1195, %v1328, 0.0
        %1349 = vadd.xlane.f32.xlu0 %v1348
        %v1350 = vpop.xlane.xlu0 %1349
        %v1351 = vsel %vm1195, %v1330, 0.0
        %1352 = vadd.xlane.f32.xlu0 %v1351
        %v1353 = vpop.xlane.xlu0 %1352
        %v1354 = vsel %vm1195, %v1332, 0.0
        %1355 = vadd.xlane.f32.xlu0 %v1354
        %v1356 = vpop.xlane.xlu0 %1355
        %v1357 = vrcp.pop %v1335
        %v1358 = vrcp.pop %v1338
        %v1359 = vrcp.pop %v1341
        %v1360 = vrcp.pop %v1344
        %v1361 = vrcp.pop %v1347
        %v1362 = vrcp.pop %v1350
        %v1363 = vrcp.pop %v1353
        %v1364 = vrcp.pop %v1356
        %v1365 = vmul.f32 %v1318, %v1357
        %v1366 = vmul.f32 %v1320, %v1358
        %v1367 = vmul.f32 %v1322, %v1359
        %v1368 = vmul.f32 %v1324, %v1360
        %v1369 = vmul.f32 %v1326, %v1361
        %v1370 = vmul.f32 %v1328, %v1362
        %v1371 = vmul.f32 %v1330, %v1363
        %v1372 = vmul.f32 %v1332, %v1364
        %v1373 = vpack.c.bf16 %v1366, %v1365
        %v1374 = vpack.c.bf16 %v1368, %v1367
        %v1375 = vpack.c.bf16 %v1370, %v1369
        %v1376 = vpack.c.bf16 %v1372, %v1371
        %v1378 = vsel %vm1195, %v1373, 0
        %v1381 = vsel %vm1195, %v1374, 0
        %v1384 = vsel %vm1195, %v1375, 0
        %v1387 = vsel %vm1195, %v1376, 0
        %1389 = vmatprep.subr.bf16.mxu0 0
        %1390 = vmatpush1.bf16.msra.mxu0 %v1146
        %1391 = vmatprep.subr.bf16.mxu0 0
        %1392 = vmatpush1.bf16.msra.mxu0 %v1149
        %1393 = vmatprep.subr.bf16.mxu0 0
        %1394 = vmatpush1.bf16.msra.mxu0 %v1152
        %1395 = vmatprep.subr.bf16.mxu0 0
        %1396 = vmatpush1.bf16.msra.mxu0 %v1155
        %1397 = vmatprep.subr.bf16.mxu0 0
        %1398 = vmatpush1.bf16.msra.mxu0 0
        %1399 = vmatprep.subr.bf16.mxu0 0
        %1400 = vmatpush1.bf16.msra.mxu0 0
        %1401 = vmatprep.subr.bf16.mxu0 0
        %1402 = vmatpush1.bf16.msra.mxu0 0
        %1403 = vmatprep.subr.bf16.mxu0 0
        %1404 = vmatpush1.bf16.msra.mxu0 0
        %1405 = vmatprep.subr.bf16.mxu0 0
        %1406 = vmatpush1.bf16.msra.mxu0 0
        %1407 = vmatprep.subr.bf16.mxu0 0
        %1408 = vmatpush1.bf16.msra.mxu0 0
        %1409 = vmatprep.subr.bf16.mxu0 0
        %1410 = vmatpush1.bf16.msra.mxu0 0
        %1411 = vmatprep.subr.bf16.mxu0 0
        %1412 = vmatpush1.bf16.msra.mxu0 0
        %1413 = vmatprep.subr.bf16.mxu0 0
        %1414 = vmatpush1.bf16.msra.mxu0 0
        %1415 = vmatprep.subr.bf16.mxu0 0
        %1416 = vmatpush1.bf16.msra.mxu0 0
        %1417 = vmatprep.subr.bf16.mxu0 0
        %1418 = vmatpush1.bf16.msra.mxu0 0
        %1419 = vmatprep.subr.bf16.mxu0 0
        %1420 = vmatpush1.bf16.msra.mxu0 0
        %1421 = vmatprep.mubr.bf16.mxu0 0
        %1422 = vmatmul.mubr.bf16.gmra.mrb[0].mxu0 %v1378
        %v1423 = vpop.f32.mrb[0].mxu0
        %v1424 = vadd.f32 0.0, %v1423
        %v1425 = vpop.f32.mrb[0].mxu0
        %v1426 = vpop.f32.mrb[0].mxu0
        %v1427 = vadd.f32 0.0, %v1426
        %v1428 = vpop.f32.mrb[0].mxu0
        %1429 = vmatprep.mubr.bf16.mxu0 0
        %1430 = vmatmul.mubr.bf16.gmra.mrb[0].mxu0 %v1381
        %v1431 = vpop.f32.mrb[0].mxu0
        %v1432 = vadd.f32 0.0, %v1431
        %v1433 = vpop.f32.mrb[0].mxu0
        %v1434 = vpop.f32.mrb[0].mxu0
        %v1435 = vadd.f32 0.0, %v1434
        %v1436 = vpop.f32.mrb[0].mxu0
        %1437 = vmatprep.mubr.bf16.mxu0 0
        %1438 = vmatmul.mubr.bf16.gmra.mrb[0].mxu0 %v1384
        %v1439 = vpop.f32.mrb[0].mxu0
        %v1440 = vadd.f32 0.0, %v1439
        %v1441 = vpop.f32.mrb[0].mxu0
        %v1442 = vpop.f32.mrb[0].mxu0
        %v1443 = vadd.f32 0.0, %v1442
        %v1444 = vpop.f32.mrb[0].mxu0
        %1445 = vmatprep.mubr.bf16.mxu0 0
        %1446 = vmatmul.mubr.bf16.gmra.mrb[0].mxu0 %v1387
        %v1447 = vpop.f32.mrb[0].mxu0
        %v1448 = vadd.f32 0.0, %v1447
        %v1449 = vpop.f32.mrb[0].mxu0
        %v1450 = vpop.f32.mrb[0].mxu0
        %v1451 = vadd.f32 0.0, %v1450
        %v1452 = vpop.f32.mrb[0].mxu0
        %1453 = vdwg.mxu0
        %1458 = vrot.lane.b32.xlu0 %v1144, 64
        %v1459 = vpop.permute.xlu0 %1458
        %1460 = vrot.lane.b32.xlu0 %v1147, 64
        %v1461 = vpop.permute.xlu0 %1460
        %1462 = vrot.lane.b32.xlu0 %v1150, 64
        %v1463 = vpop.permute.xlu0 %1462
        %1464 = vrot.lane.b32.xlu0 %v1153, 64
        %v1465 = vpop.permute.xlu0 %1464
        %1470 = vrot.lane.b32.xlu0 %v1145, 64
        %v1471 = vpop.permute.xlu0 %1470
        %1472 = vrot.lane.b32.xlu0 %v1148, 64
        %v1473 = vpop.permute.xlu0 %1472
        %1474 = vrot.lane.b32.xlu0 %v1151, 64
        %v1475 = vpop.permute.xlu0 %1474
        %1476 = vrot.lane.b32.xlu0 %v1154, 64
        %v1477 = vpop.permute.xlu0 %1476
        %v1479 = vsel %vm1195, %v1459, 0
        %v1482 = vsel %vm1195, %v1461, 0
        %v1485 = vsel %vm1195, %v1463, 0
        %v1488 = vsel %vm1195, %v1465, 0
        %v1491 = vsel %vm1195, %v1471, 0
        %v1494 = vsel %vm1195, %v1473, 0
        %v1497 = vsel %vm1195, %v1475, 0
        %v1500 = vsel %vm1195, %v1477, 0
        %1502 = vmatprep.subr.bf16.mxu0 0
        %1503 = vmatpush1.bf16.xpose.msra.mxu0 %v1491
        %1504 = vmatprep.subr.bf16.mxu0 0
        %1505 = vmatpush1.bf16.xpose.msra.mxu0 %v1494
        %1506 = vmatprep.subr.bf16.mxu0 0
        %1507 = vmatpush1.bf16.xpose.msra.mxu0 %v1497
        %1508 = vmatprep.subr.bf16.mxu0 0
        %1509 = vmatpush1.bf16.xpose.msra.mxu0 %v1500
        %1510 = vmatprep.subr.bf16.mxu0 0
        %1511 = vmatpush1.bf16.xpose.msra.mxu0 0
        %1512 = vmatprep.subr.bf16.mxu0 0
        %1513 = vmatpush1.bf16.xpose.msra.mxu0 0
        %1514 = vmatprep.subr.bf16.mxu0 0
        %1515 = vmatpush1.bf16.xpose.msra.mxu0 0
        %1516 = vmatprep.subr.bf16.mxu0 0
        %1517 = vmatpush1.bf16.xpose.msra.mxu0 0
        %1518 = vmatprep.subr.bf16.mxu0 0
        %1519 = vmatpush1.bf16.xpose.msra.mxu0 0
        %1520 = vmatprep.subr.bf16.mxu0 0
        %1521 = vmatpush1.bf16.xpose.msra.mxu0 0
        %1522 = vmatprep.subr.bf16.mxu0 0
        %1523 = vmatpush1.bf16.xpose.msra.mxu0 0
        %1524 = vmatprep.subr.bf16.mxu0 0
        %1525 = vmatpush1.bf16.xpose.msra.mxu0 0
        %1526 = vmatprep.subr.bf16.mxu0 0
        %1527 = vmatpush1.bf16.xpose.msra.mxu0 0
        %1528 = vmatprep.subr.bf16.mxu0 0
        %1529 = vmatpush1.bf16.xpose.msra.mxu0 0
        %1530 = vmatprep.subr.bf16.mxu0 0
        %1531 = vmatpush1.bf16.xpose.msra.mxu0 0
        %1532 = vmatprep.subr.bf16.mxu0 0
        %1533 = vmatpush1.bf16.xpose.msra.mxu0 0
        %1534 = vmatprep.mubr.bf16.mxu0 0
        %1535 = vmatmul.mubr.bf16.gmra.mrb[0].mxu0 %v1479
        %v1536 = vpop.f32.mrb[0].mxu0
        %v1537 = vadd.f32 %v1187, %v1536
        %v1538 = vpop.f32.mrb[0].mxu0
        %v1539 = vpop.f32.mrb[0].mxu0
        %v1540 = vadd.f32 %v1188, %v1539
        %v1541 = vpop.f32.mrb[0].mxu0
        %1542 = vmatprep.mubr.bf16.mxu0 0
        %1543 = vmatmul.mubr.bf16.gmra.mrb[0].mxu0 %v1482
        %v1544 = vpop.f32.mrb[0].mxu0
        %v1545 = vadd.f32 %v1189, %v1544
        %v1546 = vpop.f32.mrb[0].mxu0
        %v1547 = vpop.f32.mrb[0].mxu0
        %v1548 = vadd.f32 %v1190, %v1547
        %v1549 = vpop.f32.mrb[0].mxu0
        %1550 = vmatprep.mubr.bf16.mxu0 0
        %1551 = vmatmul.mubr.bf16.gmra.mrb[0].mxu0 %v1485
        %v1552 = vpop.f32.mrb[0].mxu0
        %v1553 = vadd.f32 %v1191, %v1552
        %v1554 = vpop.f32.mrb[0].mxu0
        %v1555 = vpop.f32.mrb[0].mxu0
        %v1556 = vadd.f32 %v1192, %v1555
        %v1557 = vpop.f32.mrb[0].mxu0
        %1558 = vmatprep.mubr.bf16.mxu0 0
        %1559 = vmatmul.mubr.bf16.gmra.mrb[0].mxu0 %v1488
        %v1560 = vpop.f32.mrb[0].mxu0
        %v1561 = vadd.f32 %v1193, %v1560
        %v1562 = vpop.f32.mrb[0].mxu0
        %v1563 = vpop.f32.mrb[0].mxu0
        %v1564 = vadd.f32 %v1194, %v1563
        %v1565 = vpop.f32.mrb[0].mxu0
        %1566 = vdwg.mxu0
        %v1567 = vsel %vm1195, %v1537, -inf
        %1568 = vmax.xlane.f32.xlu0 %v1567
        %v1569 = vpop.xlane.xlu0 %1568
        %v1570 = vsel %vm1195, %v1540, -inf
        %1571 = vmax.xlane.f32.xlu0 %v1570
        %v1572 = vpop.xlane.xlu0 %1571
        %v1573 = vsel %vm1195, %v1545, -inf
        %1574 = vmax.xlane.f32.xlu0 %v1573
        %v1575 = vpop.xlane.xlu0 %1574
        %v1576 = vsel %vm1195, %v1548, -inf
        %1577 = vmax.xlane.f32.xlu0 %v1576
        %v1578 = vpop.xlane.xlu0 %1577
        %v1579 = vsel %vm1195, %v1553, -inf
        %1580 = vmax.xlane.f32.xlu0 %v1579
        %v1581 = vpop.xlane.xlu0 %1580
        %v1582 = vsel %vm1195, %v1556, -inf
        %1583 = vmax.xlane.f32.xlu0 %v1582
        %v1584 = vpop.xlane.xlu0 %1583
        %v1585 = vsel %vm1195, %v1561, -inf
        %1586 = vmax.xlane.f32.xlu0 %v1585
        %v1587 = vpop.xlane.xlu0 %1586
        %v1588 = vsel %vm1195, %v1564, -inf
        %1589 = vmax.xlane.f32.xlu0 %v1588
        %v1590 = vpop.xlane.xlu0 %1589
        %v1591 = vsub.f32 %v1537, %v1569
        %v1592 = vsub.f32 %v1540, %v1572
        %v1593 = vsub.f32 %v1545, %v1575
        %v1594 = vsub.f32 %v1548, %v1578
        %v1595 = vsub.f32 %v1553, %v1581
        %v1596 = vsub.f32 %v1556, %v1584
        %v1597 = vsub.f32 %v1561, %v1587
        %v1598 = vsub.f32 %v1564, %v1590
        %v1599 = vmul.f32 %v1591, 1.442695
        %v1600 = vpow.pop %v1599
        %v1601 = vmul.f32 %v1592, 1.442695
        %v1602 = vpow.pop %v1601
        %v1603 = vmul.f32 %v1593, 1.442695
        %v1604 = vpow.pop %v1603
        %v1605 = vmul.f32 %v1594, 1.442695
        %v1606 = vpow.pop %v1605
        %v1607 = vmul.f32 %v1595, 1.442695
        %v1608 = vpow.pop %v1607
        %v1609 = vmul.f32 %v1596, 1.442695
        %v1610 = vpow.pop %v1609
        %v1611 = vmul.f32 %v1597, 1.442695
        %v1612 = vpow.pop %v1611
        %v1613 = vmul.f32 %v1598, 1.442695
        %v1614 = vpow.pop %v1613
        %v1615 = vsel %vm1195, %v1600, 0.0
        %1616 = vadd.xlane.f32.xlu0 %v1615
        %v1617 = vpop.xlane.xlu0 %1616
        %v1618 = vsel %vm1195, %v1602, 0.0
        %1619 = vadd.xlane.f32.xlu0 %v1618
        %v1620 = vpop.xlane.xlu0 %1619
        %v1621 = vsel %vm1195, %v1604, 0.0
        %1622 = vadd.xlane.f32.xlu0 %v1621
        %v1623 = vpop.xlane.xlu0 %1622
        %v1624 = vsel %vm1195, %v1606, 0.0
        %1625 = vadd.xlane.f32.xlu0 %v1624
        %v1626 = vpop.xlane.xlu0 %1625
        %v1627 = vsel %vm1195, %v1608, 0.0
        %1628 = vadd.xlane.f32.xlu0 %v1627
        %v1629 = vpop.xlane.xlu0 %1628
        %v1630 = vsel %vm1195, %v1610, 0.0
        %1631 = vadd.xlane.f32.xlu0 %v1630
        %v1632 = vpop.xlane.xlu0 %1631
        %v1633 = vsel %vm1195, %v1612, 0.0
        %1634 = vadd.xlane.f32.xlu0 %v1633
        %v1635 = vpop.xlane.xlu0 %1634
        %v1636 = vsel %vm1195, %v1614, 0.0
        %1637 = vadd.xlane.f32.xlu0 %v1636
        %v1638 = vpop.xlane.xlu0 %1637
        %v1639 = vrcp.pop %v1617
        %v1640 = vrcp.pop %v1620
        %v1641 = vrcp.pop %v1623
        %v1642 = vrcp.pop %v1626
        %v1643 = vrcp.pop %v1629
        %v1644 = vrcp.pop %v1632
        %v1645 = vrcp.pop %v1635
        %v1646 = vrcp.pop %v1638
        %v1647 = vmul.f32 %v1600, %v1639
        %v1648 = vmul.f32 %v1602, %v1640
        %v1649 = vmul.f32 %v1604, %v1641
        %v1650 = vmul.f32 %v1606, %v1642
        %v1651 = vmul.f32 %v1608, %v1643
        %v1652 = vmul.f32 %v1610, %v1644
        %v1653 = vmul.f32 %v1612, %v1645
        %v1654 = vmul.f32 %v1614, %v1646
        %v1655 = vpack.c.bf16 %v1648, %v1647
        %v1656 = vpack.c.bf16 %v1650, %v1649
        %v1657 = vpack.c.bf16 %v1652, %v1651
        %v1658 = vpack.c.bf16 %v1654, %v1653
        %1663 = vrot.lane.b32.xlu0 %v1146, 64
        %v1664 = vpop.permute.xlu0 %1663
        %1665 = vrot.lane.b32.xlu0 %v1149, 64
        %v1666 = vpop.permute.xlu0 %1665
        %1667 = vrot.lane.b32.xlu0 %v1152, 64
        %v1668 = vpop.permute.xlu0 %1667
        %1669 = vrot.lane.b32.xlu0 %v1155, 64
        %v1670 = vpop.permute.xlu0 %1669
        %v1676 = vsel %vm1195, %v1655, 0
        %v1679 = vsel %vm1195, %v1656, 0
        %v1682 = vsel %vm1195, %v1657, 0
        %v1685 = vsel %vm1195, %v1658, 0
        %1687 = vmatprep.subr.bf16.mxu0 0
        %1688 = vmatpush1.bf16.msra.mxu0 %v1664
        %1689 = vmatprep.subr.bf16.mxu0 0
        %1690 = vmatpush1.bf16.msra.mxu0 %v1666
        %1691 = vmatprep.subr.bf16.mxu0 0
        %1692 = vmatpush1.bf16.msra.mxu0 %v1668
        %1693 = vmatprep.subr.bf16.mxu0 0
        %1694 = vmatpush1.bf16.msra.mxu0 %v1670
        %1695 = vmatprep.subr.bf16.mxu0 0
        %1696 = vmatpush1.bf16.msra.mxu0 0
        %1697 = vmatprep.subr.bf16.mxu0 0
        %1698 = vmatpush1.bf16.msra.mxu0 0
        %1699 = vmatprep.subr.bf16.mxu0 0
        %1700 = vmatpush1.bf16.msra.mxu0 0
        %1701 = vmatprep.subr.bf16.mxu0 0
        %1702 = vmatpush1.bf16.msra.mxu0 0
        %1703 = vmatprep.subr.bf16.mxu0 0
        %1704 = vmatpush1.bf16.msra.mxu0 0
        %1705 = vmatprep.subr.bf16.mxu0 0
        %1706 = vmatpush1.bf16.msra.mxu0 0
        %1707 = vmatprep.subr.bf16.mxu0 0
        %1708 = vmatpush1.bf16.msra.mxu0 0
        %1709 = vmatprep.subr.bf16.mxu0 0
        %1710 = vmatpush1.bf16.msra.mxu0 0
        %1711 = vmatprep.subr.bf16.mxu0 0
        %1712 = vmatpush1.bf16.msra.mxu0 0
        %1713 = vmatprep.subr.bf16.mxu0 0
        %1714 = vmatpush1.bf16.msra.mxu0 0
        %1715 = vmatprep.subr.bf16.mxu0 0
        %1716 = vmatpush1.bf16.msra.mxu0 0
        %1717 = vmatprep.subr.bf16.mxu0 0
        %1718 = vmatpush1.bf16.msra.mxu0 0
        %1719 = vmatprep.mubr.bf16.mxu0 0
        %1720 = vmatmul.mubr.bf16.gmra.mrb[0].mxu0 %v1676
        %v1721 = vpop.f32.mrb[0].mxu0
        %v1722 = vadd.f32 0.0, %v1721
        %v1723 = vpop.f32.mrb[0].mxu0
        %v1724 = vpop.f32.mrb[0].mxu0
        %v1725 = vadd.f32 0.0, %v1724
        %v1726 = vpop.f32.mrb[0].mxu0
        %1727 = vmatprep.mubr.bf16.mxu0 0
        %1728 = vmatmul.mubr.bf16.gmra.mrb[0].mxu0 %v1679
        %v1729 = vpop.f32.mrb[0].mxu0
        %v1730 = vadd.f32 0.0, %v1729
        %v1731 = vpop.f32.mrb[0].mxu0
        %v1732 = vpop.f32.mrb[0].mxu0
        %v1733 = vadd.f32 0.0, %v1732
        %v1734 = vpop.f32.mrb[0].mxu0
        %1735 = vmatprep.mubr.bf16.mxu0 0
        %1736 = vmatmul.mubr.bf16.gmra.mrb[0].mxu0 %v1682
        %v1737 = vpop.f32.mrb[0].mxu0
        %v1738 = vadd.f32 0.0, %v1737
        %v1739 = vpop.f32.mrb[0].mxu0
        %v1740 = vpop.f32.mrb[0].mxu0
        %v1741 = vadd.f32 0.0, %v1740
        %v1742 = vpop.f32.mrb[0].mxu0
        %1743 = vmatprep.mubr.bf16.mxu0 0
        %1744 = vmatmul.mubr.bf16.gmra.mrb[0].mxu0 %v1685
        %v1745 = vpop.f32.mrb[0].mxu0
        %v1746 = vadd.f32 0.0, %v1745
        %v1747 = vpop.f32.mrb[0].mxu0
        %v1748 = vpop.f32.mrb[0].mxu0
        %v1749 = vadd.f32 0.0, %v1748
        %v1750 = vpop.f32.mrb[0].mxu0
        %1751 = vdwg.mxu0
        %v1753 = vsel %vm1195, %v1156, 0
        %v1756 = vsel %vm1195, %v1159, 0
        %v1759 = vsel %vm1195, %v1162, 0
        %v1762 = vsel %vm1195, %v1165, 0
        %v1765 = vsel %vm1195, %v1157, 0
        %v1768 = vsel %vm1195, %v1160, 0
        %v1771 = vsel %vm1195, %v1163, 0
        %v1774 = vsel %vm1195, %v1166, 0
        %1776 = vmatprep.subr.bf16.mxu0 0
        %1777 = vmatpush1.bf16.xpose.msra.mxu0 %v1765
        %1778 = vmatprep.subr.bf16.mxu0 0
        %1779 = vmatpush1.bf16.xpose.msra.mxu0 %v1768
        %1780 = vmatprep.subr.bf16.mxu0 0
        %1781 = vmatpush1.bf16.xpose.msra.mxu0 %v1771
        %1782 = vmatprep.subr.bf16.mxu0 0
        %1783 = vmatpush1.bf16.xpose.msra.mxu0 %v1774
        %1784 = vmatprep.subr.bf16.mxu0 0
        %1785 = vmatpush1.bf16.xpose.msra.mxu0 0
        %1786 = vmatprep.subr.bf16.mxu0 0
        %1787 = vmatpush1.bf16.xpose.msra.mxu0 0
        %1788 = vmatprep.subr.bf16.mxu0 0
        %1789 = vmatpush1.bf16.xpose.msra.mxu0 0
        %1790 = vmatprep.subr.bf16.mxu0 0
        %1791 = vmatpush1.bf16.xpose.msra.mxu0 0
        %1792 = vmatprep.subr.bf16.mxu0 0
        %1793 = vmatpush1.bf16.xpose.msra.mxu0 0
        %1794 = vmatprep.subr.bf16.mxu0 0
        %1795 = vmatpush1.bf16.xpose.msra.mxu0 0
        %1796 = vmatprep.subr.bf16.mxu0 0
        %1797 = vmatpush1.bf16.xpose.msra.mxu0 0
        %1798 = vmatprep.subr.bf16.mxu0 0
        %1799 = vmatpush1.bf16.xpose.msra.mxu0 0
        %1800 = vmatprep.subr.bf16.mxu0 0
        %1801 = vmatpush1.bf16.xpose.msra.mxu0 0
        %1802 = vmatprep.subr.bf16.mxu0 0
        %1803 = vmatpush1.bf16.xpose.msra.mxu0 0
        %1804 = vmatprep.subr.bf16.mxu0 0
        %1805 = vmatpush1.bf16.xpose.msra.mxu0 0
        %1806 = vmatprep.subr.bf16.mxu0 0
        %1807 = vmatpush1.bf16.xpose.msra.mxu0 0
        %1808 = vmatprep.mubr.bf16.mxu0 0
        %1809 = vmatmul.mubr.bf16.gmra.mrb[0].mxu0 %v1753
        %v1810 = vpop.f32.mrb[0].mxu0
        %v1811 = vadd.f32 %v1187, %v1810
        %v1812 = vpop.f32.mrb[0].mxu0
        %v1813 = vpop.f32.mrb[0].mxu0
        %v1814 = vadd.f32 %v1188, %v1813
        %v1815 = vpop.f32.mrb[0].mxu0
        %1816 = vmatprep.mubr.bf16.mxu0 0
        %1817 = vmatmul.mubr.bf16.gmra.mrb[0].mxu0 %v1756
        %v1818 = vpop.f32.mrb[0].mxu0
        %v1819 = vadd.f32 %v1189, %v1818
        %v1820 = vpop.f32.mrb[0].mxu0
        %v1821 = vpop.f32.mrb[0].mxu0
        %v1822 = vadd.f32 %v1190, %v1821
        %v1823 = vpop.f32.mrb[0].mxu0
        %1824 = vmatprep.mubr.bf16.mxu0 0
        %1825 = vmatmul.mubr.bf16.gmra.mrb[0].mxu0 %v1759
        %v1826 = vpop.f32.mrb[0].mxu0
        %v1827 = vadd.f32 %v1191, %v1826
        %v1828 = vpop.f32.mrb[0].mxu0
        %v1829 = vpop.f32.mrb[0].mxu0
        %v1830 = vadd.f32 %v1192, %v1829
        %v1831 = vpop.f32.mrb[0].mxu0
        %1832 = vmatprep.mubr.bf16.mxu0 0
        %1833 = vmatmul.mubr.bf16.gmra.mrb[0].mxu0 %v1762
        %v1834 = vpop.f32.mrb[0].mxu0
        %v1835 = vadd.f32 %v1193, %v1834
        %v1836 = vpop.f32.mrb[0].mxu0
        %v1837 = vpop.f32.mrb[0].mxu0
        %v1838 = vadd.f32 %v1194, %v1837
        %v1839 = vpop.f32.mrb[0].mxu0
        %1840 = vdwg.mxu0
        %v1841 = vsel %vm1195, %v1811, -inf
        %1842 = vmax.xlane.f32.xlu0 %v1841
        %v1843 = vpop.xlane.xlu0 %1842
        %v1844 = vsel %vm1195, %v1814, -inf
        %1845 = vmax.xlane.f32.xlu0 %v1844
        %v1846 = vpop.xlane.xlu0 %1845
        %v1847 = vsel %vm1195, %v1819, -inf
        %1848 = vmax.xlane.f32.xlu0 %v1847
        %v1849 = vpop.xlane.xlu0 %1848
        %v1850 = vsel %vm1195, %v1822, -inf
        %1851 = vmax.xlane.f32.xlu0 %v1850
        %v1852 = vpop.xlane.xlu0 %1851
        %v1853 = vsel %vm1195, %v1827, -inf
        %1854 = vmax.xlane.f32.xlu0 %v1853
        %v1855 = vpop.xlane.xlu0 %1854
        %v1856 = vsel %vm1195, %v1830, -inf
        %1857 = vmax.xlane.f32.xlu0 %v1856
        %v1858 = vpop.xlane.xlu0 %1857
        %v1859 = vsel %vm1195, %v1835, -inf
        %1860 = vmax.xlane.f32.xlu0 %v1859
        %v1861 = vpop.xlane.xlu0 %1860
        %v1862 = vsel %vm1195, %v1838, -inf
        %1863 = vmax.xlane.f32.xlu0 %v1862
        %v1864 = vpop.xlane.xlu0 %1863
        %v1865 = vsub.f32 %v1811, %v1843
        %v1866 = vsub.f32 %v1814, %v1846
        %v1867 = vsub.f32 %v1819, %v1849
        %v1868 = vsub.f32 %v1822, %v1852
        %v1869 = vsub.f32 %v1827, %v1855
        %v1870 = vsub.f32 %v1830, %v1858
        %v1871 = vsub.f32 %v1835, %v1861
        %v1872 = vsub.f32 %v1838, %v1864
        %v1873 = vmul.f32 %v1865, 1.442695
        %v1874 = vpow.pop %v1873
        %v1875 = vmul.f32 %v1866, 1.442695
        %v1876 = vpow.pop %v1875
        %v1877 = vmul.f32 %v1867, 1.442695
        %v1878 = vpow.pop %v1877
        %v1879 = vmul.f32 %v1868, 1.442695
        %v1880 = vpow.pop %v1879
        %v1881 = vmul.f32 %v1869, 1.442695
        %v1882 = vpow.pop %v1881
        %v1883 = vmul.f32 %v1870, 1.442695
        %v1884 = vpow.pop %v1883
        %v1885 = vmul.f32 %v1871, 1.442695
        %v1886 = vpow.pop %v1885
        %v1887 = vmul.f32 %v1872, 1.442695
        %v1888 = vpow.pop %v1887
        %v1889 = vsel %vm1195, %v1874, 0.0
        %1890 = vadd.xlane.f32.xlu0 %v1889
        %v1891 = vpop.xlane.xlu0 %1890
        %v1892 = vsel %vm1195, %v1876, 0.0
        %1893 = vadd.xlane.f32.xlu0 %v1892
        %v1894 = vpop.xlane.xlu0 %1893
        %v1895 = vsel %vm1195, %v1878, 0.0
        %1896 = vadd.xlane.f32.xlu0 %v1895
        %v1897 = vpop.xlane.xlu0 %1896
        %v1898 = vsel %vm1195, %v1880, 0.0
        %1899 = vadd.xlane.f32.xlu0 %v1898
        %v1900 = vpop.xlane.xlu0 %1899
        %v1901 = vsel %vm1195, %v1882, 0.0
        %1902 = vadd.xlane.f32.xlu0 %v1901
        %v1903 = vpop.xlane.xlu0 %1902
        %v1904 = vsel %vm1195, %v1884, 0.0
        %1905 = vadd.xlane.f32.xlu0 %v1904
        %v1906 = vpop.xlane.xlu0 %1905
        %v1907 = vsel %vm1195, %v1886, 0.0
        %1908 = vadd.xlane.f32.xlu0 %v1907
        %v1909 = vpop.xlane.xlu0 %1908
        %v1910 = vsel %vm1195, %v1888, 0.0
        %1911 = vadd.xlane.f32.xlu0 %v1910
        %v1912 = vpop.xlane.xlu0 %1911
        %v1913 = vrcp.pop %v1891
        %v1914 = vrcp.pop %v1894
        %v1915 = vrcp.pop %v1897
        %v1916 = vrcp.pop %v1900
        %v1917 = vrcp.pop %v1903
        %v1918 = vrcp.pop %v1906
        %v1919 = vrcp.pop %v1909
        %v1920 = vrcp.pop %v1912
        %v1921 = vmul.f32 %v1874, %v1913
        %v1922 = vmul.f32 %v1876, %v1914
        %v1923 = vmul.f32 %v1878, %v1915
        %v1924 = vmul.f32 %v1880, %v1916
        %v1925 = vmul.f32 %v1882, %v1917
        %v1926 = vmul.f32 %v1884, %v1918
        %v1927 = vmul.f32 %v1886, %v1919
        %v1928 = vmul.f32 %v1888, %v1920
        %v1929 = vpack.c.bf16 %v1922, %v1921
        %v1930 = vpack.c.bf16 %v1924, %v1923
        %v1931 = vpack.c.bf16 %v1926, %v1925
        %v1932 = vpack.c.bf16 %v1928, %v1927
        %v1934 = vsel %vm1195, %v1929, 0
        %v1937 = vsel %vm1195, %v1930, 0
        %v1940 = vsel %vm1195, %v1931, 0
        %v1943 = vsel %vm1195, %v1932, 0
        %1945 = vmatprep.subr.bf16.mxu0 0
        %1946 = vmatpush1.bf16.msra.mxu0 %v1158
        %1947 = vmatprep.subr.bf16.mxu0 0
        %1948 = vmatpush1.bf16.msra.mxu0 %v1161
        %1949 = vmatprep.subr.bf16.mxu0 0
        %1950 = vmatpush1.bf16.msra.mxu0 %v1164
        %1951 = vmatprep.subr.bf16.mxu0 0
        %1952 = vmatpush1.bf16.msra.mxu0 %v1167
        %1953 = vmatprep.subr.bf16.mxu0 0
        %1954 = vmatpush1.bf16.msra.mxu0 0
        %1955 = vmatprep.subr.bf16.mxu0 0
        %1956 = vmatpush1.bf16.msra.mxu0 0
        %1957 = vmatprep.subr.bf16.mxu0 0
        %1958 = vmatpush1.bf16.msra.mxu0 0
        %1959 = vmatprep.subr.bf16.mxu0 0
        %1960 = vmatpush1.bf16.msra.mxu0 0
        %1961 = vmatprep.subr.bf16.mxu0 0
        %1962 = vmatpush1.bf16.msra.mxu0 0
        %1963 = vmatprep.subr.bf16.mxu0 0
        %1964 = vmatpush1.bf16.msra.mxu0 0
        %1965 = vmatprep.subr.bf16.mxu0 0
        %1966 = vmatpush1.bf16.msra.mxu0 0
        %1967 = vmatprep.subr.bf16.mxu0 0
        %1968 = vmatpush1.bf16.msra.mxu0 0
        %1969 = vmatprep.subr.bf16.mxu0 0
        %1970 = vmatpush1.bf16.msra.mxu0 0
        %1971 = vmatprep.subr.bf16.mxu0 0
        %1972 = vmatpush1.bf16.msra.mxu0 0
        %1973 = vmatprep.subr.bf16.mxu0 0
        %1974 = vmatpush1.bf16.msra.mxu0 0
        %1975 = vmatprep.subr.bf16.mxu0 0
        %1976 = vmatpush1.bf16.msra.mxu0 0
        %1977 = vmatprep.mubr.bf16.mxu0 0
        %1978 = vmatmul.mubr.bf16.gmra.mrb[0].mxu0 %v1934
        %v1979 = vpop.f32.mrb[0].mxu0
        %v1980 = vadd.f32 0.0, %v1979
        %v1981 = vpop.f32.mrb[0].mxu0
        %v1982 = vpop.f32.mrb[0].mxu0
        %v1983 = vadd.f32 0.0, %v1982
        %v1984 = vpop.f32.mrb[0].mxu0
        %1985 = vmatprep.mubr.bf16.mxu0 0
        %1986 = vmatmul.mubr.bf16.gmra.mrb[0].mxu0 %v1937
        %v1987 = vpop.f32.mrb[0].mxu0
        %v1988 = vadd.f32 0.0, %v1987
        %v1989 = vpop.f32.mrb[0].mxu0
        %v1990 = vpop.f32.mrb[0].mxu0
        %v1991 = vadd.f32 0.0, %v1990
        %v1992 = vpop.f32.mrb[0].mxu0
        %1993 = vmatprep.mubr.bf16.mxu0 0
        %1994 = vmatmul.mubr.bf16.gmra.mrb[0].mxu0 %v1940
        %v1995 = vpop.f32.mrb[0].mxu0
        %v1996 = vadd.f32 0.0, %v1995
        %v1997 = vpop.f32.mrb[0].mxu0
        %v1998 = vpop.f32.mrb[0].mxu0
        %v1999 = vadd.f32 0.0, %v1998
        %v2000 = vpop.f32.mrb[0].mxu0
        %2001 = vmatprep.mubr.bf16.mxu0 0
        %2002 = vmatmul.mubr.bf16.gmra.mrb[0].mxu0 %v1943
        %v2003 = vpop.f32.mrb[0].mxu0
        %v2004 = vadd.f32 0.0, %v2003
        %v2005 = vpop.f32.mrb[0].mxu0
        %v2006 = vpop.f32.mrb[0].mxu0
        %v2007 = vadd.f32 0.0, %v2006
        %v2008 = vpop.f32.mrb[0].mxu0
        %2009 = vdwg.mxu0
        %2014 = vrot.lane.b32.xlu0 %v1156, 64
        %v2015 = vpop.permute.xlu0 %2014
        %2016 = vrot.lane.b32.xlu0 %v1159, 64
        %v2017 = vpop.permute.xlu0 %2016
        %2018 = vrot.lane.b32.xlu0 %v1162, 64
        %v2019 = vpop.permute.xlu0 %2018
        %2020 = vrot.lane.b32.xlu0 %v1165, 64
        %v2021 = vpop.permute.xlu0 %2020
        %2026 = vrot.lane.b32.xlu0 %v1157, 64
        %v2027 = vpop.permute.xlu0 %2026
        %2028 = vrot.lane.b32.xlu0 %v1160, 64
        %v2029 = vpop.permute.xlu0 %2028
        %2030 = vrot.lane.b32.xlu0 %v1163, 64
        %v2031 = vpop.permute.xlu0 %2030
        %2032 = vrot.lane.b32.xlu0 %v1166, 64
        %v2033 = vpop.permute.xlu0 %2032
        %v2035 = vsel %vm1195, %v2015, 0
        %v2038 = vsel %vm1195, %v2017, 0
        %v2041 = vsel %vm1195, %v2019, 0
        %v2044 = vsel %vm1195, %v2021, 0
        %v2047 = vsel %vm1195, %v2027, 0
        %v2050 = vsel %vm1195, %v2029, 0
        %v2053 = vsel %vm1195, %v2031, 0
        %v2056 = vsel %vm1195, %v2033, 0
        %2058 = vmatprep.subr.bf16.mxu0 0
        %2059 = vmatpush1.bf16.xpose.msra.mxu0 %v2047
        %2060 = vmatprep.subr.bf16.mxu0 0
        %2061 = vmatpush1.bf16.xpose.msra.mxu0 %v2050
        %2062 = vmatprep.subr.bf16.mxu0 0
        %2063 = vmatpush1.bf16.xpose.msra.mxu0 %v2053
        %2064 = vmatprep.subr.bf16.mxu0 0
        %2065 = vmatpush1.bf16.xpose.msra.mxu0 %v2056
        %2066 = vmatprep.subr.bf16.mxu0 0
        %2067 = vmatpush1.bf16.xpose.msra.mxu0 0
        %2068 = vmatprep.subr.bf16.mxu0 0
        %2069 = vmatpush1.bf16.xpose.msra.mxu0 0
        %2070 = vmatprep.subr.bf16.mxu0 0
        %2071 = vmatpush1.bf16.xpose.msra.mxu0 0
        %2072 = vmatprep.subr.bf16.mxu0 0
        %2073 = vmatpush1.bf16.xpose.msra.mxu0 0
        %2074 = vmatprep.subr.bf16.mxu0 0
        %2075 = vmatpush1.bf16.xpose.msra.mxu0 0
        %2076 = vmatprep.subr.bf16.mxu0 0
        %2077 = vmatpush1.bf16.xpose.msra.mxu0 0
        %2078 = vmatprep.subr.bf16.mxu0 0
        %2079 = vmatpush1.bf16.xpose.msra.mxu0 0
        %2080 = vmatprep.subr.bf16.mxu0 0
        %2081 = vmatpush1.bf16.xpose.msra.mxu0 0
        %2082 = vmatprep.subr.bf16.mxu0 0
        %2083 = vmatpush1.bf16.xpose.msra.mxu0 0
        %2084 = vmatprep.subr.bf16.mxu0 0
        %2085 = vmatpush1.bf16.xpose.msra.mxu0 0
        %2086 = vmatprep.subr.bf16.mxu0 0
        %2087 = vmatpush1.bf16.xpose.msra.mxu0 0
        %2088 = vmatprep.subr.bf16.mxu0 0
        %2089 = vmatpush1.bf16.xpose.msra.mxu0 0
        %2090 = vmatprep.mubr.bf16.mxu0 0
        %2091 = vmatmul.mubr.bf16.gmra.mrb[0].mxu0 %v2035
        %v2092 = vpop.f32.mrb[0].mxu0
        %v2093 = vadd.f32 %v1187, %v2092
        %v2094 = vpop.f32.mrb[0].mxu0
        %v2095 = vpop.f32.mrb[0].mxu0
        %v2096 = vadd.f32 %v1188, %v2095
        %v2097 = vpop.f32.mrb[0].mxu0
        %2098 = vmatprep.mubr.bf16.mxu0 0
        %2099 = vmatmul.mubr.bf16.gmra.mrb[0].mxu0 %v2038
        %v2100 = vpop.f32.mrb[0].mxu0
        %v2101 = vadd.f32 %v1189, %v2100
        %v2102 = vpop.f32.mrb[0].mxu0
        %v2103 = vpop.f32.mrb[0].mxu0
        %v2104 = vadd.f32 %v1190, %v2103
        %v2105 = vpop.f32.mrb[0].mxu0
        %2106 = vmatprep.mubr.bf16.mxu0 0
        %2107 = vmatmul.mubr.bf16.gmra.mrb[0].mxu0 %v2041
        %v2108 = vpop.f32.mrb[0].mxu0
        %v2109 = vadd.f32 %v1191, %v2108
        %v2110 = vpop.f32.mrb[0].mxu0
        %v2111 = vpop.f32.mrb[0].mxu0
        %v2112 = vadd.f32 %v1192, %v2111
        %v2113 = vpop.f32.mrb[0].mxu0
        %2114 = vmatprep.mubr.bf16.mxu0 0
        %2115 = vmatmul.mubr.bf16.gmra.mrb[0].mxu0 %v2044
        %v2116 = vpop.f32.mrb[0].mxu0
        %v2117 = vadd.f32 %v1193, %v2116
        %v2118 = vpop.f32.mrb[0].mxu0
        %v2119 = vpop.f32.mrb[0].mxu0
        %v2120 = vadd.f32 %v1194, %v2119
        %v2121 = vpop.f32.mrb[0].mxu0
        %2122 = vdwg.mxu0
        %v2123 = vsel %vm1195, %v2093, -inf
        %2124 = vmax.xlane.f32.xlu0 %v2123
        %v2125 = vpop.xlane.xlu0 %2124
        %v2126 = vsel %vm1195, %v2096, -inf
        %2127 = vmax.xlane.f32.xlu0 %v2126
        %v2128 = vpop.xlane.xlu0 %2127
        %v2129 = vsel %vm1195, %v2101, -inf
        %2130 = vmax.xlane.f32.xlu0 %v2129
        %v2131 = vpop.xlane.xlu0 %2130
        %v2132 = vsel %vm1195, %v2104, -inf
        %2133 = vmax.xlane.f32.xlu0 %v2132
        %v2134 = vpop.xlane.xlu0 %2133
        %v2135 = vsel %vm1195, %v2109, -inf
        %2136 = vmax.xlane.f32.xlu0 %v2135
        %v2137 = vpop.xlane.xlu0 %2136
        %v2138 = vsel %vm1195, %v2112, -inf
        %2139 = vmax.xlane.f32.xlu0 %v2138
        %v2140 = vpop.xlane.xlu0 %2139
        %v2141 = vsel %vm1195, %v2117, -inf
        %2142 = vmax.xlane.f32.xlu0 %v2141
        %v2143 = vpop.xlane.xlu0 %2142
        %v2144 = vsel %vm1195, %v2120, -inf
        %2145 = vmax.xlane.f32.xlu0 %v2144
        %v2146 = vpop.xlane.xlu0 %2145
        %v2147 = vsub.f32 %v2093, %v2125
        %v2148 = vsub.f32 %v2096, %v2128
        %v2149 = vsub.f32 %v2101, %v2131
        %v2150 = vsub.f32 %v2104, %v2134
        %v2151 = vsub.f32 %v2109, %v2137
        %v2152 = vsub.f32 %v2112, %v2140
        %v2153 = vsub.f32 %v2117, %v2143
        %v2154 = vsub.f32 %v2120, %v2146
        %v2155 = vmul.f32 %v2147, 1.442695
        %v2156 = vpow.pop %v2155
        %v2157 = vmul.f32 %v2148, 1.442695
        %v2158 = vpow.pop %v2157
        %v2159 = vmul.f32 %v2149, 1.442695
        %v2160 = vpow.pop %v2159
        %v2161 = vmul.f32 %v2150, 1.442695
        %v2162 = vpow.pop %v2161
        %v2163 = vmul.f32 %v2151, 1.442695
        %v2164 = vpow.pop %v2163
        %v2165 = vmul.f32 %v2152, 1.442695
        %v2166 = vpow.pop %v2165
        %v2167 = vmul.f32 %v2153, 1.442695
        %v2168 = vpow.pop %v2167
        %v2169 = vmul.f32 %v2154, 1.442695
        %v2170 = vpow.pop %v2169
        %v2171 = vsel %vm1195, %v2156, 0.0
        %2172 = vadd.xlane.f32.xlu0 %v2171
        %v2173 = vpop.xlane.xlu0 %2172
        %v2174 = vsel %vm1195, %v2158, 0.0
        %2175 = vadd.xlane.f32.xlu0 %v2174
        %v2176 = vpop.xlane.xlu0 %2175
        %v2177 = vsel %vm1195, %v2160, 0.0
        %2178 = vadd.xlane.f32.xlu0 %v2177
        %v2179 = vpop.xlane.xlu0 %2178
        %v2180 = vsel %vm1195, %v2162, 0.0
        %2181 = vadd.xlane.f32.xlu0 %v2180
        %v2182 = vpop.xlane.xlu0 %2181
        %v2183 = vsel %vm1195, %v2164, 0.0
        %2184 = vadd.xlane.f32.xlu0 %v2183
        %v2185 = vpop.xlane.xlu0 %2184
        %v2186 = vsel %vm1195, %v2166, 0.0
        %2187 = vadd.xlane.f32.xlu0 %v2186
        %v2188 = vpop.xlane.xlu0 %2187
        %v2189 = vsel %vm1195, %v2168, 0.0
        %2190 = vadd.xlane.f32.xlu0 %v2189
        %v2191 = vpop.xlane.xlu0 %2190
        %v2192 = vsel %vm1195, %v2170, 0.0
        %2193 = vadd.xlane.f32.xlu0 %v2192
        %v2194 = vpop.xlane.xlu0 %2193
        %v2195 = vrcp.pop %v2173
        %v2196 = vrcp.pop %v2176
        %v2197 = vrcp.pop %v2179
        %v2198 = vrcp.pop %v2182
        %v2199 = vrcp.pop %v2185
        %v2200 = vrcp.pop %v2188
        %v2201 = vrcp.pop %v2191
        %v2202 = vrcp.pop %v2194
        %v2203 = vmul.f32 %v2156, %v2195
        %v2204 = vmul.f32 %v2158, %v2196
        %v2205 = vmul.f32 %v2160, %v2197
        %v2206 = vmul.f32 %v2162, %v2198
        %v2207 = vmul.f32 %v2164, %v2199
        %v2208 = vmul.f32 %v2166, %v2200
        %v2209 = vmul.f32 %v2168, %v2201
        %v2210 = vmul.f32 %v2170, %v2202
        %v2211 = vpack.c.bf16 %v2204, %v2203
        %v2212 = vpack.c.bf16 %v2206, %v2205
        %v2213 = vpack.c.bf16 %v2208, %v2207
        %v2214 = vpack.c.bf16 %v2210, %v2209
        %2219 = vrot.lane.b32.xlu0 %v1158, 64
        %v2220 = vpop.permute.xlu0 %2219
        %2221 = vrot.lane.b32.xlu0 %v1161, 64
        %v2222 = vpop.permute.xlu0 %2221
        %2223 = vrot.lane.b32.xlu0 %v1164, 64
        %v2224 = vpop.permute.xlu0 %2223
        %2225 = vrot.lane.b32.xlu0 %v1167, 64
        %v2226 = vpop.permute.xlu0 %2225
        %v2232 = vsel %vm1195, %v2211, 0
        %v2235 = vsel %vm1195, %v2212, 0
        %v2238 = vsel %vm1195, %v2213, 0
        %v2241 = vsel %vm1195, %v2214, 0
        %2243 = vmatprep.subr.bf16.mxu0 0
        %2244 = vmatpush1.bf16.msra.mxu0 %v2220
        %2245 = vmatprep.subr.bf16.mxu0 0
        %2246 = vmatpush1.bf16.msra.mxu0 %v2222
        %2247 = vmatprep.subr.bf16.mxu0 0
        %2248 = vmatpush1.bf16.msra.mxu0 %v2224
        %2249 = vmatprep.subr.bf16.mxu0 0
        %2250 = vmatpush1.bf16.msra.mxu0 %v2226
        %2251 = vmatprep.subr.bf16.mxu0 0
        %2252 = vmatpush1.bf16.msra.mxu0 0
        %2253 = vmatprep.subr.bf16.mxu0 0
        %2254 = vmatpush1.bf16.msra.mxu0 0
        %2255 = vmatprep.subr.bf16.mxu0 0
        %2256 = vmatpush1.bf16.msra.mxu0 0
        %2257 = vmatprep.subr.bf16.mxu0 0
        %2258 = vmatpush1.bf16.msra.mxu0 0
        %2259 = vmatprep.subr.bf16.mxu0 0
        %2260 = vmatpush1.bf16.msra.mxu0 0
        %2261 = vmatprep.subr.bf16.mxu0 0
        %2262 = vmatpush1.bf16.msra.mxu0 0
        %2263 = vmatprep.subr.bf16.mxu0 0
        %2264 = vmatpush1.bf16.msra.mxu0 0
        %2265 = vmatprep.subr.bf16.mxu0 0
        %2266 = vmatpush1.bf16.msra.mxu0 0
        %2267 = vmatprep.subr.bf16.mxu0 0
        %2268 = vmatpush1.bf16.msra.mxu0 0
        %2269 = vmatprep.subr.bf16.mxu0 0
        %2270 = vmatpush1.bf16.msra.mxu0 0
        %2271 = vmatprep.subr.bf16.mxu0 0
        %2272 = vmatpush1.bf16.msra.mxu0 0
        %2273 = vmatprep.subr.bf16.mxu0 0
        %2274 = vmatpush1.bf16.msra.mxu0 0
        %2275 = vmatprep.mubr.bf16.mxu0 0
        %2276 = vmatmul.mubr.bf16.gmra.mrb[0].mxu0 %v2232
        %v2277 = vpop.f32.mrb[0].mxu0
        %v2278 = vadd.f32 0.0, %v2277
        %v2279 = vpop.f32.mrb[0].mxu0
        %v2280 = vpop.f32.mrb[0].mxu0
        %v2281 = vadd.f32 0.0, %v2280
        %v2282 = vpop.f32.mrb[0].mxu0
        %2283 = vmatprep.mubr.bf16.mxu0 0
        %2284 = vmatmul.mubr.bf16.gmra.mrb[0].mxu0 %v2235
        %v2285 = vpop.f32.mrb[0].mxu0
        %v2286 = vadd.f32 0.0, %v2285
        %v2287 = vpop.f32.mrb[0].mxu0
        %v2288 = vpop.f32.mrb[0].mxu0
        %v2289 = vadd.f32 0.0, %v2288
        %v2290 = vpop.f32.mrb[0].mxu0
        %2291 = vmatprep.mubr.bf16.mxu0 0
        %2292 = vmatmul.mubr.bf16.gmra.mrb[0].mxu0 %v2238
        %v2293 = vpop.f32.mrb[0].mxu0
        %v2294 = vadd.f32 0.0, %v2293
        %v2295 = vpop.f32.mrb[0].mxu0
        %v2296 = vpop.f32.mrb[0].mxu0
        %v2297 = vadd.f32 0.0, %v2296
        %v2298 = vpop.f32.mrb[0].mxu0
        %2299 = vmatprep.mubr.bf16.mxu0 0
        %2300 = vmatmul.mubr.bf16.gmra.mrb[0].mxu0 %v2241
        %v2301 = vpop.f32.mrb[0].mxu0
        %v2302 = vadd.f32 0.0, %v2301
        %v2303 = vpop.f32.mrb[0].mxu0
        %v2304 = vpop.f32.mrb[0].mxu0
        %v2305 = vadd.f32 0.0, %v2304
        %v2306 = vpop.f32.mrb[0].mxu0
        %2307 = vdwg.mxu0
        %2316 = vrot.lane.b32.xlu0 %v1722, 64
        %v2317 = vpop.permute.xlu0 %2316
        %2318 = vrot.lane.b32.xlu0 %v1725, 64
        %v2319 = vpop.permute.xlu0 %2318
        %2320 = vrot.lane.b32.xlu0 %v1730, 64
        %v2321 = vpop.permute.xlu0 %2320
        %2322 = vrot.lane.b32.xlu0 %v1733, 64
        %v2323 = vpop.permute.xlu0 %2322
        %2324 = vrot.lane.b32.xlu0 %v1738, 64
        %v2325 = vpop.permute.xlu0 %2324
        %2326 = vrot.lane.b32.xlu0 %v1741, 64
        %v2327 = vpop.permute.xlu0 %2326
        %2328 = vrot.lane.b32.xlu0 %v1746, 64
        %v2329 = vpop.permute.xlu0 %2328
        %2330 = vrot.lane.b32.xlu0 %v1749, 64
        %v2331 = vpop.permute.xlu0 %2330
        %v2340 = vsel %vm1195, %v1424, %v2317
        %v2341 = vsel %vm1195, %v1427, %v2319
        %v2342 = vsel %vm1195, %v1432, %v2321
        %v2343 = vsel %vm1195, %v1435, %v2323
        %v2344 = vsel %vm1195, %v1440, %v2325
        %v2345 = vsel %vm1195, %v1443, %v2327
        %v2346 = vsel %vm1195, %v1448, %v2329
        %v2347 = vsel %vm1195, %v1451, %v2331
        %2356 = vrot.lane.b32.xlu0 %v2278, 64
        %v2357 = vpop.permute.xlu0 %2356
        %2358 = vrot.lane.b32.xlu0 %v2281, 64
        %v2359 = vpop.permute.xlu0 %2358
        %2360 = vrot.lane.b32.xlu0 %v2286, 64
        %v2361 = vpop.permute.xlu0 %2360
        %2362 = vrot.lane.b32.xlu0 %v2289, 64
        %v2363 = vpop.permute.xlu0 %2362
        %2364 = vrot.lane.b32.xlu0 %v2294, 64
        %v2365 = vpop.permute.xlu0 %2364
        %2366 = vrot.lane.b32.xlu0 %v2297, 64
        %v2367 = vpop.permute.xlu0 %2366
        %2368 = vrot.lane.b32.xlu0 %v2302, 64
        %v2369 = vpop.permute.xlu0 %2368
        %2370 = vrot.lane.b32.xlu0 %v2305, 64
        %v2371 = vpop.permute.xlu0 %2370
        %v2380 = vsel %vm1195, %v1980, %v2357
        %v2381 = vsel %vm1195, %v1983, %v2359
        %v2382 = vsel %vm1195, %v1988, %v2361
        %v2383 = vsel %vm1195, %v1991, %v2363
        %v2384 = vsel %vm1195, %v1996, %v2365
        %v2385 = vsel %vm1195, %v1999, %v2367
        %v2386 = vsel %vm1195, %v2004, %v2369
        %v2387 = vsel %vm1195, %v2007, %v2371
        %v2388 = vpack.c.bf16 %v2341, %v2340
        %v2389 = vpack.c.bf16 %v2343, %v2342
        %v2390 = vpack.c.bf16 %v2345, %v2344
        %v2391 = vpack.c.bf16 %v2347, %v2346
        %v2392 = vpack.c.bf16 %v2381, %v2380
        %v2393 = vpack.c.bf16 %v2383, %v2382
        %v2394 = vpack.c.bf16 %v2385, %v2384
        %v2395 = vpack.c.bf16 %v2387, %v2386
        %v2396 = vld [vmem:[%s444] sm:$0xf]
        %v2397 = vld [vmem:[%s444 + $0x4] sm:$0xf]
        %v2398 = vld [vmem:[%s444 + $0x8] sm:$0xf]
        %v2399 = vld [vmem:[%s444 + $0xc] sm:$0xf]
        %v2400 = vld [vmem:[%s444 + $0x10] sm:$0xf]
        %v2401 = vld [vmem:[%s444 + $0x14] sm:$0xf]
        %v2402 = vld [vmem:[%s444 + $0x18] sm:$0xf]
        %v2403 = vld [vmem:[%s444 + $0x1c] sm:$0xf]
        %v2404 = vld [vmem:[%s444 + $0x20] sm:$0xf]
        %v2405 = vld [vmem:[%s444 + $0x24] sm:$0xf]
        %v2406 = vld [vmem:[%s444 + $0x28] sm:$0xf]
        %v2407 = vld [vmem:[%s444 + $0x2c] sm:$0xf]
        %v2408 = vld [vmem:[%s444 + $0x30] sm:$0xf]
        %v2409 = vld [vmem:[%s444 + $0x34] sm:$0xf]
        %v2410 = vld [vmem:[%s444 + $0x38] sm:$0xf]
        %v2411 = vld [vmem:[%s444 + $0x3c] sm:$0xf]
        %v2428 = vunpack.c.l.b16 %v2396
        %v2429 = vunpack.c.l.b16 %v2397
        %v2430 = vunpack.c.l.b16 %v2398
        %v2431 = vunpack.c.l.b16 %v2399
        %v2432 = vunpack.c.l.b16 %v2400
        %v2433 = vunpack.c.l.b16 %v2401
        %v2434 = vunpack.c.l.b16 %v2402
        %v2435 = vunpack.c.l.b16 %v2403
        %v2436 = vunpack.c.l.b16 %v2404
        %v2437 = vunpack.c.l.b16 %v2405
        %v2438 = vunpack.c.l.b16 %v2406
        %v2439 = vunpack.c.l.b16 %v2407
        %v2440 = vunpack.c.l.b16 %v2408
        %v2441 = vunpack.c.l.b16 %v2409
        %v2442 = vunpack.c.l.b16 %v2410
        %v2443 = vunpack.c.l.b16 %v2411
        %v2444 = vpack.c.b16 %v2429, %v2428
        %v2445 = vpack.c.b16 %v2431, %v2430
        %v2446 = vpack.c.b16 %v2433, %v2432
        %v2447 = vpack.c.b16 %v2435, %v2434
        %v2448 = vpack.c.b16 %v2437, %v2436
        %v2449 = vpack.c.b16 %v2439, %v2438
        %v2450 = vpack.c.b16 %v2441, %v2440
        %v2451 = vpack.c.b16 %v2443, %v2442
        %2460 = vmatprep.subr.bf16.mxu0 0
        %2461 = vmatpush1.bf16.msra.mxu0 %v2444
        %2462 = vmatprep.subr.bf16.mxu0 0
        %2463 = vmatpush1.bf16.msra.mxu0 %v2445
        %2464 = vmatprep.subr.bf16.mxu0 0
        %2465 = vmatpush1.bf16.msra.mxu0 %v2446
        %2466 = vmatprep.subr.bf16.mxu0 0
        %2467 = vmatpush1.bf16.msra.mxu0 %v2447
        %2468 = vmatprep.subr.bf16.mxu0 0
        %2469 = vmatpush1.bf16.msra.mxu0 %v2448
        %2470 = vmatprep.subr.bf16.mxu0 0
        %2471 = vmatpush1.bf16.msra.mxu0 %v2449
        %2472 = vmatprep.subr.bf16.mxu0 0
        %2473 = vmatpush1.bf16.msra.mxu0 %v2450
        %2474 = vmatprep.subr.bf16.mxu0 0
        %2475 = vmatpush1.bf16.msra.mxu0 %v2451
        %2476 = vmatprep.subr.bf16.mxu0 0
        %2477 = vmatpush1.bf16.msra.mxu0 0
        %2478 = vmatprep.subr.bf16.mxu0 0
        %2479 = vmatpush1.bf16.msra.mxu0 0
        %2480 = vmatprep.subr.bf16.mxu0 0
        %2481 = vmatpush1.bf16.msra.mxu0 0
        %2482 = vmatprep.subr.bf16.mxu0 0
        %2483 = vmatpush1.bf16.msra.mxu0 0
        %2484 = vmatprep.subr.bf16.mxu0 0
        %2485 = vmatpush1.bf16.msra.mxu0 0
        %2486 = vmatprep.subr.bf16.mxu0 0
        %2487 = vmatpush1.bf16.msra.mxu0 0
        %2488 = vmatprep.subr.bf16.mxu0 0
        %2489 = vmatpush1.bf16.msra.mxu0 0
        %2490 = vmatprep.subr.bf16.mxu0 0
        %2491 = vmatpush1.bf16.msra.mxu0 0
        %2492 = vmatprep.mubr.bf16.mxu0 0
        %2493 = vmatmul.mubr.bf16.gmra.mrb[0].mxu0 %v2388
        %v2494 = vpop.f32.mrb[0].mxu0
        %v2495 = vadd.f32 0.0, %v2494
        %v2496 = vpop.f32.mrb[0].mxu0
        %v2497 = vpop.f32.mrb[0].mxu0
        %v2498 = vadd.f32 0.0, %v2497
        %v2499 = vpop.f32.mrb[0].mxu0
        %2500 = vmatprep.mubr.bf16.mxu0 0
        %2501 = vmatmul.mubr.bf16.gmra.mrb[0].mxu0 %v2389
        %v2502 = vpop.f32.mrb[0].mxu0
        %v2503 = vadd.f32 0.0, %v2502
        %v2504 = vpop.f32.mrb[0].mxu0
        %v2505 = vpop.f32.mrb[0].mxu0
        %v2506 = vadd.f32 0.0, %v2505
        %v2507 = vpop.f32.mrb[0].mxu0
        %2508 = vmatprep.mubr.bf16.mxu0 0
        %2509 = vmatmul.mubr.bf16.gmra.mrb[0].mxu0 %v2390
        %v2510 = vpop.f32.mrb[0].mxu0
        %v2511 = vadd.f32 0.0, %v2510
        %v2512 = vpop.f32.mrb[0].mxu0
        %v2513 = vpop.f32.mrb[0].mxu0
        %v2514 = vadd.f32 0.0, %v2513
        %v2515 = vpop.f32.mrb[0].mxu0
        %2516 = vmatprep.mubr.bf16.mxu0 0
        %2517 = vmatmul.mubr.bf16.gmra.mrb[0].mxu0 %v2391
        %v2518 = vpop.f32.mrb[0].mxu0
        %v2519 = vadd.f32 0.0, %v2518
        %v2520 = vpop.f32.mrb[0].mxu0
        %v2521 = vpop.f32.mrb[0].mxu0
        %v2522 = vadd.f32 0.0, %v2521
        %v2523 = vpop.f32.mrb[0].mxu0
        %2524 = vmatprep.mubr.bf16.mxu0 0
        %2525 = vmatmul.mubr.bf16.gmra.mrb[0].mxu0 %v2392
        %v2526 = vpop.f32.mrb[0].mxu0
        %v2527 = vadd.f32 0.0, %v2526
        %v2528 = vpop.f32.mrb[0].mxu0
        %v2529 = vpop.f32.mrb[0].mxu0
        %v2530 = vadd.f32 0.0, %v2529
        %v2531 = vpop.f32.mrb[0].mxu0
        %2532 = vmatprep.mubr.bf16.mxu0 0
        %2533 = vmatmul.mubr.bf16.gmra.mrb[0].mxu0 %v2393
        %v2534 = vpop.f32.mrb[0].mxu0
        %v2535 = vadd.f32 0.0, %v2534
        %v2536 = vpop.f32.mrb[0].mxu0
        %v2537 = vpop.f32.mrb[0].mxu0
        %v2538 = vadd.f32 0.0, %v2537
        %v2539 = vpop.f32.mrb[0].mxu0
        %2540 = vmatprep.mubr.bf16.mxu0 0
        %2541 = vmatmul.mubr.bf16.gmra.mrb[0].mxu0 %v2394
        %v2542 = vpop.f32.mrb[0].mxu0
        %v2543 = vadd.f32 0.0, %v2542
        %v2544 = vpop.f32.mrb[0].mxu0
        %v2545 = vpop.f32.mrb[0].mxu0
        %v2546 = vadd.f32 0.0, %v2545
        %v2547 = vpop.f32.mrb[0].mxu0
        %2548 = vmatprep.mubr.bf16.mxu0 0
        %2549 = vmatmul.mubr.bf16.gmra.mrb[0].mxu0 %v2395
        %v2550 = vpop.f32.mrb[0].mxu0
        %v2551 = vadd.f32 0.0, %v2550
        %v2552 = vpop.f32.mrb[0].mxu0
        %v2553 = vpop.f32.mrb[0].mxu0
        %v2554 = vadd.f32 0.0, %v2553
        %v2555 = vpop.f32.mrb[0].mxu0
        %2556 = vdwg.mxu0
        %v2557 = vadd.f32 %v498, %v2495
        %v2558 = vadd.f32 %v499, %v2498
        %v2559 = vadd.f32 %v500, %v2503
        %v2560 = vadd.f32 %v501, %v2506
        %v2561 = vadd.f32 %v502, %v2511
        %v2562 = vadd.f32 %v503, %v2514
        %v2563 = vadd.f32 %v504, %v2519
        %v2564 = vadd.f32 %v505, %v2522
        %v2565 = vadd.f32 %v506, %v2527
        %v2566 = vadd.f32 %v507, %v2530
        %v2567 = vadd.f32 %v508, %v2535
        %v2568 = vadd.f32 %v509, %v2538
        %v2569 = vadd.f32 %v510, %v2543
        %v2570 = vadd.f32 %v511, %v2546
        %v2571 = vadd.f32 %v512, %v2551
        %v2572 = vadd.f32 %v513, %v2554
        %v2573 = vlaneseq
        %v2574 = vshrl.u32 %v2573, 7
        %v2575 = vsub.s32 2, %v2574
        %v2576 = vrot.slane %v514, %v2575
        %v2577 = vadd.f32 %v2557, %v2576
        %v2578 = vadd.f32 %v2558, %v2576
        %v2579 = vadd.f32 %v2559, %v2576
        %v2580 = vadd.f32 %v2560, %v2576
        %v2581 = vadd.f32 %v2561, %v2576
        %v2582 = vadd.f32 %v2562, %v2576
        %v2583 = vadd.f32 %v2563, %v2576
        %v2584 = vadd.f32 %v2564, %v2576
        %v2585 = vadd.f32 %v2565, %v2576
        %v2586 = vadd.f32 %v2566, %v2576
        %v2587 = vadd.f32 %v2567, %v2576
        %v2588 = vadd.f32 %v2568, %v2576
        %v2589 = vadd.f32 %v2569, %v2576
        %v2590 = vadd.f32 %v2570, %v2576
        %v2591 = vadd.f32 %v2571, %v2576
        %v2592 = vadd.f32 %v2572, %v2576
        %2593 = vadd.xlane.f32.xlu0 %v2577
        %v2594 = vpop.xlane.xlu0 %2593
        %2595 = vadd.xlane.f32.xlu0 %v2578
        %v2596 = vpop.xlane.xlu0 %2595
        %2597 = vadd.xlane.f32.xlu0 %v2579
        %v2598 = vpop.xlane.xlu0 %2597
        %2599 = vadd.xlane.f32.xlu0 %v2580
        %v2600 = vpop.xlane.xlu0 %2599
        %2601 = vadd.xlane.f32.xlu0 %v2581
        %v2602 = vpop.xlane.xlu0 %2601
        %2603 = vadd.xlane.f32.xlu0 %v2582
        %v2604 = vpop.xlane.xlu0 %2603
        %2605 = vadd.xlane.f32.xlu0 %v2583
        %v2606 = vpop.xlane.xlu0 %2605
        %2607 = vadd.xlane.f32.xlu0 %v2584
        %v2608 = vpop.xlane.xlu0 %2607
        %2609 = vadd.xlane.f32.xlu0 %v2585
        %v2610 = vpop.xlane.xlu0 %2609
        %2611 = vadd.xlane.f32.xlu0 %v2586
        %v2612 = vpop.xlane.xlu0 %2611
        %2613 = vadd.xlane.f32.xlu0 %v2587
        %v2614 = vpop.xlane.xlu0 %2613
        %2615 = vadd.xlane.f32.xlu0 %v2588
        %v2616 = vpop.xlane.xlu0 %2615
        %2617 = vadd.xlane.f32.xlu0 %v2589
        %v2618 = vpop.xlane.xlu0 %2617
        %2619 = vadd.xlane.f32.xlu0 %v2590
        %v2620 = vpop.xlane.xlu0 %2619
        %2621 = vadd.xlane.f32.xlu0 %v2591
        %v2622 = vpop.xlane.xlu0 %2621
        %2623 = vadd.xlane.f32.xlu0 %v2592
        %v2624 = vpop.xlane.xlu0 %2623
        %v2625 = vmul.f32 %v2577, %v2577
        %v2626 = vmul.f32 %v2578, %v2578
        %v2627 = vmul.f32 %v2579, %v2579
        %v2628 = vmul.f32 %v2580, %v2580
        %v2629 = vmul.f32 %v2581, %v2581
        %v2630 = vmul.f32 %v2582, %v2582
        %v2631 = vmul.f32 %v2583, %v2583
        %v2632 = vmul.f32 %v2584, %v2584
        %v2633 = vmul.f32 %v2585, %v2585
        %v2634 = vmul.f32 %v2586, %v2586
        %v2635 = vmul.f32 %v2587, %v2587
        %v2636 = vmul.f32 %v2588, %v2588
        %v2637 = vmul.f32 %v2589, %v2589
        %v2638 = vmul.f32 %v2590, %v2590
        %v2639 = vmul.f32 %v2591, %v2591
        %v2640 = vmul.f32 %v2592, %v2592
        %2641 = vadd.xlane.f32.xlu0 %v2625
        %v2642 = vpop.xlane.xlu0 %2641
        %2643 = vadd.xlane.f32.xlu0 %v2626
        %v2644 = vpop.xlane.xlu0 %2643
        %2645 = vadd.xlane.f32.xlu0 %v2627
        %v2646 = vpop.xlane.xlu0 %2645
        %2647 = vadd.xlane.f32.xlu0 %v2628
        %v2648 = vpop.xlane.xlu0 %2647
        %2649 = vadd.xlane.f32.xlu0 %v2629
        %v2650 = vpop.xlane.xlu0 %2649
        %2651 = vadd.xlane.f32.xlu0 %v2630
        %v2652 = vpop.xlane.xlu0 %2651
        %2653 = vadd.xlane.f32.xlu0 %v2631
        %v2654 = vpop.xlane.xlu0 %2653
        %2655 = vadd.xlane.f32.xlu0 %v2632
        %v2656 = vpop.xlane.xlu0 %2655
        %2657 = vadd.xlane.f32.xlu0 %v2633
        %v2658 = vpop.xlane.xlu0 %2657
        %2659 = vadd.xlane.f32.xlu0 %v2634
        %v2660 = vpop.xlane.xlu0 %2659
        %2661 = vadd.xlane.f32.xlu0 %v2635
        %v2662 = vpop.xlane.xlu0 %2661
        %2663 = vadd.xlane.f32.xlu0 %v2636
        %v2664 = vpop.xlane.xlu0 %2663
        %2665 = vadd.xlane.f32.xlu0 %v2637
        %v2666 = vpop.xlane.xlu0 %2665
        %2667 = vadd.xlane.f32.xlu0 %v2638
        %v2668 = vpop.xlane.xlu0 %2667
        %2669 = vadd.xlane.f32.xlu0 %v2639
        %v2670 = vpop.xlane.xlu0 %2669
        %2671 = vadd.xlane.f32.xlu0 %v2640
        %v2672 = vpop.xlane.xlu0 %2671
        %v2673 = vmul.f32 %v2594, 0.0078125
        %v2674 = vmul.f32 %v2596, 0.0078125
        %v2675 = vmul.f32 %v2598, 0.0078125
        %v2676 = vmul.f32 %v2600, 0.0078125
        %v2677 = vmul.f32 %v2602, 0.0078125
        %v2678 = vmul.f32 %v2604, 0.0078125
        %v2679 = vmul.f32 %v2606, 0.0078125
        %v2680 = vmul.f32 %v2608, 0.0078125
        %v2681 = vmul.f32 %v2610, 0.0078125
        %v2682 = vmul.f32 %v2612, 0.0078125
        %v2683 = vmul.f32 %v2614, 0.0078125
        %v2684 = vmul.f32 %v2616, 0.0078125
        %v2685 = vmul.f32 %v2618, 0.0078125
        %v2686 = vmul.f32 %v2620, 0.0078125
        %v2687 = vmul.f32 %v2622, 0.0078125
        %v2688 = vmul.f32 %v2624, 0.0078125
        %v2689 = vmul.f32 %v2642, 0.0078125
        %v2690 = vmul.f32 %v2644, 0.0078125
        %v2691 = vmul.f32 %v2646, 0.0078125
        %v2692 = vmul.f32 %v2648, 0.0078125
        %v2693 = vmul.f32 %v2650, 0.0078125
        %v2694 = vmul.f32 %v2652, 0.0078125
        %v2695 = vmul.f32 %v2654, 0.0078125
        %v2696 = vmul.f32 %v2656, 0.0078125
        %v2697 = vmul.f32 %v2658, 0.0078125
        %v2698 = vmul.f32 %v2660, 0.0078125
        %v2699 = vmul.f32 %v2662, 0.0078125
        %v2700 = vmul.f32 %v2664, 0.0078125
        %v2701 = vmul.f32 %v2666, 0.0078125
        %v2702 = vmul.f32 %v2668, 0.0078125
        %v2703 = vmul.f32 %v2670, 0.0078125
        %v2704 = vmul.f32 %v2672, 0.0078125
        %v2705 = vmul.f32 %v2673, %v2673
        %v2706 = vmul.f32 %v2674, %v2674
        %v2707 = vmul.f32 %v2675, %v2675
        %v2708 = vmul.f32 %v2676, %v2676
        %v2709 = vmul.f32 %v2677, %v2677
        %v2710 = vmul.f32 %v2678, %v2678
        %v2711 = vmul.f32 %v2679, %v2679
        %v2712 = vmul.f32 %v2680, %v2680
        %v2713 = vmul.f32 %v2681, %v2681
        %v2714 = vmul.f32 %v2682, %v2682
        %v2715 = vmul.f32 %v2683, %v2683
        %v2716 = vmul.f32 %v2684, %v2684
        %v2717 = vmul.f32 %v2685, %v2685
        %v2718 = vmul.f32 %v2686, %v2686
        %v2719 = vmul.f32 %v2687, %v2687
        %v2720 = vmul.f32 %v2688, %v2688
        %v2721 = vsub.f32 %v2689, %v2705
        %v2722 = vsub.f32 %v2690, %v2706
        %v2723 = vsub.f32 %v2691, %v2707
        %v2724 = vsub.f32 %v2692, %v2708
        %v2725 = vsub.f32 %v2693, %v2709
        %v2726 = vsub.f32 %v2694, %v2710
        %v2727 = vsub.f32 %v2695, %v2711
        %v2728 = vsub.f32 %v2696, %v2712
        %v2729 = vsub.f32 %v2697, %v2713
        %v2730 = vsub.f32 %v2698, %v2714
        %v2731 = vsub.f32 %v2699, %v2715
        %v2732 = vsub.f32 %v2700, %v2716
        %v2733 = vsub.f32 %v2701, %v2717
        %v2734 = vsub.f32 %v2702, %v2718
        %v2735 = vsub.f32 %v2703, %v2719
        %v2736 = vsub.f32 %v2704, %v2720
        %v2737 = vsub.f32 %v2577, %v2673
        %v2738 = vsub.f32 %v2578, %v2674
        %v2739 = vsub.f32 %v2579, %v2675
        %v2740 = vsub.f32 %v2580, %v2676
        %v2741 = vsub.f32 %v2581, %v2677
        %v2742 = vsub.f32 %v2582, %v2678
        %v2743 = vsub.f32 %v2583, %v2679
        %v2744 = vsub.f32 %v2584, %v2680
        %v2745 = vsub.f32 %v2585, %v2681
        %v2746 = vsub.f32 %v2586, %v2682
        %v2747 = vsub.f32 %v2587, %v2683
        %v2748 = vsub.f32 %v2588, %v2684
        %v2749 = vsub.f32 %v2589, %v2685
        %v2750 = vsub.f32 %v2590, %v2686
        %v2751 = vsub.f32 %v2591, %v2687
        %v2752 = vsub.f32 %v2592, %v2688
        %v2753 = vadd.f32 %v2721, 1e-05
        %v2754 = vadd.f32 %v2722, 1e-05
        %v2755 = vadd.f32 %v2723, 1e-05
        %v2756 = vadd.f32 %v2724, 1e-05
        %v2757 = vadd.f32 %v2725, 1e-05
        %v2758 = vadd.f32 %v2726, 1e-05
        %v2759 = vadd.f32 %v2727, 1e-05
        %v2760 = vadd.f32 %v2728, 1e-05
        %v2761 = vadd.f32 %v2729, 1e-05
        %v2762 = vadd.f32 %v2730, 1e-05
        %v2763 = vadd.f32 %v2731, 1e-05
        %v2764 = vadd.f32 %v2732, 1e-05
        %v2765 = vadd.f32 %v2733, 1e-05
        %v2766 = vadd.f32 %v2734, 1e-05
        %v2767 = vadd.f32 %v2735, 1e-05
        %v2768 = vadd.f32 %v2736, 1e-05
        %v2769 = vrsqrt.pop %v2753
        %v2770 = vrsqrt.pop %v2754
        %v2771 = vrsqrt.pop %v2755
        %v2772 = vrsqrt.pop %v2756
        %v2773 = vrsqrt.pop %v2757
        %v2774 = vrsqrt.pop %v2758
        %v2775 = vrsqrt.pop %v2759
        %v2776 = vrsqrt.pop %v2760
        %v2777 = vrsqrt.pop %v2761
        %v2778 = vrsqrt.pop %v2762
        %v2779 = vrsqrt.pop %v2763
        %v2780 = vrsqrt.pop %v2764
        %v2781 = vrsqrt.pop %v2765
        %v2782 = vrsqrt.pop %v2766
        %v2783 = vrsqrt.pop %v2767
        %v2784 = vrsqrt.pop %v2768
        %v2785 = vmul.f32 %v2737, %v2769
        %v2786 = vmul.f32 %v2738, %v2770
        %v2787 = vmul.f32 %v2739, %v2771
        %v2788 = vmul.f32 %v2740, %v2772
        %v2789 = vmul.f32 %v2741, %v2773
        %v2790 = vmul.f32 %v2742, %v2774
        %v2791 = vmul.f32 %v2743, %v2775
        %v2792 = vmul.f32 %v2744, %v2776
        %v2793 = vmul.f32 %v2745, %v2777
        %v2794 = vmul.f32 %v2746, %v2778
        %v2795 = vmul.f32 %v2747, %v2779
        %v2796 = vmul.f32 %v2748, %v2780
        %v2797 = vmul.f32 %v2749, %v2781
        %v2798 = vmul.f32 %v2750, %v2782
        %v2799 = vmul.f32 %v2751, %v2783
        %v2800 = vmul.f32 %v2752, %v2784
        %v2801 = vlaneseq
        %v2802 = vshrl.u32 %v2801, 7
        %v2803 = vsub.s32 3, %v2802
        %v2804 = vrot.slane %v514, %v2803
        %v2805 = vmul.f32 %v2785, %v2804
        %v2806 = vmul.f32 %v2786, %v2804
        %v2807 = vmul.f32 %v2787, %v2804
        %v2808 = vmul.f32 %v2788, %v2804
        %v2809 = vmul.f32 %v2789, %v2804
        %v2810 = vmul.f32 %v2790, %v2804
        %v2811 = vmul.f32 %v2791, %v2804
        %v2812 = vmul.f32 %v2792, %v2804
        %v2813 = vmul.f32 %v2793, %v2804
        %v2814 = vmul.f32 %v2794, %v2804
        %v2815 = vmul.f32 %v2795, %v2804
        %v2816 = vmul.f32 %v2796, %v2804
        %v2817 = vmul.f32 %v2797, %v2804
        %v2818 = vmul.f32 %v2798, %v2804
        %v2819 = vmul.f32 %v2799, %v2804
        %v2820 = vmul.f32 %v2800, %v2804
        %v2821 = vlaneseq
        %v2822 = vshrl.u32 %v2821, 7
        %v2823 = vsub.s32 4, %v2822
        %v2824 = vrot.slane %v514, %v2823
        %v2825 = vadd.f32 %v2805, %v2824
        %v2826 = vadd.f32 %v2806, %v2824
        %v2827 = vadd.f32 %v2807, %v2824
        %v2828 = vadd.f32 %v2808, %v2824
        %v2829 = vadd.f32 %v2809, %v2824
        %v2830 = vadd.f32 %v2810, %v2824
        %v2831 = vadd.f32 %v2811, %v2824
        %v2832 = vadd.f32 %v2812, %v2824
        %v2833 = vadd.f32 %v2813, %v2824
        %v2834 = vadd.f32 %v2814, %v2824
        %v2835 = vadd.f32 %v2815, %v2824
        %v2836 = vadd.f32 %v2816, %v2824
        %v2837 = vadd.f32 %v2817, %v2824
        %v2838 = vadd.f32 %v2818, %v2824
        %v2839 = vadd.f32 %v2819, %v2824
        %v2840 = vadd.f32 %v2820, %v2824
        %v2841 = vpack.c.bf16 %v2826, %v2825
        %v2842 = vpack.c.bf16 %v2828, %v2827
        %v2843 = vpack.c.bf16 %v2830, %v2829
        %v2844 = vpack.c.bf16 %v2832, %v2831
        %v2845 = vpack.c.bf16 %v2834, %v2833
        %v2846 = vpack.c.bf16 %v2836, %v2835
        %v2847 = vpack.c.bf16 %v2838, %v2837
        %v2848 = vpack.c.bf16 %v2840, %v2839
        %v2849 = vld [vmem:[%s449] sm:$0xff]
        %v2850 = vld [vmem:[%s449 + $0x8] sm:$0xff]
        %v2851 = vld [vmem:[%s449 + $0x10] sm:$0xff]
        %v2852 = vld [vmem:[%s449 + $0x18] sm:$0xff]
        %v2853 = vld [vmem:[%s449 + $0x20] sm:$0xff]
        %v2854 = vld [vmem:[%s449 + $0x28] sm:$0xff]
        %v2855 = vld [vmem:[%s449 + $0x30] sm:$0xff]
        %v2856 = vld [vmem:[%s449 + $0x38] sm:$0xff]
        %v2857 = vld [vmem:[%s449 + $0x40] sm:$0xff]
        %v2858 = vld [vmem:[%s449 + $0x48] sm:$0xff]
        %v2859 = vld [vmem:[%s449 + $0x50] sm:$0xff]
        %v2860 = vld [vmem:[%s449 + $0x58] sm:$0xff]
        %v2861 = vld [vmem:[%s449 + $0x60] sm:$0xff]
        %v2862 = vld [vmem:[%s449 + $0x68] sm:$0xff]
        %v2863 = vld [vmem:[%s449 + $0x70] sm:$0xff]
        %v2864 = vld [vmem:[%s449 + $0x78] sm:$0xff]
        %v2865 = vld [vmem:[%s449 + $0x80] sm:$0xff]
        %v2866 = vld [vmem:[%s449 + $0x88] sm:$0xff]
        %v2867 = vld [vmem:[%s449 + $0x90] sm:$0xff]
        %v2868 = vld [vmem:[%s449 + $0x98] sm:$0xff]
        %v2869 = vld [vmem:[%s449 + $0xa0] sm:$0xff]
        %v2870 = vld [vmem:[%s449 + $0xa8] sm:$0xff]
        %v2871 = vld [vmem:[%s449 + $0xb0] sm:$0xff]
        %v2872 = vld [vmem:[%s449 + $0xb8] sm:$0xff]
        %v2873 = vld [vmem:[%s449 + $0xc0] sm:$0xff]
        %v2874 = vld [vmem:[%s449 + $0xc8] sm:$0xff]
        %v2875 = vld [vmem:[%s449 + $0xd0] sm:$0xff]
        %v2876 = vld [vmem:[%s449 + $0xd8] sm:$0xff]
        %v2877 = vld [vmem:[%s449 + $0xe0] sm:$0xff]
        %v2878 = vld [vmem:[%s449 + $0xe8] sm:$0xff]
        %v2879 = vld [vmem:[%s449 + $0xf0] sm:$0xff]
        %v2880 = vld [vmem:[%s449 + $0xf8] sm:$0xff]
        %v2881 = vlaneseq
        %v2882 = vshrl.u32 %v2881, 7
        %v2883 = vsub.s32 5, %v2882
        %v2884 = vrot.slane %v514, %v2883
        %v2885 = vlaneseq
        %v2886 = vshrl.u32 %v2885, 7
        %v2887 = vsub.s32 5, %v2886
        %v2888 = vrot.slane %v515, %v2887
        %v2889 = vlaneseq
        %v2890 = vshrl.u32 %v2889, 7
        %v2891 = vsub.s32 5, %v2890
        %v2892 = vrot.slane %v516, %v2891
        %v2893 = vlaneseq
        %v2894 = vshrl.u32 %v2893, 7
        %v2895 = vsub.s32 5, %v2894
        %v2896 = vrot.slane %v517, %v2895
        %v2929 = vunpack.c.l.b16 %v2849
        %v2930 = vunpack.c.h.b16 %v2849
        %v2931 = vunpack.c.l.b16 %v2850
        %v2932 = vunpack.c.h.b16 %v2850
        %v2933 = vunpack.c.l.b16 %v2851
        %v2934 = vunpack.c.h.b16 %v2851
        %v2935 = vunpack.c.l.b16 %v2852
        %v2936 = vunpack.c.h.b16 %v2852
        %v2937 = vunpack.c.l.b16 %v2853
        %v2938 = vunpack.c.h.b16 %v2853
        %v2939 = vunpack.c.l.b16 %v2854
        %v2940 = vunpack.c.h.b16 %v2854
        %v2941 = vunpack.c.l.b16 %v2855
        %v2942 = vunpack.c.h.b16 %v2855
        %v2943 = vunpack.c.l.b16 %v2856
        %v2944 = vunpack.c.h.b16 %v2856
        %v2945 = vunpack.c.l.b16 %v2857
        %v2946 = vunpack.c.h.b16 %v2857
        %v2947 = vunpack.c.l.b16 %v2858
        %v2948 = vunpack.c.h.b16 %v2858
        %v2949 = vunpack.c.l.b16 %v2859
        %v2950 = vunpack.c.h.b16 %v2859
        %v2951 = vunpack.c.l.b16 %v2860
        %v2952 = vunpack.c.h.b16 %v2860
        %v2953 = vunpack.c.l.b16 %v2861
        %v2954 = vunpack.c.h.b16 %v2861
        %v2955 = vunpack.c.l.b16 %v2862
        %v2956 = vunpack.c.h.b16 %v2862
        %v2957 = vunpack.c.l.b16 %v2863
        %v2958 = vunpack.c.h.b16 %v2863
        %v2959 = vunpack.c.l.b16 %v2864
        %v2960 = vunpack.c.h.b16 %v2864
        %v2961 = vunpack.c.l.b16 %v2865
        %v2962 = vunpack.c.h.b16 %v2865
        %v2963 = vunpack.c.l.b16 %v2866
        %v2964 = vunpack.c.h.b16 %v2866
        %v2965 = vunpack.c.l.b16 %v2867
        %v2966 = vunpack.c.h.b16 %v2867
        %v2967 = vunpack.c.l.b16 %v2868
        %v2968 = vunpack.c.h.b16 %v2868
        %v2969 = vunpack.c.l.b16 %v2869
        %v2970 = vunpack.c.h.b16 %v2869
        %v2971 = vunpack.c.l.b16 %v2870
        %v2972 = vunpack.c.h.b16 %v2870
        %v2973 = vunpack.c.l.b16 %v2871
        %v2974 = vunpack.c.h.b16 %v2871
        %v2975 = vunpack.c.l.b16 %v2872
        %v2976 = vunpack.c.h.b16 %v2872
        %v2977 = vunpack.c.l.b16 %v2873
        %v2978 = vunpack.c.h.b16 %v2873
        %v2979 = vunpack.c.l.b16 %v2874
        %v2980 = vunpack.c.h.b16 %v2874
        %v2981 = vunpack.c.l.b16 %v2875
        %v2982 = vunpack.c.h.b16 %v2875
        %v2983 = vunpack.c.l.b16 %v2876
        %v2984 = vunpack.c.h.b16 %v2876
        %v2985 = vunpack.c.l.b16 %v2877
        %v2986 = vunpack.c.h.b16 %v2877
        %v2987 = vunpack.c.l.b16 %v2878
        %v2988 = vunpack.c.h.b16 %v2878
        %v2989 = vunpack.c.l.b16 %v2879
        %v2990 = vunpack.c.h.b16 %v2879
        %v2991 = vunpack.c.l.b16 %v2880
        %v2992 = vunpack.c.h.b16 %v2880
        %v2993 = vpack.c.b16 %v2933, %v2929
        %v2994 = vpack.c.b16 %v2934, %v2930
        %v2995 = vpack.c.b16 %v2935, %v2931
        %v2996 = vpack.c.b16 %v2936, %v2932
        %v2997 = vpack.c.b16 %v2941, %v2937
        %v2998 = vpack.c.b16 %v2942, %v2938
        %v2999 = vpack.c.b16 %v2943, %v2939
        %v3000 = vpack.c.b16 %v2944, %v2940
        %v3001 = vpack.c.b16 %v2949, %v2945
        %v3002 = vpack.c.b16 %v2950, %v2946
        %v3003 = vpack.c.b16 %v2951, %v2947
        %v3004 = vpack.c.b16 %v2952, %v2948
        %v3005 = vpack.c.b16 %v2957, %v2953
        %v3006 = vpack.c.b16 %v2958, %v2954
        %v3007 = vpack.c.b16 %v2959, %v2955
        %v3008 = vpack.c.b16 %v2960, %v2956
        %v3009 = vpack.c.b16 %v2965, %v2961
        %v3010 = vpack.c.b16 %v2966, %v2962
        %v3011 = vpack.c.b16 %v2967, %v2963
        %v3012 = vpack.c.b16 %v2968, %v2964
        %v3013 = vpack.c.b16 %v2973, %v2969
        %v3014 = vpack.c.b16 %v2974, %v2970
        %v3015 = vpack.c.b16 %v2975, %v2971
        %v3016 = vpack.c.b16 %v2976, %v2972
        %v3017 = vpack.c.b16 %v2981, %v2977
        %v3018 = vpack.c.b16 %v2982, %v2978
        %v3019 = vpack.c.b16 %v2983, %v2979
        %v3020 = vpack.c.b16 %v2984, %v2980
        %v3021 = vpack.c.b16 %v2989, %v2985
        %v3022 = vpack.c.b16 %v2990, %v2986
        %v3023 = vpack.c.b16 %v2991, %v2987
        %v3024 = vpack.c.b16 %v2992, %v2988
        %3057 = vmatprep.subr.bf16.mxu0 %v2994
        %3058 = vmatpush1.bf16.msra.mxu0 %v2993
        %3059 = vmatprep.subr.bf16.mxu0 %v2998
        %3060 = vmatpush1.bf16.msra.mxu0 %v2997
        %3061 = vmatprep.subr.bf16.mxu0 %v3002
        %3062 = vmatpush1.bf16.msra.mxu0 %v3001
        %3063 = vmatprep.subr.bf16.mxu0 %v3006
        %3064 = vmatpush1.bf16.msra.mxu0 %v3005
        %3065 = vmatprep.subr.bf16.mxu0 %v3010
        %3066 = vmatpush1.bf16.msra.mxu0 %v3009
        %3067 = vmatprep.subr.bf16.mxu0 %v3014
        %3068 = vmatpush1.bf16.msra.mxu0 %v3013
        %3069 = vmatprep.subr.bf16.mxu0 %v3018
        %3070 = vmatpush1.bf16.msra.mxu0 %v3017
        %3071 = vmatprep.subr.bf16.mxu0 %v3022
        %3072 = vmatpush1.bf16.msra.mxu0 %v3021
        %3073 = vmatprep.subr.bf16.mxu0 0
        %3074 = vmatpush1.bf16.msra.mxu0 0
        %3075 = vmatprep.subr.bf16.mxu0 0
        %3076 = vmatpush1.bf16.msra.mxu0 0
        %3077 = vmatprep.subr.bf16.mxu0 0
        %3078 = vmatpush1.bf16.msra.mxu0 0
        %3079 = vmatprep.subr.bf16.mxu0 0
        %3080 = vmatpush1.bf16.msra.mxu0 0
        %3081 = vmatprep.subr.bf16.mxu0 0
        %3082 = vmatpush1.bf16.msra.mxu0 0
        %3083 = vmatprep.subr.bf16.mxu0 0
        %3084 = vmatpush1.bf16.msra.mxu0 0
        %3085 = vmatprep.subr.bf16.mxu0 0
        %3086 = vmatpush1.bf16.msra.mxu0 0
        %3087 = vmatprep.subr.bf16.mxu0 0
        %3088 = vmatpush1.bf16.msra.mxu0 0
        %3089 = vmatprep.mubr.bf16.mxu0 0
        %3090 = vmatmul.mubr.bf16.gmra.mrb[0].mxu0 %v2841
        %v3091 = vpop.f32.mrb[0].mxu0
        %v3092 = vadd.f32 %v2884, %v3091
        %v3093 = vpop.f32.mrb[0].mxu0
        %v3094 = vadd.f32 %v2888, %v3093
        %v3095 = vpop.f32.mrb[0].mxu0
        %v3096 = vadd.f32 %v2884, %v3095
        %v3097 = vpop.f32.mrb[0].mxu0
        %v3098 = vadd.f32 %v2888, %v3097
        %3099 = vmatprep.mubr.bf16.mxu0 0
        %3100 = vmatmul.mubr.bf16.gmra.mrb[0].mxu0 %v2842
        %v3101 = vpop.f32.mrb[0].mxu0
        %v3102 = vadd.f32 %v2884, %v3101
        %v3103 = vpop.f32.mrb[0].mxu0
        %v3104 = vadd.f32 %v2888, %v3103
        %v3105 = vpop.f32.mrb[0].mxu0
        %v3106 = vadd.f32 %v2884, %v3105
        %v3107 = vpop.f32.mrb[0].mxu0
        %v3108 = vadd.f32 %v2888, %v3107
        %3109 = vmatprep.mubr.bf16.mxu0 0
        %3110 = vmatmul.mubr.bf16.gmra.mrb[0].mxu0 %v2843
        %v3111 = vpop.f32.mrb[0].mxu0
        %v3112 = vadd.f32 %v2884, %v3111
        %v3113 = vpop.f32.mrb[0].mxu0
        %v3114 = vadd.f32 %v2888, %v3113
        %v3115 = vpop.f32.mrb[0].mxu0
        %v3116 = vadd.f32 %v2884, %v3115
        %v3117 = vpop.f32.mrb[0].mxu0
        %v3118 = vadd.f32 %v2888, %v3117
        %3119 = vmatprep.mubr.bf16.mxu0 0
        %3120 = vmatmul.mubr.bf16.gmra.mrb[0].mxu0 %v2844
        %v3121 = vpop.f32.mrb[0].mxu0
        %v3122 = vadd.f32 %v2884, %v3121
        %v3123 = vpop.f32.mrb[0].mxu0
        %v3124 = vadd.f32 %v2888, %v3123
        %v3125 = vpop.f32.mrb[0].mxu0
        %v3126 = vadd.f32 %v2884, %v3125
        %v3127 = vpop.f32.mrb[0].mxu0
        %v3128 = vadd.f32 %v2888, %v3127
        %3129 = vmatprep.mubr.bf16.mxu0 0
        %3130 = vmatmul.mubr.bf16.gmra.mrb[0].mxu0 %v2845
        %v3131 = vpop.f32.mrb[0].mxu0
        %v3132 = vadd.f32 %v2884, %v3131
        %v3133 = vpop.f32.mrb[0].mxu0
        %v3134 = vadd.f32 %v2888, %v3133
        %v3135 = vpop.f32.mrb[0].mxu0
        %v3136 = vadd.f32 %v2884, %v3135
        %v3137 = vpop.f32.mrb[0].mxu0
        %v3138 = vadd.f32 %v2888, %v3137
        %3139 = vmatprep.mubr.bf16.mxu0 0
        %3140 = vmatmul.mubr.bf16.gmra.mrb[0].mxu0 %v2846
        %v3141 = vpop.f32.mrb[0].mxu0
        %v3142 = vadd.f32 %v2884, %v3141
        %v3143 = vpop.f32.mrb[0].mxu0
        %v3144 = vadd.f32 %v2888, %v3143
        %v3145 = vpop.f32.mrb[0].mxu0
        %v3146 = vadd.f32 %v2884, %v3145
        %v3147 = vpop.f32.mrb[0].mxu0
        %v3148 = vadd.f32 %v2888, %v3147
        %3149 = vmatprep.mubr.bf16.mxu0 0
        %3150 = vmatmul.mubr.bf16.gmra.mrb[0].mxu0 %v2847
        %v3151 = vpop.f32.mrb[0].mxu0
        %v3152 = vadd.f32 %v2884, %v3151
        %v3153 = vpop.f32.mrb[0].mxu0
        %v3154 = vadd.f32 %v2888, %v3153
        %v3155 = vpop.f32.mrb[0].mxu0
        %v3156 = vadd.f32 %v2884, %v3155
        %v3157 = vpop.f32.mrb[0].mxu0
        %v3158 = vadd.f32 %v2888, %v3157
        %3159 = vmatprep.mubr.bf16.mxu0 0
        %3160 = vmatmul.mubr.bf16.gmra.mrb[0].mxu0 %v2848
        %v3161 = vpop.f32.mrb[0].mxu0
        %v3162 = vadd.f32 %v2884, %v3161
        %v3163 = vpop.f32.mrb[0].mxu0
        %v3164 = vadd.f32 %v2888, %v3163
        %v3165 = vpop.f32.mrb[0].mxu0
        %v3166 = vadd.f32 %v2884, %v3165
        %v3167 = vpop.f32.mrb[0].mxu0
        %v3168 = vadd.f32 %v2888, %v3167
        %3169 = vdwg.mxu0
        %3170 = vmatprep.subr.bf16.mxu0 %v2996
        %3171 = vmatpush1.bf16.msra.mxu0 %v2995
        %3172 = vmatprep.subr.bf16.mxu0 %v3000
        %3173 = vmatpush1.bf16.msra.mxu0 %v2999
        %3174 = vmatprep.subr.bf16.mxu0 %v3004
        %3175 = vmatpush1.bf16.msra.mxu0 %v3003
        %3176 = vmatprep.subr.bf16.mxu0 %v3008
        %3177 = vmatpush1.bf16.msra.mxu0 %v3007
        %3178 = vmatprep.subr.bf16.mxu0 %v3012
        %3179 = vmatpush1.bf16.msra.mxu0 %v3011
        %3180 = vmatprep.subr.bf16.mxu0 %v3016
        %3181 = vmatpush1.bf16.msra.mxu0 %v3015
        %3182 = vmatprep.subr.bf16.mxu0 %v3020
        %3183 = vmatpush1.bf16.msra.mxu0 %v3019
        %3184 = vmatprep.subr.bf16.mxu0 %v3024
        %3185 = vmatpush1.bf16.msra.mxu0 %v3023
        %3186 = vmatprep.subr.bf16.mxu0 0
        %3187 = vmatpush1.bf16.msra.mxu0 0
        %3188 = vmatprep.subr.bf16.mxu0 0
        %3189 = vmatpush1.bf16.msra.mxu0 0
        %3190 = vmatprep.subr.bf16.mxu0 0
        %3191 = vmatpush1.bf16.msra.mxu0 0
        %3192 = vmatprep.subr.bf16.mxu0 0
        %3193 = vmatpush1.bf16.msra.mxu0 0
        %3194 = vmatprep.subr.bf16.mxu0 0
        %3195 = vmatpush1.bf16.msra.mxu0 0
        %3196 = vmatprep.subr.bf16.mxu0 0
        %3197 = vmatpush1.bf16.msra.mxu0 0
        %3198 = vmatprep.subr.bf16.mxu0 0
        %3199 = vmatpush1.bf16.msra.mxu0 0
        %3200 = vmatprep.subr.bf16.mxu0 0
        %3201 = vmatpush1.bf16.msra.mxu0 0
        %3202 = vmatprep.mubr.bf16.mxu0 0
        %3203 = vmatmul.mubr.bf16.gmra.mrb[0].mxu0 %v2841
        %v3204 = vpop.f32.mrb[0].mxu0
        %v3205 = vadd.f32 %v2892, %v3204
        %v3206 = vpop.f32.mrb[0].mxu0
        %v3207 = vadd.f32 %v2896, %v3206
        %v3208 = vpop.f32.mrb[0].mxu0
        %v3209 = vadd.f32 %v2892, %v3208
        %v3210 = vpop.f32.mrb[0].mxu0
        %v3211 = vadd.f32 %v2896, %v3210
        %3212 = vmatprep.mubr.bf16.mxu0 0
        %3213 = vmatmul.mubr.bf16.gmra.mrb[0].mxu0 %v2842
        %v3214 = vpop.f32.mrb[0].mxu0
        %v3215 = vadd.f32 %v2892, %v3214
        %v3216 = vpop.f32.mrb[0].mxu0
        %v3217 = vadd.f32 %v2896, %v3216
        %v3218 = vpop.f32.mrb[0].mxu0
        %v3219 = vadd.f32 %v2892, %v3218
        %v3220 = vpop.f32.mrb[0].mxu0
        %v3221 = vadd.f32 %v2896, %v3220
        %3222 = vmatprep.mubr.bf16.mxu0 0
        %3223 = vmatmul.mubr.bf16.gmra.mrb[0].mxu0 %v2843
        %v3224 = vpop.f32.mrb[0].mxu0
        %v3225 = vadd.f32 %v2892, %v3224
        %v3226 = vpop.f32.mrb[0].mxu0
        %v3227 = vadd.f32 %v2896, %v3226
        %v3228 = vpop.f32.mrb[0].mxu0
        %v3229 = vadd.f32 %v2892, %v3228
        %v3230 = vpop.f32.mrb[0].mxu0
        %v3231 = vadd.f32 %v2896, %v3230
        %3232 = vmatprep.mubr.bf16.mxu0 0
        %3233 = vmatmul.mubr.bf16.gmra.mrb[0].mxu0 %v2844
        %v3234 = vpop.f32.mrb[0].mxu0
        %v3235 = vadd.f32 %v2892, %v3234
        %v3236 = vpop.f32.mrb[0].mxu0
        %v3237 = vadd.f32 %v2896, %v3236
        %v3238 = vpop.f32.mrb[0].mxu0
        %v3239 = vadd.f32 %v2892, %v3238
        %v3240 = vpop.f32.mrb[0].mxu0
        %v3241 = vadd.f32 %v2896, %v3240
        %3242 = vmatprep.mubr.bf16.mxu0 0
        %3243 = vmatmul.mubr.bf16.gmra.mrb[0].mxu0 %v2845
        %v3244 = vpop.f32.mrb[0].mxu0
        %v3245 = vadd.f32 %v2892, %v3244
        %v3246 = vpop.f32.mrb[0].mxu0
        %v3247 = vadd.f32 %v2896, %v3246
        %v3248 = vpop.f32.mrb[0].mxu0
        %v3249 = vadd.f32 %v2892, %v3248
        %v3250 = vpop.f32.mrb[0].mxu0
        %v3251 = vadd.f32 %v2896, %v3250
        %3252 = vmatprep.mubr.bf16.mxu0 0
        %3253 = vmatmul.mubr.bf16.gmra.mrb[0].mxu0 %v2846
        %v3254 = vpop.f32.mrb[0].mxu0
        %v3255 = vadd.f32 %v2892, %v3254
        %v3256 = vpop.f32.mrb[0].mxu0
        %v3257 = vadd.f32 %v2896, %v3256
        %v3258 = vpop.f32.mrb[0].mxu0
        %v3259 = vadd.f32 %v2892, %v3258
        %v3260 = vpop.f32.mrb[0].mxu0
        %v3261 = vadd.f32 %v2896, %v3260
        %3262 = vmatprep.mubr.bf16.mxu0 0
        %3263 = vmatmul.mubr.bf16.gmra.mrb[0].mxu0 %v2847
        %v3264 = vpop.f32.mrb[0].mxu0
        %v3265 = vadd.f32 %v2892, %v3264
        %v3266 = vpop.f32.mrb[0].mxu0
        %v3267 = vadd.f32 %v2896, %v3266
        %v3268 = vpop.f32.mrb[0].mxu0
        %v3269 = vadd.f32 %v2892, %v3268
        %v3270 = vpop.f32.mrb[0].mxu0
        %v3271 = vadd.f32 %v2896, %v3270
        %3272 = vmatprep.mubr.bf16.mxu0 0
        %3273 = vmatmul.mubr.bf16.gmra.mrb[0].mxu0 %v2848
        %v3274 = vpop.f32.mrb[0].mxu0
        %v3275 = vadd.f32 %v2892, %v3274
        %v3276 = vpop.f32.mrb[0].mxu0
        %v3277 = vadd.f32 %v2896, %v3276
        %v3278 = vpop.f32.mrb[0].mxu0
        %v3279 = vadd.f32 %v2892, %v3278
        %v3280 = vpop.f32.mrb[0].mxu0
        %v3281 = vadd.f32 %v2896, %v3280
        %3282 = vdwg.mxu0
        %v3283 = vmax.f32 %v3092, 0.0
        %v3284 = vmax.f32 %v3094, 0.0
        %v3285 = vmax.f32 %v3205, 0.0
        %v3286 = vmax.f32 %v3207, 0.0
        %v3287 = vmax.f32 %v3096, 0.0
        %v3288 = vmax.f32 %v3098, 0.0
        %v3289 = vmax.f32 %v3209, 0.0
        %v3290 = vmax.f32 %v3211, 0.0
        %v3291 = vmax.f32 %v3102, 0.0
        %v3292 = vmax.f32 %v3104, 0.0
        %v3293 = vmax.f32 %v3215, 0.0
        %v3294 = vmax.f32 %v3217, 0.0
        %v3295 = vmax.f32 %v3106, 0.0
        %v3296 = vmax.f32 %v3108, 0.0
        %v3297 = vmax.f32 %v3219, 0.0
        %v3298 = vmax.f32 %v3221, 0.0
        %v3299 = vmax.f32 %v3112, 0.0
        %v3300 = vmax.f32 %v3114, 0.0
        %v3301 = vmax.f32 %v3225, 0.0
        %v3302 = vmax.f32 %v3227, 0.0
        %v3303 = vmax.f32 %v3116, 0.0
        %v3304 = vmax.f32 %v3118, 0.0
        %v3305 = vmax.f32 %v3229, 0.0
        %v3306 = vmax.f32 %v3231, 0.0
        %v3307 = vmax.f32 %v3122, 0.0
        %v3308 = vmax.f32 %v3124, 0.0
        %v3309 = vmax.f32 %v3235, 0.0
        %v3310 = vmax.f32 %v3237, 0.0
        %v3311 = vmax.f32 %v3126, 0.0
        %v3312 = vmax.f32 %v3128, 0.0
        %v3313 = vmax.f32 %v3239, 0.0
        %v3314 = vmax.f32 %v3241, 0.0
        %v3315 = vmax.f32 %v3132, 0.0
        %v3316 = vmax.f32 %v3134, 0.0
        %v3317 = vmax.f32 %v3245, 0.0
        %v3318 = vmax.f32 %v3247, 0.0
        %v3319 = vmax.f32 %v3136, 0.0
        %v3320 = vmax.f32 %v3138, 0.0
        %v3321 = vmax.f32 %v3249, 0.0
        %v3322 = vmax.f32 %v3251, 0.0
        %v3323 = vmax.f32 %v3142, 0.0
        %v3324 = vmax.f32 %v3144, 0.0
        %v3325 = vmax.f32 %v3255, 0.0
        %v3326 = vmax.f32 %v3257, 0.0
        %v3327 = vmax.f32 %v3146, 0.0
        %v3328 = vmax.f32 %v3148, 0.0
        %v3329 = vmax.f32 %v3259, 0.0
        %v3330 = vmax.f32 %v3261, 0.0
        %v3331 = vmax.f32 %v3152, 0.0
        %v3332 = vmax.f32 %v3154, 0.0
        %v3333 = vmax.f32 %v3265, 0.0
        %v3334 = vmax.f32 %v3267, 0.0
        %v3335 = vmax.f32 %v3156, 0.0
        %v3336 = vmax.f32 %v3158, 0.0
        %v3337 = vmax.f32 %v3269, 0.0
        %v3338 = vmax.f32 %v3271, 0.0
        %v3339 = vmax.f32 %v3162, 0.0
        %v3340 = vmax.f32 %v3164, 0.0
        %v3341 = vmax.f32 %v3275, 0.0
        %v3342 = vmax.f32 %v3277, 0.0
        %v3343 = vmax.f32 %v3166, 0.0
        %v3344 = vmax.f32 %v3168, 0.0
        %v3345 = vmax.f32 %v3279, 0.0
        %v3346 = vmax.f32 %v3281, 0.0
        %v3347 = vpack.c.bf16 %v3287, %v3283
        %v3348 = vpack.c.bf16 %v3288, %v3284
        %v3349 = vpack.c.bf16 %v3289, %v3285
        %v3350 = vpack.c.bf16 %v3290, %v3286
        %v3351 = vpack.c.bf16 %v3295, %v3291
        %v3352 = vpack.c.bf16 %v3296, %v3292
        %v3353 = vpack.c.bf16 %v3297, %v3293
        %v3354 = vpack.c.bf16 %v3298, %v3294
        %v3355 = vpack.c.bf16 %v3303, %v3299
        %v3356 = vpack.c.bf16 %v3304, %v3300
        %v3357 = vpack.c.bf16 %v3305, %v3301
        %v3358 = vpack.c.bf16 %v3306, %v3302
        %v3359 = vpack.c.bf16 %v3311, %v3307
        %v3360 = vpack.c.bf16 %v3312, %v3308
        %v3361 = vpack.c.bf16 %v3313, %v3309
        %v3362 = vpack.c.bf16 %v3314, %v3310
        %v3363 = vpack.c.bf16 %v3319, %v3315
        %v3364 = vpack.c.bf16 %v3320, %v3316
        %v3365 = vpack.c.bf16 %v3321, %v3317
        %v3366 = vpack.c.bf16 %v3322, %v3318
        %v3367 = vpack.c.bf16 %v3327, %v3323
        %v3368 = vpack.c.bf16 %v3328, %v3324
        %v3369 = vpack.c.bf16 %v3329, %v3325
        %v3370 = vpack.c.bf16 %v3330, %v3326
        %v3371 = vpack.c.bf16 %v3335, %v3331
        %v3372 = vpack.c.bf16 %v3336, %v3332
        %v3373 = vpack.c.bf16 %v3337, %v3333
        %v3374 = vpack.c.bf16 %v3338, %v3334
        %v3375 = vpack.c.bf16 %v3343, %v3339
        %v3376 = vpack.c.bf16 %v3344, %v3340
        %v3377 = vpack.c.bf16 %v3345, %v3341
        %v3378 = vpack.c.bf16 %v3346, %v3342
        %v3379 = vld [vmem:[%s376] sm:$0xf]
        %v3380 = vld [vmem:[%s376 + $0x4] sm:$0xf]
        %v3381 = vld [vmem:[%s376 + $0x8] sm:$0xf]
        %v3382 = vld [vmem:[%s376 + $0xc] sm:$0xf]
        %v3383 = vld [vmem:[%s376 + $0x10] sm:$0xf]
        %v3384 = vld [vmem:[%s376 + $0x14] sm:$0xf]
        %v3385 = vld [vmem:[%s376 + $0x18] sm:$0xf]
        %v3386 = vld [vmem:[%s376 + $0x1c] sm:$0xf]
        %v3387 = vld [vmem:[%s376 + $0x20] sm:$0xf]
        %v3388 = vld [vmem:[%s376 + $0x24] sm:$0xf]
        %v3389 = vld [vmem:[%s376 + $0x28] sm:$0xf]
        %v3390 = vld [vmem:[%s376 + $0x2c] sm:$0xf]
        %v3391 = vld [vmem:[%s376 + $0x30] sm:$0xf]
        %v3392 = vld [vmem:[%s376 + $0x34] sm:$0xf]
        %v3393 = vld [vmem:[%s376 + $0x38] sm:$0xf]
        %v3394 = vld [vmem:[%s376 + $0x3c] sm:$0xf]
        %v3395 = vld [vmem:[%s376 + $0x40] sm:$0xf]
        %v3396 = vld [vmem:[%s376 + $0x44] sm:$0xf]
        %v3397 = vld [vmem:[%s376 + $0x48] sm:$0xf]
        %v3398 = vld [vmem:[%s376 + $0x4c] sm:$0xf]
        %v3399 = vld [vmem:[%s376 + $0x50] sm:$0xf]
        %v3400 = vld [vmem:[%s376 + $0x54] sm:$0xf]
        %v3401 = vld [vmem:[%s376 + $0x58] sm:$0xf]
        %v3402 = vld [vmem:[%s376 + $0x5c] sm:$0xf]
        %v3403 = vld [vmem:[%s376 + $0x60] sm:$0xf]
        %v3404 = vld [vmem:[%s376 + $0x64] sm:$0xf]
        %v3405 = vld [vmem:[%s376 + $0x68] sm:$0xf]
        %v3406 = vld [vmem:[%s376 + $0x6c] sm:$0xf]
        %v3407 = vld [vmem:[%s376 + $0x70] sm:$0xf]
        %v3408 = vld [vmem:[%s376 + $0x74] sm:$0xf]
        %v3409 = vld [vmem:[%s376 + $0x78] sm:$0xf]
        %v3410 = vld [vmem:[%s376 + $0x7c] sm:$0xf]
        %v3411 = vld [vmem:[%s376 + $0x80] sm:$0xf]
        %v3412 = vld [vmem:[%s376 + $0x84] sm:$0xf]
        %v3413 = vld [vmem:[%s376 + $0x88] sm:$0xf]
        %v3414 = vld [vmem:[%s376 + $0x8c] sm:$0xf]
        %v3415 = vld [vmem:[%s376 + $0x90] sm:$0xf]
        %v3416 = vld [vmem:[%s376 + $0x94] sm:$0xf]
        %v3417 = vld [vmem:[%s376 + $0x98] sm:$0xf]
        %v3418 = vld [vmem:[%s376 + $0x9c] sm:$0xf]
        %v3419 = vld [vmem:[%s376 + $0xa0] sm:$0xf]
        %v3420 = vld [vmem:[%s376 + $0xa4] sm:$0xf]
        %v3421 = vld [vmem:[%s376 + $0xa8] sm:$0xf]
        %v3422 = vld [vmem:[%s376 + $0xac] sm:$0xf]
        %v3423 = vld [vmem:[%s376 + $0xb0] sm:$0xf]
        %v3424 = vld [vmem:[%s376 + $0xb4] sm:$0xf]
        %v3425 = vld [vmem:[%s376 + $0xb8] sm:$0xf]
        %v3426 = vld [vmem:[%s376 + $0xbc] sm:$0xf]
        %v3427 = vld [vmem:[%s376 + $0xc0] sm:$0xf]
        %v3428 = vld [vmem:[%s376 + $0xc4] sm:$0xf]
        %v3429 = vld [vmem:[%s376 + $0xc8] sm:$0xf]
        %v3430 = vld [vmem:[%s376 + $0xcc] sm:$0xf]
        %v3431 = vld [vmem:[%s376 + $0xd0] sm:$0xf]
        %v3432 = vld [vmem:[%s376 + $0xd4] sm:$0xf]
        %v3433 = vld [vmem:[%s376 + $0xd8] sm:$0xf]
        %v3434 = vld [vmem:[%s376 + $0xdc] sm:$0xf]
        %v3435 = vld [vmem:[%s376 + $0xe0] sm:$0xf]
        %v3436 = vld [vmem:[%s376 + $0xe4] sm:$0xf]
        %v3437 = vld [vmem:[%s376 + $0xe8] sm:$0xf]
        %v3438 = vld [vmem:[%s376 + $0xec] sm:$0xf]
        %v3439 = vld [vmem:[%s376 + $0xf0] sm:$0xf]
        %v3440 = vld [vmem:[%s376 + $0xf4] sm:$0xf]
        %v3441 = vld [vmem:[%s376 + $0xf8] sm:$0xf]
        %v3442 = vld [vmem:[%s376 + $0xfc] sm:$0xf]
        %v3507 = vunpack.c.l.b16 %v3379
        %v3508 = vunpack.c.l.b16 %v3380
        %v3509 = vunpack.c.l.b16 %v3381
        %v3510 = vunpack.c.l.b16 %v3382
        %v3511 = vunpack.c.l.b16 %v3383
        %v3512 = vunpack.c.l.b16 %v3384
        %v3513 = vunpack.c.l.b16 %v3385
        %v3514 = vunpack.c.l.b16 %v3386
        %v3515 = vunpack.c.l.b16 %v3387
        %v3516 = vunpack.c.l.b16 %v3388
        %v3517 = vunpack.c.l.b16 %v3389
        %v3518 = vunpack.c.l.b16 %v3390
        %v3519 = vunpack.c.l.b16 %v3391
        %v3520 = vunpack.c.l.b16 %v3392
        %v3521 = vunpack.c.l.b16 %v3393
        %v3522 = vunpack.c.l.b16 %v3394
        %v3523 = vunpack.c.l.b16 %v3395
        %v3524 = vunpack.c.l.b16 %v3396
        %v3525 = vunpack.c.l.b16 %v3397
        %v3526 = vunpack.c.l.b16 %v3398
        %v3527 = vunpack.c.l.b16 %v3399
        %v3528 = vunpack.c.l.b16 %v3400
        %v3529 = vunpack.c.l.b16 %v3401
        %v3530 = vunpack.c.l.b16 %v3402
        %v3531 = vunpack.c.l.b16 %v3403
        %v3532 = vunpack.c.l.b16 %v3404
        %v3533 = vunpack.c.l.b16 %v3405
        %v3534 = vunpack.c.l.b16 %v3406
        %v3535 = vunpack.c.l.b16 %v3407
        %v3536 = vunpack.c.l.b16 %v3408
        %v3537 = vunpack.c.l.b16 %v3409
        %v3538 = vunpack.c.l.b16 %v3410
        %v3539 = vunpack.c.l.b16 %v3411
        %v3540 = vunpack.c.l.b16 %v3412
        %v3541 = vunpack.c.l.b16 %v3413
        %v3542 = vunpack.c.l.b16 %v3414
        %v3543 = vunpack.c.l.b16 %v3415
        %v3544 = vunpack.c.l.b16 %v3416
        %v3545 = vunpack.c.l.b16 %v3417
        %v3546 = vunpack.c.l.b16 %v3418
        %v3547 = vunpack.c.l.b16 %v3419
        %v3548 = vunpack.c.l.b16 %v3420
        %v3549 = vunpack.c.l.b16 %v3421
        %v3550 = vunpack.c.l.b16 %v3422
        %v3551 = vunpack.c.l.b16 %v3423
        %v3552 = vunpack.c.l.b16 %v3424
        %v3553 = vunpack.c.l.b16 %v3425
        %v3554 = vunpack.c.l.b16 %v3426
        %v3555 = vunpack.c.l.b16 %v3427
        %v3556 = vunpack.c.l.b16 %v3428
        %v3557 = vunpack.c.l.b16 %v3429
        %v3558 = vunpack.c.l.b16 %v3430
        %v3559 = vunpack.c.l.b16 %v3431
        %v3560 = vunpack.c.l.b16 %v3432
        %v3561 = vunpack.c.l.b16 %v3433
        %v3562 = vunpack.c.l.b16 %v3434
        %v3563 = vunpack.c.l.b16 %v3435
        %v3564 = vunpack.c.l.b16 %v3436
        %v3565 = vunpack.c.l.b16 %v3437
        %v3566 = vunpack.c.l.b16 %v3438
        %v3567 = vunpack.c.l.b16 %v3439
        %v3568 = vunpack.c.l.b16 %v3440
        %v3569 = vunpack.c.l.b16 %v3441
        %v3570 = vunpack.c.l.b16 %v3442
        %v3571 = vpack.c.b16 %v3508, %v3507
        %v3572 = vpack.c.b16 %v3510, %v3509
        %v3573 = vpack.c.b16 %v3512, %v3511
        %v3574 = vpack.c.b16 %v3514, %v3513
        %v3575 = vpack.c.b16 %v3516, %v3515
        %v3576 = vpack.c.b16 %v3518, %v3517
        %v3577 = vpack.c.b16 %v3520, %v3519
        %v3578 = vpack.c.b16 %v3522, %v3521
        %v3579 = vpack.c.b16 %v3524, %v3523
        %v3580 = vpack.c.b16 %v3526, %v3525
        %v3581 = vpack.c.b16 %v3528, %v3527
        %v3582 = vpack.c.b16 %v3530, %v3529
        %v3583 = vpack.c.b16 %v3532, %v3531
        %v3584 = vpack.c.b16 %v3534, %v3533
        %v3585 = vpack.c.b16 %v3536, %v3535
        %v3586 = vpack.c.b16 %v3538, %v3537
        %v3587 = vpack.c.b16 %v3540, %v3539
        %v3588 = vpack.c.b16 %v3542, %v3541
        %v3589 = vpack.c.b16 %v3544, %v3543
        %v3590 = vpack.c.b16 %v3546, %v3545
        %v3591 = vpack.c.b16 %v3548, %v3547
        %v3592 = vpack.c.b16 %v3550, %v3549
        %v3593 = vpack.c.b16 %v3552, %v3551
        %v3594 = vpack.c.b16 %v3554, %v3553
        %v3595 = vpack.c.b16 %v3556, %v3555
        %v3596 = vpack.c.b16 %v3558, %v3557
        %v3597 = vpack.c.b16 %v3560, %v3559
        %v3598 = vpack.c.b16 %v3562, %v3561
        %v3599 = vpack.c.b16 %v3564, %v3563
        %v3600 = vpack.c.b16 %v3566, %v3565
        %v3601 = vpack.c.b16 %v3568, %v3567
        %v3602 = vpack.c.b16 %v3570, %v3569
        %3635 = vmatprep.subr.bf16.mxu0 0
        %3636 = vmatpush1.bf16.msra.mxu0 %v3571
        %3637 = vmatprep.subr.bf16.mxu0 0
        %3638 = vmatpush1.bf16.msra.mxu0 %v3572
        %3639 = vmatprep.subr.bf16.mxu0 0
        %3640 = vmatpush1.bf16.msra.mxu0 %v3573
        %3641 = vmatprep.subr.bf16.mxu0 0
        %3642 = vmatpush1.bf16.msra.mxu0 %v3574
        %3643 = vmatprep.subr.bf16.mxu0 0
        %3644 = vmatpush1.bf16.msra.mxu0 %v3575
        %3645 = vmatprep.subr.bf16.mxu0 0
        %3646 = vmatpush1.bf16.msra.mxu0 %v3576
        %3647 = vmatprep.subr.bf16.mxu0 0
        %3648 = vmatpush1.bf16.msra.mxu0 %v3577
        %3649 = vmatprep.subr.bf16.mxu0 0
        %3650 = vmatpush1.bf16.msra.mxu0 %v3578
        %3651 = vmatprep.subr.bf16.mxu0 0
        %3652 = vmatpush1.bf16.msra.mxu0 %v3579
        %3653 = vmatprep.subr.bf16.mxu0 0
        %3654 = vmatpush1.bf16.msra.mxu0 %v3580
        %3655 = vmatprep.subr.bf16.mxu0 0
        %3656 = vmatpush1.bf16.msra.mxu0 %v3581
        %3657 = vmatprep.subr.bf16.mxu0 0
        %3658 = vmatpush1.bf16.msra.mxu0 %v3582
        %3659 = vmatprep.subr.bf16.mxu0 0
        %3660 = vmatpush1.bf16.msra.mxu0 %v3583
        %3661 = vmatprep.subr.bf16.mxu0 0
        %3662 = vmatpush1.bf16.msra.mxu0 %v3584
        %3663 = vmatprep.subr.bf16.mxu0 0
        %3664 = vmatpush1.bf16.msra.mxu0 %v3585
        %3665 = vmatprep.subr.bf16.mxu0 0
        %3666 = vmatpush1.bf16.msra.mxu0 %v3586
        %3667 = vmatprep.mubr.bf16.mxu0 %v3348
        %3668 = vmatmul.mubr.bf16.gmra.mrb[0].mxu0 %v3347
        %v3669 = vpop.f32.mrb[0].mxu0
        %v3670 = vadd.f32 0.0, %v3669
        %v3671 = vpop.f32.mrb[0].mxu0
        %v3672 = vpop.f32.mrb[0].mxu0
        %v3673 = vadd.f32 0.0, %v3672
        %v3674 = vpop.f32.mrb[0].mxu0
        %3675 = vmatprep.mubr.bf16.mxu0 %v3352
        %3676 = vmatmul.mubr.bf16.gmra.mrb[0].mxu0 %v3351
        %v3677 = vpop.f32.mrb[0].mxu0
        %v3678 = vadd.f32 0.0, %v3677
        %v3679 = vpop.f32.mrb[0].mxu0
        %v3680 = vpop.f32.mrb[0].mxu0
        %v3681 = vadd.f32 0.0, %v3680
        %v3682 = vpop.f32.mrb[0].mxu0
        %3683 = vmatprep.mubr.bf16.mxu0 %v3356
        %3684 = vmatmul.mubr.bf16.gmra.mrb[0].mxu0 %v3355
        %v3685 = vpop.f32.mrb[0].mxu0
        %v3686 = vadd.f32 0.0, %v3685
        %v3687 = vpop.f32.mrb[0].mxu0
        %v3688 = vpop.f32.mrb[0].mxu0
        %v3689 = vadd.f32 0.0, %v3688
        %v3690 = vpop.f32.mrb[0].mxu0
        %3691 = vmatprep.mubr.bf16.mxu0 %v3360
        %3692 = vmatmul.mubr.bf16.gmra.mrb[0].mxu0 %v3359
        %v3693 = vpop.f32.mrb[0].mxu0
        %v3694 = vadd.f32 0.0, %v3693
        %v3695 = vpop.f32.mrb[0].mxu0
        %v3696 = vpop.f32.mrb[0].mxu0
        %v3697 = vadd.f32 0.0, %v3696
        %v3698 = vpop.f32.mrb[0].mxu0
        %3699 = vmatprep.mubr.bf16.mxu0 %v3364
        %3700 = vmatmul.mubr.bf16.gmra.mrb[0].mxu0 %v3363
        %v3701 = vpop.f32.mrb[0].mxu0
        %v3702 = vadd.f32 0.0, %v3701
        %v3703 = vpop.f32.mrb[0].mxu0
        %v3704 = vpop.f32.mrb[0].mxu0
        %v3705 = vadd.f32 0.0, %v3704
        %v3706 = vpop.f32.mrb[0].mxu0
        %3707 = vmatprep.mubr.bf16.mxu0 %v3368
        %3708 = vmatmul.mubr.bf16.gmra.mrb[0].mxu0 %v3367
        %v3709 = vpop.f32.mrb[0].mxu0
        %v3710 = vadd.f32 0.0, %v3709
        %v3711 = vpop.f32.mrb[0].mxu0
        %v3712 = vpop.f32.mrb[0].mxu0
        %v3713 = vadd.f32 0.0, %v3712
        %v3714 = vpop.f32.mrb[0].mxu0
        %3715 = vmatprep.mubr.bf16.mxu0 %v3372
        %3716 = vmatmul.mubr.bf16.gmra.mrb[0].mxu0 %v3371
        %v3717 = vpop.f32.mrb[0].mxu0
        %v3718 = vadd.f32 0.0, %v3717
        %v3719 = vpop.f32.mrb[0].mxu0
        %v3720 = vpop.f32.mrb[0].mxu0
        %v3721 = vadd.f32 0.0, %v3720
        %v3722 = vpop.f32.mrb[0].mxu0
        %3723 = vmatprep.mubr.bf16.mxu0 %v3376
        %3724 = vmatmul.mubr.bf16.gmra.mrb[0].mxu0 %v3375
        %v3725 = vpop.f32.mrb[0].mxu0
        %v3726 = vadd.f32 0.0, %v3725
        %v3727 = vpop.f32.mrb[0].mxu0
        %v3728 = vpop.f32.mrb[0].mxu0
        %v3729 = vadd.f32 0.0, %v3728
        %v3730 = vpop.f32.mrb[0].mxu0
        %3731 = vdwg.mxu0
        %3732 = vmatprep.subr.bf16.mxu0 0
        %3733 = vmatpush1.bf16.msra.mxu0 %v3587
        %3734 = vmatprep.subr.bf16.mxu0 0
        %3735 = vmatpush1.bf16.msra.mxu0 %v3588
        %3736 = vmatprep.subr.bf16.mxu0 0
        %3737 = vmatpush1.bf16.msra.mxu0 %v3589
        %3738 = vmatprep.subr.bf16.mxu0 0
        %3739 = vmatpush1.bf16.msra.mxu0 %v3590
        %3740 = vmatprep.subr.bf16.mxu0 0
        %3741 = vmatpush1.bf16.msra.mxu0 %v3591
        %3742 = vmatprep.subr.bf16.mxu0 0
        %3743 = vmatpush1.bf16.msra.mxu0 %v3592
        %3744 = vmatprep.subr.bf16.mxu0 0
        %3745 = vmatpush1.bf16.msra.mxu0 %v3593
        %3746 = vmatprep.subr.bf16.mxu0 0
        %3747 = vmatpush1.bf16.msra.mxu0 %v3594
        %3748 = vmatprep.subr.bf16.mxu0 0
        %3749 = vmatpush1.bf16.msra.mxu0 %v3595
        %3750 = vmatprep.subr.bf16.mxu0 0
        %3751 = vmatpush1.bf16.msra.mxu0 %v3596
        %3752 = vmatprep.subr.bf16.mxu0 0
        %3753 = vmatpush1.bf16.msra.mxu0 %v3597
        %3754 = vmatprep.subr.bf16.mxu0 0
        %3755 = vmatpush1.bf16.msra.mxu0 %v3598
        %3756 = vmatprep.subr.bf16.mxu0 0
        %3757 = vmatpush1.bf16.msra.mxu0 %v3599
        %3758 = vmatprep.subr.bf16.mxu0 0
        %3759 = vmatpush1.bf16.msra.mxu0 %v3600
        %3760 = vmatprep.subr.bf16.mxu0 0
        %3761 = vmatpush1.bf16.msra.mxu0 %v3601
        %3762 = vmatprep.subr.bf16.mxu0 0
        %3763 = vmatpush1.bf16.msra.mxu0 %v3602
        %3764 = vmatprep.mubr.bf16.mxu0 %v3350
        %3765 = vmatmul.mubr.bf16.gmra.mrb[0].mxu0 %v3349
        %v3766 = vpop.f32.mrb[0].mxu0
        %v3767 = vadd.f32 %v3670, %v3766
        %v3768 = vpop.f32.mrb[0].mxu0
        %v3769 = vpop.f32.mrb[0].mxu0
        %v3770 = vadd.f32 %v3673, %v3769
        %v3771 = vpop.f32.mrb[0].mxu0
        %3772 = vmatprep.mubr.bf16.mxu0 %v3354
        %3773 = vmatmul.mubr.bf16.gmra.mrb[0].mxu0 %v3353
        %v3774 = vpop.f32.mrb[0].mxu0
        %v3775 = vadd.f32 %v3678, %v3774
        %v3776 = vpop.f32.mrb[0].mxu0
        %v3777 = vpop.f32.mrb[0].mxu0
        %v3778 = vadd.f32 %v3681, %v3777
        %v3779 = vpop.f32.mrb[0].mxu0
        %3780 = vmatprep.mubr.bf16.mxu0 %v3358
        %3781 = vmatmul.mubr.bf16.gmra.mrb[0].mxu0 %v3357
        %v3782 = vpop.f32.mrb[0].mxu0
        %v3783 = vadd.f32 %v3686, %v3782
        %v3784 = vpop.f32.mrb[0].mxu0
        %v3785 = vpop.f32.mrb[0].mxu0
        %v3786 = vadd.f32 %v3689, %v3785
        %v3787 = vpop.f32.mrb[0].mxu0
        %3788 = vmatprep.mubr.bf16.mxu0 %v3362
        %3789 = vmatmul.mubr.bf16.gmra.mrb[0].mxu0 %v3361
        %v3790 = vpop.f32.mrb[0].mxu0
        %v3791 = vadd.f32 %v3694, %v3790
        %v3792 = vpop.f32.mrb[0].mxu0
        %v3793 = vpop.f32.mrb[0].mxu0
        %v3794 = vadd.f32 %v3697, %v3793
        %v3795 = vpop.f32.mrb[0].mxu0
        %3796 = vmatprep.mubr.bf16.mxu0 %v3366
        %3797 = vmatmul.mubr.bf16.gmra.mrb[0].mxu0 %v3365
        %v3798 = vpop.f32.mrb[0].mxu0
        %v3799 = vadd.f32 %v3702, %v3798
        %v3800 = vpop.f32.mrb[0].mxu0
        %v3801 = vpop.f32.mrb[0].mxu0
        %v3802 = vadd.f32 %v3705, %v3801
        %v3803 = vpop.f32.mrb[0].mxu0
        %3804 = vmatprep.mubr.bf16.mxu0 %v3370
        %3805 = vmatmul.mubr.bf16.gmra.mrb[0].mxu0 %v3369
        %v3806 = vpop.f32.mrb[0].mxu0
        %v3807 = vadd.f32 %v3710, %v3806
        %v3808 = vpop.f32.mrb[0].mxu0
        %v3809 = vpop.f32.mrb[0].mxu0
        %v3810 = vadd.f32 %v3713, %v3809
        %v3811 = vpop.f32.mrb[0].mxu0
        %3812 = vmatprep.mubr.bf16.mxu0 %v3374
        %3813 = vmatmul.mubr.bf16.gmra.mrb[0].mxu0 %v3373
        %v3814 = vpop.f32.mrb[0].mxu0
        %v3815 = vadd.f32 %v3718, %v3814
        %v3816 = vpop.f32.mrb[0].mxu0
        %v3817 = vpop.f32.mrb[0].mxu0
        %v3818 = vadd.f32 %v3721, %v3817
        %v3819 = vpop.f32.mrb[0].mxu0
        %3820 = vmatprep.mubr.bf16.mxu0 %v3378
        %3821 = vmatmul.mubr.bf16.gmra.mrb[0].mxu0 %v3377
        %v3822 = vpop.f32.mrb[0].mxu0
        %v3823 = vadd.f32 %v3726, %v3822
        %v3824 = vpop.f32.mrb[0].mxu0
        %v3825 = vpop.f32.mrb[0].mxu0
        %v3826 = vadd.f32 %v3729, %v3825
        %v3827 = vpop.f32.mrb[0].mxu0
        %3828 = vdwg.mxu0
        %v3829 = vadd.f32 %v2577, %v3767
        %v3830 = vadd.f32 %v2578, %v3770
        %v3831 = vadd.f32 %v2579, %v3775
        %v3832 = vadd.f32 %v2580, %v3778
        %v3833 = vadd.f32 %v2581, %v3783
        %v3834 = vadd.f32 %v2582, %v3786
        %v3835 = vadd.f32 %v2583, %v3791
        %v3836 = vadd.f32 %v2584, %v3794
        %v3837 = vadd.f32 %v2585, %v3799
        %v3838 = vadd.f32 %v2586, %v3802
        %v3839 = vadd.f32 %v2587, %v3807
        %v3840 = vadd.f32 %v2588, %v3810
        %v3841 = vadd.f32 %v2589, %v3815
        %v3842 = vadd.f32 %v2590, %v3818
        %v3843 = vadd.f32 %v2591, %v3823
        %v3844 = vadd.f32 %v2592, %v3826
        %v3845 = vlaneseq
        %v3846 = vshrl.u32 %v3845, 7
        %v3847 = vsub.s32 6, %v3846
        %v3848 = vrot.slane %v514, %v3847
        %v3849 = vadd.f32 %v3829, %v3848
        %v3850 = vadd.f32 %v3830, %v3848
        %v3851 = vadd.f32 %v3831, %v3848
        %v3852 = vadd.f32 %v3832, %v3848
        %v3853 = vadd.f32 %v3833, %v3848
        %v3854 = vadd.f32 %v3834, %v3848
        %v3855 = vadd.f32 %v3835, %v3848
        %v3856 = vadd.f32 %v3836, %v3848
        %v3857 = vadd.f32 %v3837, %v3848
        %v3858 = vadd.f32 %v3838, %v3848
        %v3859 = vadd.f32 %v3839, %v3848
        %v3860 = vadd.f32 %v3840, %v3848
        %v3861 = vadd.f32 %v3841, %v3848
        %v3862 = vadd.f32 %v3842, %v3848
        %v3863 = vadd.f32 %v3843, %v3848
        %v3864 = vadd.f32 %v3844, %v3848
        %3865 = vst [vmem:[#allocation2] sm:$0xff] %v3849
        %3866 = vst [vmem:[#allocation2 + $0x8] sm:$0xff] %v3850
        %3867 = vst [vmem:[#allocation2 + $0x10] sm:$0xff] %v3851
        %3868 = vst [vmem:[#allocation2 + $0x18] sm:$0xff] %v3852
        %3869 = vst [vmem:[#allocation2 + $0x20] sm:$0xff] %v3853
        %3870 = vst [vmem:[#allocation2 + $0x28] sm:$0xff] %v3854
        %3871 = vst [vmem:[#allocation2 + $0x30] sm:$0xff] %v3855
        %3872 = vst [vmem:[#allocation2 + $0x38] sm:$0xff] %v3856
        %3873 = vst [vmem:[#allocation2 + $0x40] sm:$0xff] %v3857
        %3874 = vst [vmem:[#allocation2 + $0x48] sm:$0xff] %v3858
        %3875 = vst [vmem:[#allocation2 + $0x50] sm:$0xff] %v3859
        %3876 = vst [vmem:[#allocation2 + $0x58] sm:$0xff] %v3860
        %3877 = vst [vmem:[#allocation2 + $0x60] sm:$0xff] %v3861
        %3878 = vst [vmem:[#allocation2 + $0x68] sm:$0xff] %v3862
        %3879 = vst [vmem:[#allocation2 + $0x70] sm:$0xff] %v3863
        %3880 = vst [vmem:[#allocation2 + $0x78] sm:$0xff] %v3864
        %p3881 = scmp.eq.s32.totalorder %s30, 7
        // Predicated region
        $region65: #{gpt_forward_fused.2} parent=51 // pred_check
          %p3882 = pneg %p3881
        $region66: #{gpt_forward_fused.2} parent=51 // pred_check_branch
          %3884 = sbr.rel (%p3882) target = $region68
        $region67: #{gpt_forward_fused.2} parent=51 // pred_region
          %v3885 = vld [vmem:[%s6] sm:$0x1]
          %v3886 = vld [vmem:[%s7] sm:$0x1]
          %3887 = vadd.xlane.f32.xlu0 %v3849
          %v3888 = vpop.xlane.xlu0 %3887
          %3889 = vadd.xlane.f32.xlu0 %v3850
          %v3890 = vpop.xlane.xlu0 %3889
          %3891 = vadd.xlane.f32.xlu0 %v3851
          %v3892 = vpop.xlane.xlu0 %3891
          %3893 = vadd.xlane.f32.xlu0 %v3852
          %v3894 = vpop.xlane.xlu0 %3893
          %3895 = vadd.xlane.f32.xlu0 %v3853
          %v3896 = vpop.xlane.xlu0 %3895
          %3897 = vadd.xlane.f32.xlu0 %v3854
          %v3898 = vpop.xlane.xlu0 %3897
          %3899 = vadd.xlane.f32.xlu0 %v3855
          %v3900 = vpop.xlane.xlu0 %3899
          %3901 = vadd.xlane.f32.xlu0 %v3856
          %v3902 = vpop.xlane.xlu0 %3901
          %3903 = vadd.xlane.f32.xlu0 %v3857
          %v3904 = vpop.xlane.xlu0 %3903
          %3905 = vadd.xlane.f32.xlu0 %v3858
          %v3906 = vpop.xlane.xlu0 %3905
          %3907 = vadd.xlane.f32.xlu0 %v3859
          %v3908 = vpop.xlane.xlu0 %3907
          %3909 = vadd.xlane.f32.xlu0 %v3860
          %v3910 = vpop.xlane.xlu0 %3909
          %3911 = vadd.xlane.f32.xlu0 %v3861
          %v3912 = vpop.xlane.xlu0 %3911
          %3913 = vadd.xlane.f32.xlu0 %v3862
          %v3914 = vpop.xlane.xlu0 %3913
          %3915 = vadd.xlane.f32.xlu0 %v3863
          %v3916 = vpop.xlane.xlu0 %3915
          %3917 = vadd.xlane.f32.xlu0 %v3864
          %v3918 = vpop.xlane.xlu0 %3917
          %v3919 = vmul.f32 %v3849, %v3849
          %v3920 = vmul.f32 %v3850, %v3850
          %v3921 = vmul.f32 %v3851, %v3851
          %v3922 = vmul.f32 %v3852, %v3852
          %v3923 = vmul.f32 %v3853, %v3853
          %v3924 = vmul.f32 %v3854, %v3854
          %v3925 = vmul.f32 %v3855, %v3855
          %v3926 = vmul.f32 %v3856, %v3856
          %v3927 = vmul.f32 %v3857, %v3857
          %v3928 = vmul.f32 %v3858, %v3858
          %v3929 = vmul.f32 %v3859, %v3859
          %v3930 = vmul.f32 %v3860, %v3860
          %v3931 = vmul.f32 %v3861, %v3861
          %v3932 = vmul.f32 %v3862, %v3862
          %v3933 = vmul.f32 %v3863, %v3863
          %v3934 = vmul.f32 %v3864, %v3864
          %3935 = vadd.xlane.f32.xlu0 %v3919
          %v3936 = vpop.xlane.xlu0 %3935
          %3937 = vadd.xlane.f32.xlu0 %v3920
          %v3938 = vpop.xlane.xlu0 %3937
          %3939 = vadd.xlane.f32.xlu0 %v3921
          %v3940 = vpop.xlane.xlu0 %3939
          %3941 = vadd.xlane.f32.xlu0 %v3922
          %v3942 = vpop.xlane.xlu0 %3941
          %3943 = vadd.xlane.f32.xlu0 %v3923
          %v3944 = vpop.xlane.xlu0 %3943
          %3945 = vadd.xlane.f32.xlu0 %v3924
          %v3946 = vpop.xlane.xlu0 %3945
          %3947 = vadd.xlane.f32.xlu0 %v3925
          %v3948 = vpop.xlane.xlu0 %3947
          %3949 = vadd.xlane.f32.xlu0 %v3926
          %v3950 = vpop.xlane.xlu0 %3949
          %3951 = vadd.xlane.f32.xlu0 %v3927
          %v3952 = vpop.xlane.xlu0 %3951
          %3953 = vadd.xlane.f32.xlu0 %v3928
          %v3954 = vpop.xlane.xlu0 %3953
          %3955 = vadd.xlane.f32.xlu0 %v3929
          %v3956 = vpop.xlane.xlu0 %3955
          %3957 = vadd.xlane.f32.xlu0 %v3930
          %v3958 = vpop.xlane.xlu0 %3957
          %3959 = vadd.xlane.f32.xlu0 %v3931
          %v3960 = vpop.xlane.xlu0 %3959
          %3961 = vadd.xlane.f32.xlu0 %v3932
          %v3962 = vpop.xlane.xlu0 %3961
          %3963 = vadd.xlane.f32.xlu0 %v3933
          %v3964 = vpop.xlane.xlu0 %3963
          %3965 = vadd.xlane.f32.xlu0 %v3934
          %v3966 = vpop.xlane.xlu0 %3965
          %v3967 = vmul.f32 %v3888, 0.0078125
          %v3968 = vmul.f32 %v3890, 0.0078125
          %v3969 = vmul.f32 %v3892, 0.0078125
          %v3970 = vmul.f32 %v3894, 0.0078125
          %v3971 = vmul.f32 %v3896, 0.0078125
          %v3972 = vmul.f32 %v3898, 0.0078125
          %v3973 = vmul.f32 %v3900, 0.0078125
          %v3974 = vmul.f32 %v3902, 0.0078125
          %v3975 = vmul.f32 %v3904, 0.0078125
          %v3976 = vmul.f32 %v3906, 0.0078125
          %v3977 = vmul.f32 %v3908, 0.0078125
          %v3978 = vmul.f32 %v3910, 0.0078125
          %v3979 = vmul.f32 %v3912, 0.0078125
          %v3980 = vmul.f32 %v3914, 0.0078125
          %v3981 = vmul.f32 %v3916, 0.0078125
          %v3982 = vmul.f32 %v3918, 0.0078125
          %v3983 = vmul.f32 %v3936, 0.0078125
          %v3984 = vmul.f32 %v3938, 0.0078125
          %v3985 = vmul.f32 %v3940, 0.0078125
          %v3986 = vmul.f32 %v3942, 0.0078125
          %v3987 = vmul.f32 %v3944, 0.0078125
          %v3988 = vmul.f32 %v3946, 0.0078125
          %v3989 = vmul.f32 %v3948, 0.0078125
          %v3990 = vmul.f32 %v3950, 0.0078125
          %v3991 = vmul.f32 %v3952, 0.0078125
          %v3992 = vmul.f32 %v3954, 0.0078125
          %v3993 = vmul.f32 %v3956, 0.0078125
          %v3994 = vmul.f32 %v3958, 0.0078125
          %v3995 = vmul.f32 %v3960, 0.0078125
          %v3996 = vmul.f32 %v3962, 0.0078125
          %v3997 = vmul.f32 %v3964, 0.0078125
          %v3998 = vmul.f32 %v3966, 0.0078125
          %v3999 = vmul.f32 %v3967, %v3967
          %v4000 = vmul.f32 %v3968, %v3968
          %v4001 = vmul.f32 %v3969, %v3969
          %v4002 = vmul.f32 %v3970, %v3970
          %v4003 = vmul.f32 %v3971, %v3971
          %v4004 = vmul.f32 %v3972, %v3972
          %v4005 = vmul.f32 %v3973, %v3973
          %v4006 = vmul.f32 %v3974, %v3974
          %v4007 = vmul.f32 %v3975, %v3975
          %v4008 = vmul.f32 %v3976, %v3976
          %v4009 = vmul.f32 %v3977, %v3977
          %v4010 = vmul.f32 %v3978, %v3978
          %v4011 = vmul.f32 %v3979, %v3979
          %v4012 = vmul.f32 %v3980, %v3980
          %v4013 = vmul.f32 %v3981, %v3981
          %v4014 = vmul.f32 %v3982, %v3982
          %v4015 = vsub.f32 %v3983, %v3999
          %v4016 = vsub.f32 %v3984, %v4000
          %v4017 = vsub.f32 %v3985, %v4001
          %v4018 = vsub.f32 %v3986, %v4002
          %v4019 = vsub.f32 %v3987, %v4003
          %v4020 = vsub.f32 %v3988, %v4004
          %v4021 = vsub.f32 %v3989, %v4005
          %v4022 = vsub.f32 %v3990, %v4006
          %v4023 = vsub.f32 %v3991, %v4007
          %v4024 = vsub.f32 %v3992, %v4008
          %v4025 = vsub.f32 %v3993, %v4009
          %v4026 = vsub.f32 %v3994, %v4010
          %v4027 = vsub.f32 %v3995, %v4011
          %v4028 = vsub.f32 %v3996, %v4012
          %v4029 = vsub.f32 %v3997, %v4013
          %v4030 = vsub.f32 %v3998, %v4014
          %v4031 = vsub.f32 %v3849, %v3967
          %v4032 = vsub.f32 %v3850, %v3968
          %v4033 = vsub.f32 %v3851, %v3969
          %v4034 = vsub.f32 %v3852, %v3970
          %v4035 = vsub.f32 %v3853, %v3971
          %v4036 = vsub.f32 %v3854, %v3972
          %v4037 = vsub.f32 %v3855, %v3973
          %v4038 = vsub.f32 %v3856, %v3974
          %v4039 = vsub.f32 %v3857, %v3975
          %v4040 = vsub.f32 %v3858, %v3976
          %v4041 = vsub.f32 %v3859, %v3977
          %v4042 = vsub.f32 %v3860, %v3978
          %v4043 = vsub.f32 %v3861, %v3979
          %v4044 = vsub.f32 %v3862, %v3980
          %v4045 = vsub.f32 %v3863, %v3981
          %v4046 = vsub.f32 %v3864, %v3982
          %v4047 = vadd.f32 %v4015, 1e-05
          %v4048 = vadd.f32 %v4016, 1e-05
          %v4049 = vadd.f32 %v4017, 1e-05
          %v4050 = vadd.f32 %v4018, 1e-05
          %v4051 = vadd.f32 %v4019, 1e-05
          %v4052 = vadd.f32 %v4020, 1e-05
          %v4053 = vadd.f32 %v4021, 1e-05
          %v4054 = vadd.f32 %v4022, 1e-05
          %v4055 = vadd.f32 %v4023, 1e-05
          %v4056 = vadd.f32 %v4024, 1e-05
          %v4057 = vadd.f32 %v4025, 1e-05
          %v4058 = vadd.f32 %v4026, 1e-05
          %v4059 = vadd.f32 %v4027, 1e-05
          %v4060 = vadd.f32 %v4028, 1e-05
          %v4061 = vadd.f32 %v4029, 1e-05
          %v4062 = vadd.f32 %v4030, 1e-05
          %v4063 = vrsqrt.pop %v4047
          %v4064 = vrsqrt.pop %v4048
          %v4065 = vrsqrt.pop %v4049
          %v4066 = vrsqrt.pop %v4050
          %v4067 = vrsqrt.pop %v4051
          %v4068 = vrsqrt.pop %v4052
          %v4069 = vrsqrt.pop %v4053
          %v4070 = vrsqrt.pop %v4054
          %v4071 = vrsqrt.pop %v4055
          %v4072 = vrsqrt.pop %v4056
          %v4073 = vrsqrt.pop %v4057
          %v4074 = vrsqrt.pop %v4058
          %v4075 = vrsqrt.pop %v4059
          %v4076 = vrsqrt.pop %v4060
          %v4077 = vrsqrt.pop %v4061
          %v4078 = vrsqrt.pop %v4062
          %v4079 = vmul.f32 %v4031, %v4063
          %v4080 = vmul.f32 %v4032, %v4064
          %v4081 = vmul.f32 %v4033, %v4065
          %v4082 = vmul.f32 %v4034, %v4066
          %v4083 = vmul.f32 %v4035, %v4067
          %v4084 = vmul.f32 %v4036, %v4068
          %v4085 = vmul.f32 %v4037, %v4069
          %v4086 = vmul.f32 %v4038, %v4070
          %v4087 = vmul.f32 %v4039, %v4071
          %v4088 = vmul.f32 %v4040, %v4072
          %v4089 = vmul.f32 %v4041, %v4073
          %v4090 = vmul.f32 %v4042, %v4074
          %v4091 = vmul.f32 %v4043, %v4075
          %v4092 = vmul.f32 %v4044, %v4076
          %v4093 = vmul.f32 %v4045, %v4077
          %v4094 = vmul.f32 %v4046, %v4078
          %v4096 = vlaneseq
          %v4097 = vshrl.u32 %v4096, 7
          %v4098 = vsub.s32 0, %v4097
          %v4099 = vrot.slane %v3885, %v4098
          %v4101 = vmul.f32 %v4079, %v4099
          %v4102 = vmul.f32 %v4080, %v4099
          %v4103 = vmul.f32 %v4081, %v4099
          %v4104 = vmul.f32 %v4082, %v4099
          %v4105 = vmul.f32 %v4083, %v4099
          %v4106 = vmul.f32 %v4084, %v4099
          %v4107 = vmul.f32 %v4085, %v4099
          %v4108 = vmul.f32 %v4086, %v4099
          %v4109 = vmul.f32 %v4087, %v4099
          %v4110 = vmul.f32 %v4088, %v4099
          %v4111 = vmul.f32 %v4089, %v4099
          %v4112 = vmul.f32 %v4090, %v4099
          %v4113 = vmul.f32 %v4091, %v4099
          %v4114 = vmul.f32 %v4092, %v4099
          %v4115 = vmul.f32 %v4093, %v4099
          %v4116 = vmul.f32 %v4094, %v4099
          %v4118 = vlaneseq
          %v4119 = vshrl.u32 %v4118, 7
          %v4120 = vsub.s32 0, %v4119
          %v4121 = vrot.slane %v3886, %v4120
          %v4123 = vadd.f32 %v4101, %v4121
          %v4124 = vadd.f32 %v4102, %v4121
          %v4125 = vadd.f32 %v4103, %v4121
          %v4126 = vadd.f32 %v4104, %v4121
          %v4127 = vadd.f32 %v4105, %v4121
          %v4128 = vadd.f32 %v4106, %v4121
          %v4129 = vadd.f32 %v4107, %v4121
          %v4130 = vadd.f32 %v4108, %v4121
          %v4131 = vadd.f32 %v4109, %v4121
          %v4132 = vadd.f32 %v4110, %v4121
          %v4133 = vadd.f32 %v4111, %v4121
          %v4134 = vadd.f32 %v4112, %v4121
          %v4135 = vadd.f32 %v4113, %v4121
          %v4136 = vadd.f32 %v4114, %v4121
          %v4137 = vadd.f32 %v4115, %v4121
          %v4138 = vadd.f32 %v4116, %v4121
          %v4139 = vpack.c.bf16 %v4124, %v4123
          %v4140 = vpack.c.bf16 %v4126, %v4125
          %v4141 = vpack.c.bf16 %v4128, %v4127
          %v4142 = vpack.c.bf16 %v4130, %v4129
          %v4143 = vpack.c.bf16 %v4132, %v4131
          %v4144 = vpack.c.bf16 %v4134, %v4133
          %v4145 = vpack.c.bf16 %v4136, %v4135
          %v4146 = vpack.c.bf16 %v4138, %v4137
          %v4155 = vunpack.c.l.b16 %v4139
          %v4156 = vunpack.c.h.b16 %v4139
          %v4157 = vunpack.c.l.b16 %v4140
          %v4158 = vunpack.c.h.b16 %v4140
          %v4159 = vunpack.c.l.b16 %v4141
          %v4160 = vunpack.c.h.b16 %v4141
          %v4161 = vunpack.c.l.b16 %v4142
          %v4162 = vunpack.c.h.b16 %v4142
          %v4163 = vunpack.c.l.b16 %v4143
          %v4164 = vunpack.c.h.b16 %v4143
          %v4165 = vunpack.c.l.b16 %v4144
          %v4166 = vunpack.c.h.b16 %v4144
          %v4167 = vunpack.c.l.b16 %v4145
          %v4168 = vunpack.c.h.b16 %v4145
          %v4169 = vunpack.c.l.b16 %v4146
          %v4170 = vunpack.c.h.b16 %v4146
          %v4171 = vpack.c.b16 %v4155, %v4155
          %v4172 = vpack.c.b16 %v4156, %v4156
          %v4173 = vpack.c.b16 %v4157, %v4157
          %v4174 = vpack.c.b16 %v4158, %v4158
          %v4175 = vpack.c.b16 %v4159, %v4159
          %v4176 = vpack.c.b16 %v4160, %v4160
          %v4177 = vpack.c.b16 %v4161, %v4161
          %v4178 = vpack.c.b16 %v4162, %v4162
          %v4179 = vpack.c.b16 %v4163, %v4163
          %v4180 = vpack.c.b16 %v4164, %v4164
          %v4181 = vpack.c.b16 %v4165, %v4165
          %v4182 = vpack.c.b16 %v4166, %v4166
          %v4183 = vpack.c.b16 %v4167, %v4167
          %v4184 = vpack.c.b16 %v4168, %v4168
          %v4185 = vpack.c.b16 %v4169, %v4169
          %v4186 = vpack.c.b16 %v4170, %v4170
          %4203 = vst [vmem:[%s459] sm:$0xf] %v4171
          %4204 = vst [vmem:[%s459 + $0x4] sm:$0xf] %v4172
          %4205 = vst [vmem:[%s459 + $0x8] sm:$0xf] %v4173
          %4206 = vst [vmem:[%s459 + $0xc] sm:$0xf] %v4174
          %4207 = vst [vmem:[%s459 + $0x10] sm:$0xf] %v4175
          %4208 = vst [vmem:[%s459 + $0x14] sm:$0xf] %v4176
          %4209 = vst [vmem:[%s459 + $0x18] sm:$0xf] %v4177
          %4210 = vst [vmem:[%s459 + $0x1c] sm:$0xf] %v4178
          %4211 = vst [vmem:[%s459 + $0x20] sm:$0xf] %v4179
          %4212 = vst [vmem:[%s459 + $0x24] sm:$0xf] %v4180
          %4213 = vst [vmem:[%s459 + $0x28] sm:$0xf] %v4181
          %4214 = vst [vmem:[%s459 + $0x2c] sm:$0xf] %v4182
          %4215 = vst [vmem:[%s459 + $0x30] sm:$0xf] %v4183
          %4216 = vst [vmem:[%s459 + $0x34] sm:$0xf] %v4184
          %4217 = vst [vmem:[%s459 + $0x38] sm:$0xf] %v4185
          %4218 = vst [vmem:[%s459 + $0x3c] sm:$0xf] %v4186
        $region68: #{gpt_forward_fused.2} parent=51 // pred_fallthru
          _
        %s4219 = smul.u32 16, %s29
        %p4220 = scmp.lt.s32.totalorder %s4219, 31
        %s4221 = scalar_select %p4220, %s4219, 31
        %s4222 = smul.addr %s4221, 4
        %s4223 = scalar_lea.vmem %s8, %s4222
        // Predicated region
        $region69: #{gpt_forward_fused.2} parent=51 // pred_check
          %p4224 = pneg %p253
        $region70: #{gpt_forward_fused.2} parent=51 // pred_check_branch
          %4226 = sbr.rel (%p4224) target = $region72
        $region71: #{gpt_forward_fused.2} parent=51 // pred_region
          %s4227 = smul.u32 16, %s29
        $region72: #{gpt_forward_fused.2} parent=51 // pred_fallthru
          _
      $region52: #{gpt_forward_fused.2} parent=5 // pred_fallthru
        _
      %p4228 = scmp.le.s32.totalorder 2, %s20
      // Predicated region
      $region73: #{gpt_forward_fused.2} parent=5 // pred_check
        %p4229 = pneg %p4228
      $region74: #{gpt_forward_fused.2} parent=5 // pred_check_branch
        %4231 = sbr.rel (%p4229) target = $region76
      $region75: #{gpt_forward_fused.2} parent=5 // pred_region
        %s4232 = ssub.s32 %s20, 2
        // Predicated region
        $region77: #{gpt_forward_fused.2} parent=75 // pred_check
          %p4233 = pneg %p259
        $region78: #{gpt_forward_fused.2} parent=75 // pred_check_branch
          %4235 = sbr.rel (%p4233) target = $region80
        $region79: #{gpt_forward_fused.2} parent=75 // pred_region
          %s4236 = smul.u32 16, %s31
          %p4237 = scmp.lt.s32.totalorder %s4236, 31
          %s4238 = scalar_select %p4237, %s4236, 31
          %s4239 = smul.addr %s4238, 4
          %s4240 = scalar_lea.vmem %s8, %s4239
        $region80: #{gpt_forward_fused.2} parent=75 // pred_fallthru
          _
      $region76: #{gpt_forward_fused.2} parent=5 // pred_fallthru
        _
    $region6: #{gpt_forward_fused.2} parent=1 // loop_footer
      %s24 = sadd.s32 1, %s20
    $region7: #{gpt_forward_fused.2} parent=1 // loop_footer_branch
      %19 = sbr.rel target = $region3
    $region8: #{gpt_forward_fused.2} parent=1 // loop_exit
      _
    %4241 = vsyncpa [#allocation4], 1
    %s4242 = scalar_lea.sflag [#allocation4], 1
    %4243 = vsyncpa %s4242, 1
    %4244 = vsyncpa [#allocation6], 1
    %s4245 = scalar_lea.sflag [#allocation6], 1
    %4246 = vsyncpa %s4245, 1

</llo_original>
